<compile_context>
chip_gen: v7x
topology: tpu7x:2x2x1
jax: 0.10.0
libtpu: 0.0.40
codegen_flags: <defaults>
</compile_context>

<pallas_src>
import functools

import jax
import jax.numpy as jnp
from jax import lax
from jax.experimental import pallas as pl
from jax.experimental.pallas import tpu as pltpu

VOCAB_SIZE = 1000
EMBEDDING_DIM = 50
HIDDEN_SIZE = 20
OUTPUT_SIZE = 5      # fc2 exists in the module but is never used in forward()
LANE = 128           # lane-padded hidden width: one full vreg lane block per gate


def _enhanced_lstm_kernel(seq_len, batch_tile, hp,
                          emb_ref,    # VMEM (S, BT, D)  f32  embeddings (pipelined per tile)
                          wih_ref,    # VMEM (D, 4*HP)   f32  lane-padded W_ih^T
                          whh_ref,    # VMEM (HP, 4*HP)  f32  lane-padded W_hh^T
                          bias_ref,   # VMEM (1, 4*HP)   f32  lane-padded (b_ih + b_hh)
                          watt_ref,   # VMEM (HP, HP)    f32  lane-padded W_att^T
                          batt_ref,   # VMEM (1, HP)     f32
                          wfc1_ref,   # VMEM (HP, HP)    f32  lane-padded W_fc1^T
                          bfc1_ref,   # VMEM (1, HP)     f32
                          out_ref):   # VMEM (BT, HP)    f32  lane-dense output block
    BT, HP = batch_tile, hp

    # Hoist recurrent weights once; reused every timestep.
    wih = wih_ref[...]
    whh = whh_ref[...]
    bias = bias_ref[...]

    def lstm_cell(x_t, h, c):
        # PyTorch gate order (i, f, g, o); each gate lives in its own 128-lane block,
        # so every slice below is a whole-vreg select.
        gates = (jnp.dot(x_t, wih, preferred_element_type=jnp.float32)
                 + jnp.dot(h, whh, preferred_element_type=jnp.float32)
                 + bias)                                          # (BT, 4*HP)
        i_g = jax.nn.sigmoid(gates[:, 0 * HP:1 * HP])
        f_g = jax.nn.sigmoid(gates[:, 1 * HP:2 * HP])
        g_g = jnp.tanh(gates[:, 2 * HP:3 * HP])
        o_g = jax.nn.sigmoid(gates[:, 3 * HP:4 * HP])
        c = f_g * c + i_g * g_g
        h = o_g * jnp.tanh(c)
        return h, c

    h = jnp.zeros((BT, HP), jnp.float32)
    c = jnp.zeros((BT, HP), jnp.float32)

    if seq_len <= 16:
        # Small static sequence: full unroll (LLO scheduler sees the whole chain).
        for t in range(seq_len):
            h, c = lstm_cell(emb_ref[t], h, c)
    else:
        # Long sequences: bounded unroll keeps code size / vreg live ranges in check.
        def body(t, carry):
            hh, cc = carry
            return lstm_cell(emb_ref[t], hh, cc)
        h, c = lax.fori_loop(0, seq_len, body, (h, c), unroll=2)

    # Attention gate + fc1 on the last timestep only (mathematically identical to the
    # reference, which computes them for every t and then keeps out[:, -1, :]).
    attn = jnp.tanh(jnp.dot(h, watt_ref[...], preferred_element_type=jnp.float32)
                    + batt_ref[...])
    gated = h * attn
    # TODO(synk): nn.Dropout(0.5) is identity at inference; training-mode RNG masking
    # (pltpu.prng_random_bits) is not implemented here.
    res = (jnp.dot(gated, wfc1_ref[...], preferred_element_type=jnp.float32)
           + bfc1_ref[...])
    out_ref[...] = res.astype(out_ref.dtype)


def enhanced_attention_lstm_forward(x, params, *, batch_tile=128):
    """x: (B, S) int token ids. Returns (B, HIDDEN_SIZE) float32."""
    table = params["embedding"]                      # (V, D)
    w_ih, w_hh = params["w_ih"], params["w_hh"]      # (4H, D), (4H, H)
    b_ih, b_hh = params["b_ih"], params["b_hh"]      # (4H,),   (4H,)
    w_att, b_att = params["w_att"], params["b_att"]  # (H, H),  (H,)
    w_fc1, b_fc1 = params["w_fc1"], params["b_fc1"]  # (H, H),  (H,)

    B, S = x.shape
    V, D = table.shape
    H = w_hh.shape[1]
    HP = LANE                                        # lane-padded hidden width

    # Batch tile: sublane-aligned, at least 8, capped at the rounded-up batch so tiny
    # batches don't pad to 128 rows of dead work.
    BT = max(8, min(int(batch_tile), 8 * pl.cdiv(B, 8)))
    BT = 8 * pl.cdiv(BT, 8)
    B_pad = BT * pl.cdiv(B, BT)

    # --- Embedding gather in the wrapper (XLA gather); ids clamped for safety. -----
    ids = jnp.clip(x.astype(jnp.int32), 0, V - 1)
    ids = jnp.zeros((B_pad, S), jnp.int32).at[:B].set(ids)    # padded rows -> token 0
    emb = jnp.asarray(table, jnp.float32)[ids]                # (B_pad, S, D)
    emb = jnp.transpose(emb, (1, 0, 2))                       # (S, B_pad, D): emb[t] is a clean (BT, D) tile

    # --- Lane-align parameters: each gate gets its own 128-lane block; hidden state is
    #     carried at HP=128 lanes with exact zeros in lanes [H, HP) (math unchanged). --
    f32 = jnp.float32
    bias_fused = (b_ih + b_hh).astype(f32)
    wih_pad = jnp.zeros((D, 4 * HP), f32)
    whh_pad = jnp.zeros((HP, 4 * HP), f32)
    bias_pad = jnp.zeros((1, 4 * HP), f32)
    for g in range(4):
        wih_pad = wih_pad.at[:, g * HP:g * HP + H].set(w_ih[g * H:(g + 1) * H, :].T.astype(f32))
        whh_pad = whh_pad.at[:H, g * HP:g * HP + H].set(w_hh[g * H:(g + 1) * H, :].T.astype(f32))
        bias_pad = bias_pad.at[0, g * HP:g * HP + H].set(bias_fused[g * H:(g + 1) * H])
    watt_pad = jnp.zeros((HP, HP), f32).at[:H, :H].set(w_att.T.astype(f32))
    batt_pad = jnp.zeros((1, HP), f32).at[0, :H].set(b_att.astype(f32))
    wfc1_pad = jnp.zeros((HP, HP), f32).at[:H, :H].set(w_fc1.T.astype(f32))
    bfc1_pad = jnp.zeros((1, HP), f32).at[0, :H].set(b_fc1.astype(f32))

    kernel = functools.partial(_enhanced_lstm_kernel, S, BT, HP)
    const = lambda i: (0, 0)     # parameters: fetched once, VMEM-resident
    # NOTE: constant-index params could use pipeline_mode=pl.Buffered(1) to drop the
    # (harmless, ~1 MB total) second buffer; left at the default for lowering simplicity.

    out = pl.pallas_call(
        kernel,
        out_shape=jax.ShapeDtypeStruct((B_pad, HP), jnp.float32),
        grid_spec=pltpu.PrefetchScalarGridSpec(
            num_scalar_prefetch=0,
            grid=(B_pad // BT,),
            in_specs=[
                pl.BlockSpec((S, BT, D), lambda i: (0, i, 0)),   # embeddings, per-tile DMA
                pl.BlockSpec((D, 4 * HP), const),
                pl.BlockSpec((HP, 4 * HP), const),
                pl.BlockSpec((1, 4 * HP), const),
                pl.BlockSpec((HP, HP), const),
                pl.BlockSpec((1, HP), const),
                pl.BlockSpec((HP, HP), const),
                pl.BlockSpec((1, HP), const),
            ],
            out_specs=pl.BlockSpec((BT, HP), lambda i: (i, 0)),  # lane-dense store
        ),
        compiler_params=pltpu.CompilerParams(
            dimension_semantics=("parallel",)),
    )(emb, wih_pad, whh_pad, bias_pad, watt_pad, batt_pad, wfc1_pad, bfc1_pad)

    return out[:B, :H]


def reference_forward(x, params):
    """Pure-JAX mirror of the PyTorch forward (eval mode)."""
    table = params["embedding"]
    w_ih, w_hh = params["w_ih"], params["w_hh"]
    b_ih, b_hh = params["b_ih"], params["b_hh"]
    w_att, b_att = params["w_att"], params["b_att"]
    w_fc1, b_fc1 = params["w_fc1"], params["b_fc1"]
    H = w_hh.shape[1]

    emb = table[x]                                   # (B, S, D)
    B, S, _ = emb.shape
    h = jnp.zeros((B, H), jnp.float32)
    c = jnp.zeros((B, H), jnp.float32)
    hs = []
    for t in range(S):
        gates = emb[:, t, :] @ w_ih.T + b_ih + h @ w_hh.T + b_hh
        i_g = jax.nn.sigmoid(gates[:, 0 * H:1 * H])
        f_g = jax.nn.sigmoid(gates[:, 1 * H:2 * H])
        g_g = jnp.tanh(gates[:, 2 * H:3 * H])
        o_g = jax.nn.sigmoid(gates[:, 3 * H:4 * H])
        c = f_g * c + i_g * g_g
        h = o_g * jnp.tanh(c)
        hs.append(h)
    out = jnp.stack(hs, axis=1)                      # (B, S, H)
    attn = jnp.tanh(out @ w_att.T + b_att)
    out = out * attn
    last = out[:, -1, :]                             # dropout == identity (eval)
    return last @ w_fc1.T + b_fc1


if __name__ == "__main__":
    key = jax.random.PRNGKey(0)
    keys = jax.random.split(key, 10)

    B, S = 2, 8
    x = jax.random.randint(keys[0], (B, S), 0, VOCAB_SIZE, dtype=jnp.int32)

    def init(k, shape, scale=0.1):
        return scale * jax.random.normal(k, shape, dtype=jnp.float32)

    params = {
        # nn.Embedding default init is N(0, 1)
        "embedding": jax.random.normal(keys[1], (VOCAB_SIZE, EMBEDDING_DIM),
                                       dtype=jnp.float32),
        "w_ih": init(keys[2], (4 * HIDDEN_SIZE, EMBEDDING_DIM)),
        "w_hh": init(keys[3], (4 * HIDDEN_SIZE, HIDDEN_SIZE)),
        "b_ih": init(keys[4], (4 * HIDDEN_SIZE,)),
        "b_hh": init(keys[5], (4 * HIDDEN_SIZE,)),
        "w_att": init(keys[6], (HIDDEN_SIZE, HIDDEN_SIZE)),
        "b_att": init(keys[7], (HIDDEN_SIZE,)),
        "w_fc1": init(keys[8], (HIDDEN_SIZE, HIDDEN_SIZE)),
        "b_fc1": init(keys[9], (HIDDEN_SIZE,)),
    }

    out = enhanced_attention_lstm_forward(x, params)
    out = jax.block_until_ready(out)

    with jax.default_matmul_precision("highest"):
        ref = reference_forward(x, params)
    ref = jax.block_until_ready(ref)

    assert out.shape == (B, HIDDEN_SIZE)
    # MXU f32 pass selection vs the XLA reference can differ slightly; keep a tolerance
    # that is tight enough to catch any algorithmic error (values are O(0.1)).
    assert jnp.allclose(out, ref, atol=2e-3, rtol=2e-3), "mismatch vs JAX reference"

    print("KERNEL_OK")
</pallas_src>

<mosaic_0001>
module attributes {stable_mosaic.version = 11 : i64} {
  func.func @_enhanced_lstm_kernel(%arg0: i32, %arg1: memref<8x8x50xf32, #tpu.memory_space<vmem>>, %arg2: memref<50x512xf32, #tpu.memory_space<vmem>>, %arg3: memref<128x512xf32, #tpu.memory_space<vmem>>, %arg4: memref<1x512xf32, #tpu.memory_space<vmem>>, %arg5: memref<128x128xf32, #tpu.memory_space<vmem>>, %arg6: memref<1x128xf32, #tpu.memory_space<vmem>>, %arg7: memref<128x128xf32, #tpu.memory_space<vmem>>, %arg8: memref<1x128xf32, #tpu.memory_space<vmem>>, %arg9: memref<8x128xf32, #tpu.memory_space<vmem>>) attributes {dimension_semantics = [#tpu.dimension_semantics<parallel>], iteration_bounds = array<i64: 1>, scalar_prefetch = 0 : i64, scratch_operands = 0 : i64, tpu.core_type = #tpu.core_type<tc>, window_params = [{transform_indices = @transform_0, window_bounds = array<i64: 8, 8, 50>}, {pipeline_mode = #tpu.pipeline_mode<synchronous>, transform_indices = @transform_1, window_bounds = array<i64: 50, 512>}, {pipeline_mode = #tpu.pipeline_mode<synchronous>, transform_indices = @transform_2, window_bounds = array<i64: 128, 512>}, {pipeline_mode = #tpu.pipeline_mode<synchronous>, transform_indices = @transform_3, window_bounds = array<i64: 1, 512>}, {pipeline_mode = #tpu.pipeline_mode<synchronous>, transform_indices = @transform_4, window_bounds = array<i64: 128, 128>}, {pipeline_mode = #tpu.pipeline_mode<synchronous>, transform_indices = @transform_5, window_bounds = array<i64: 1, 128>}, {pipeline_mode = #tpu.pipeline_mode<synchronous>, transform_indices = @transform_6, window_bounds = array<i64: 128, 128>}, {pipeline_mode = #tpu.pipeline_mode<synchronous>, transform_indices = @transform_7, window_bounds = array<i64: 1, 128>}, {transform_indices = @transform_8, window_bounds = array<i64: 8, 128>}]} {
    %c0 = arith.constant 0 : index
    %c0_0 = arith.constant 0 : index
    %0 = vector.load %arg2[%c0, %c0_0] : memref<50x512xf32, #tpu.memory_space<vmem>>, vector<50x512xf32>
    %c0_1 = arith.constant 0 : index
    %c0_2 = arith.constant 0 : index
    %1 = vector.load %arg3[%c0_1, %c0_2] : memref<128x512xf32, #tpu.memory_space<vmem>>, vector<128x512xf32>
    %c0_3 = arith.constant 0 : index
    %c0_4 = arith.constant 0 : index
    %2 = vector.load %arg4[%c0_3, %c0_4] : memref<1x512xf32, #tpu.memory_space<vmem>>, vector<1x512xf32>
    %cst = arith.constant 0.000000e+00 : f32
    %3 = vector.broadcast %cst : f32 to vector<8x128xf32>
    %cst_5 = arith.constant 0.000000e+00 : f32
    %4 = vector.broadcast %cst_5 : f32 to vector<8x128xf32>
    %c0_6 = arith.constant 0 : index
    %c0_7 = arith.constant 0 : index
    %c0_8 = arith.constant 0 : index
    %5 = vector.load %arg1[%c0_6, %c0_7, %c0_8] : memref<8x8x50xf32, #tpu.memory_space<vmem>>, vector<1x8x50xf32>
    %6 = vector.shape_cast %5 : vector<1x8x50xf32> to vector<8x50xf32>
    %cst_9 = arith.constant dense<0.000000e+00> : vector<8x512xf32>
    %7 = tpu.matmul %6, %0, %cst_9 {dimension_numbers = #tpu.dot_dimension_numbers<[1], [0], [0], [1], [0, 0, 1, 1], [], []>} : vector<8x50xf32>, vector<50x512xf32>, vector<8x512xf32> -> vector<8x512xf32>
    %cst_10 = arith.constant dense<0.000000e+00> : vector<8x512xf32>
    %8 = tpu.matmul %3, %1, %cst_10 {dimension_numbers = #tpu.dot_dimension_numbers<[1], [0], [0], [1], [0, 0, 1, 1], [], []>} : vector<8x128xf32>, vector<128x512xf32>, vector<8x512xf32> -> vector<8x512xf32>
    %9 = arith.addf %7, %8 : vector<8x512xf32>
    %10 = vector.broadcast %2 : vector<1x512xf32> to vector<8x512xf32>
    %11 = arith.addf %9, %10 : vector<8x512xf32>
    %12 = vector.extract_strided_slice %11 {offsets = [0, 0], sizes = [8, 128], strides = [1, 1]} : vector<8x512xf32> to vector<8x128xf32>
    %13 = arith.negf %12 : vector<8x128xf32>
    %14 = math.exp %13 : vector<8x128xf32>
    %cst_11 = arith.constant 1.000000e+00 : f32
    %15 = vector.broadcast %cst_11 : f32 to vector<8x128xf32>
    %16 = arith.addf %15, %14 : vector<8x128xf32>
    %17 = arith.divf %15, %16 : vector<8x128xf32>
    %18 = vector.extract_strided_slice %11 {offsets = [0, 128], sizes = [8, 128], strides = [1, 1]} : vector<8x512xf32> to vector<8x128xf32>
    %19 = arith.negf %18 : vector<8x128xf32>
    %20 = math.exp %19 : vector<8x128xf32>
    %cst_12 = arith.constant 1.000000e+00 : f32
    %21 = vector.broadcast %cst_12 : f32 to vector<8x128xf32>
    %22 = arith.addf %21, %20 : vector<8x128xf32>
    %23 = arith.divf %21, %22 : vector<8x128xf32>
    %24 = vector.extract_strided_slice %11 {offsets = [0, 256], sizes = [8, 128], strides = [1, 1]} : vector<8x512xf32> to vector<8x128xf32>
    %25 = math.tanh %24 : vector<8x128xf32>
    %26 = vector.extract_strided_slice %11 {offsets = [0, 384], sizes = [8, 128], strides = [1, 1]} : vector<8x512xf32> to vector<8x128xf32>
    %27 = arith.negf %26 : vector<8x128xf32>
    %28 = math.exp %27 : vector<8x128xf32>
    %cst_13 = arith.constant 1.000000e+00 : f32
    %29 = vector.broadcast %cst_13 : f32 to vector<8x128xf32>
    %30 = arith.addf %29, %28 : vector<8x128xf32>
    %31 = arith.divf %29, %30 : vector<8x128xf32>
    %32 = arith.mulf %23, %4 : vector<8x128xf32>
    %33 = arith.mulf %17, %25 : vector<8x128xf32>
    %34 = arith.addf %32, %33 : vector<8x128xf32>
    %35 = math.tanh %34 : vector<8x128xf32>
    %36 = arith.mulf %31, %35 : vector<8x128xf32>
    %c1 = arith.constant 1 : index
    %c0_14 = arith.constant 0 : index
    %c0_15 = arith.constant 0 : index
    %37 = vector.load %arg1[%c1, %c0_14, %c0_15] : memref<8x8x50xf32, #tpu.memory_space<vmem>>, vector<1x8x50xf32>
    %38 = vector.shape_cast %37 : vector<1x8x50xf32> to vector<8x50xf32>
    %cst_16 = arith.constant dense<0.000000e+00> : vector<8x512xf32>
    %39 = tpu.matmul %38, %0, %cst_16 {dimension_numbers = #tpu.dot_dimension_numbers<[1], [0], [0], [1], [0, 0, 1, 1], [], []>} : vector<8x50xf32>, vector<50x512xf32>, vector<8x512xf32> -> vector<8x512xf32>
    %cst_17 = arith.constant dense<0.000000e+00> : vector<8x512xf32>
    %40 = tpu.matmul %36, %1, %cst_17 {dimension_numbers = #tpu.dot_dimension_numbers<[1], [0], [0], [1], [0, 0, 1, 1], [], []>} : vector<8x128xf32>, vector<128x512xf32>, vector<8x512xf32> -> vector<8x512xf32>
    %41 = arith.addf %39, %40 : vector<8x512xf32>
    %42 = vector.broadcast %2 : vector<1x512xf32> to vector<8x512xf32>
    %43 = arith.addf %41, %42 : vector<8x512xf32>
    %44 = vector.extract_strided_slice %43 {offsets = [0, 0], sizes = [8, 128], strides = [1, 1]} : vector<8x512xf32> to vector<8x128xf32>
    %45 = arith.negf %44 : vector<8x128xf32>
    %46 = math.exp %45 : vector<8x128xf32>
    %cst_18 = arith.constant 1.000000e+00 : f32
    %47 = vector.broadcast %cst_18 : f32 to vector<8x128xf32>
    %48 = arith.addf %47, %46 : vector<8x128xf32>
    %49 = arith.divf %47, %48 : vector<8x128xf32>
    %50 = vector.extract_strided_slice %43 {offsets = [0, 128], sizes = [8, 128], strides = [1, 1]} : vector<8x512xf32> to vector<8x128xf32>
    %51 = arith.negf %50 : vector<8x128xf32>
    %52 = math.exp %51 : vector<8x128xf32>
    %cst_19 = arith.constant 1.000000e+00 : f32
    %53 = vector.broadcast %cst_19 : f32 to vector<8x128xf32>
    %54 = arith.addf %53, %52 : vector<8x128xf32>
    %55 = arith.divf %53, %54 : vector<8x128xf32>
    %56 = vector.extract_strided_slice %43 {offsets = [0, 256], sizes = [8, 128], strides = [1, 1]} : vector<8x512xf32> to vector<8x128xf32>
    %57 = math.tanh %56 : vector<8x128xf32>
    %58 = vector.extract_strided_slice %43 {offsets = [0, 384], sizes = [8, 128], strides = [1, 1]} : vector<8x512xf32> to vector<8x128xf32>
    %59 = arith.negf %58 : vector<8x128xf32>
    %60 = math.exp %59 : vector<8x128xf32>
    %cst_20 = arith.constant 1.000000e+00 : f32
    %61 = vector.broadcast %cst_20 : f32 to vector<8x128xf32>
    %62 = arith.addf %61, %60 : vector<8x128xf32>
    %63 = arith.divf %61, %62 : vector<8x128xf32>
    %64 = arith.mulf %55, %34 : vector<8x128xf32>
    %65 = arith.mulf %49, %57 : vector<8x128xf32>
    %66 = arith.addf %64, %65 : vector<8x128xf32>
    %67 = math.tanh %66 : vector<8x128xf32>
    %68 = arith.mulf %63, %67 : vector<8x128xf32>
    %c2 = arith.constant 2 : index
    %c0_21 = arith.constant 0 : index
    %c0_22 = arith.constant 0 : index
    %69 = vector.load %arg1[%c2, %c0_21, %c0_22] : memref<8x8x50xf32, #tpu.memory_space<vmem>>, vector<1x8x50xf32>
    %70 = vector.shape_cast %69 : vector<1x8x50xf32> to vector<8x50xf32>
    %cst_23 = arith.constant dense<0.000000e+00> : vector<8x512xf32>
    %71 = tpu.matmul %70, %0, %cst_23 {dimension_numbers = #tpu.dot_dimension_numbers<[1], [0], [0], [1], [0, 0, 1, 1], [], []>} : vector<8x50xf32>, vector<50x512xf32>, vector<8x512xf32> -> vector<8x512xf32>
    %cst_24 = arith.constant dense<0.000000e+00> : vector<8x512xf32>
    %72 = tpu.matmul %68, %1, %cst_24 {dimension_numbers = #tpu.dot_dimension_numbers<[1], [0], [0], [1], [0, 0, 1, 1], [], []>} : vector<8x128xf32>, vector<128x512xf32>, vector<8x512xf32> -> vector<8x512xf32>
    %73 = arith.addf %71, %72 : vector<8x512xf32>
    %74 = vector.broadcast %2 : vector<1x512xf32> to vector<8x512xf32>
    %75 = arith.addf %73, %74 : vector<8x512xf32>
    %76 = vector.extract_strided_slice %75 {offsets = [0, 0], sizes = [8, 128], strides = [1, 1]} : vector<8x512xf32> to vector<8x128xf32>
    %77 = arith.negf %76 : vector<8x128xf32>
    %78 = math.exp %77 : vector<8x128xf32>
    %cst_25 = arith.constant 1.000000e+00 : f32
    %79 = vector.broadcast %cst_25 : f32 to vector<8x128xf32>
    %80 = arith.addf %79, %78 : vector<8x128xf32>
    %81 = arith.divf %79, %80 : vector<8x128xf32>
    %82 = vector.extract_strided_slice %75 {offsets = [0, 128], sizes = [8, 128], strides = [1, 1]} : vector<8x512xf32> to vector<8x128xf32>
    %83 = arith.negf %82 : vector<8x128xf32>
    %84 = math.exp %83 : vector<8x128xf32>
    %cst_26 = arith.constant 1.000000e+00 : f32
    %85 = vector.broadcast %cst_26 : f32 to vector<8x128xf32>
    %86 = arith.addf %85, %84 : vector<8x128xf32>
    %87 = arith.divf %85, %86 : vector<8x128xf32>
    %88 = vector.extract_strided_slice %75 {offsets = [0, 256], sizes = [8, 128], strides = [1, 1]} : vector<8x512xf32> to vector<8x128xf32>
    %89 = math.tanh %88 : vector<8x128xf32>
    %90 = vector.extract_strided_slice %75 {offsets = [0, 384], sizes = [8, 128], strides = [1, 1]} : vector<8x512xf32> to vector<8x128xf32>
    %91 = arith.negf %90 : vector<8x128xf32>
    %92 = math.exp %91 : vector<8x128xf32>
    %cst_27 = arith.constant 1.000000e+00 : f32
    %93 = vector.broadcast %cst_27 : f32 to vector<8x128xf32>
    %94 = arith.addf %93, %92 : vector<8x128xf32>
    %95 = arith.divf %93, %94 : vector<8x128xf32>
    %96 = arith.mulf %87, %66 : vector<8x128xf32>
    %97 = arith.mulf %81, %89 : vector<8x128xf32>
    %98 = arith.addf %96, %97 : vector<8x128xf32>
    %99 = math.tanh %98 : vector<8x128xf32>
    %100 = arith.mulf %95, %99 : vector<8x128xf32>
    %c3 = arith.constant 3 : index
    %c0_28 = arith.constant 0 : index
    %c0_29 = arith.constant 0 : index
    %101 = vector.load %arg1[%c3, %c0_28, %c0_29] : memref<8x8x50xf32, #tpu.memory_space<vmem>>, vector<1x8x50xf32>
    %102 = vector.shape_cast %101 : vector<1x8x50xf32> to vector<8x50xf32>
    %cst_30 = arith.constant dense<0.000000e+00> : vector<8x512xf32>
    %103 = tpu.matmul %102, %0, %cst_30 {dimension_numbers = #tpu.dot_dimension_numbers<[1], [0], [0], [1], [0, 0, 1, 1], [], []>} : vector<8x50xf32>, vector<50x512xf32>, vector<8x512xf32> -> vector<8x512xf32>
    %cst_31 = arith.constant dense<0.000000e+00> : vector<8x512xf32>
    %104 = tpu.matmul %100, %1, %cst_31 {dimension_numbers = #tpu.dot_dimension_numbers<[1], [0], [0], [1], [0, 0, 1, 1], [], []>} : vector<8x128xf32>, vector<128x512xf32>, vector<8x512xf32> -> vector<8x512xf32>
    %105 = arith.addf %103, %104 : vector<8x512xf32>
    %106 = vector.broadcast %2 : vector<1x512xf32> to vector<8x512xf32>
    %107 = arith.addf %105, %106 : vector<8x512xf32>
    %108 = vector.extract_strided_slice %107 {offsets = [0, 0], sizes = [8, 128], strides = [1, 1]} : vector<8x512xf32> to vector<8x128xf32>
    %109 = arith.negf %108 : vector<8x128xf32>
    %110 = math.exp %109 : vector<8x128xf32>
    %cst_32 = arith.constant 1.000000e+00 : f32
    %111 = vector.broadcast %cst_32 : f32 to vector<8x128xf32>
    %112 = arith.addf %111, %110 : vector<8x128xf32>
    %113 = arith.divf %111, %112 : vector<8x128xf32>
    %114 = vector.extract_strided_slice %107 {offsets = [0, 128], sizes = [8, 128], strides = [1, 1]} : vector<8x512xf32> to vector<8x128xf32>
    %115 = arith.negf %114 : vector<8x128xf32>
    %116 = math.exp %115 : vector<8x128xf32>
    %cst_33 = arith.constant 1.000000e+00 : f32
    %117 = vector.broadcast %cst_33 : f32 to vector<8x128xf32>
    %118 = arith.addf %117, %116 : vector<8x128xf32>
    %119 = arith.divf %117, %118 : vector<8x128xf32>
    %120 = vector.extract_strided_slice %107 {offsets = [0, 256], sizes = [8, 128], strides = [1, 1]} : vector<8x512xf32> to vector<8x128xf32>
    %121 = math.tanh %120 : vector<8x128xf32>
    %122 = vector.extract_strided_slice %107 {offsets = [0, 384], sizes = [8, 128], strides = [1, 1]} : vector<8x512xf32> to vector<8x128xf32>
    %123 = arith.negf %122 : vector<8x128xf32>
    %124 = math.exp %123 : vector<8x128xf32>
    %cst_34 = arith.constant 1.000000e+00 : f32
    %125 = vector.broadcast %cst_34 : f32 to vector<8x128xf32>
    %126 = arith.addf %125, %124 : vector<8x128xf32>
    %127 = arith.divf %125, %126 : vector<8x128xf32>
    %128 = arith.mulf %119, %98 : vector<8x128xf32>
    %129 = arith.mulf %113, %121 : vector<8x128xf32>
    %130 = arith.addf %128, %129 : vector<8x128xf32>
    %131 = math.tanh %130 : vector<8x128xf32>
    %132 = arith.mulf %127, %131 : vector<8x128xf32>
    %c4 = arith.constant 4 : index
    %c0_35 = arith.constant 0 : index
    %c0_36 = arith.constant 0 : index
    %133 = vector.load %arg1[%c4, %c0_35, %c0_36] : memref<8x8x50xf32, #tpu.memory_space<vmem>>, vector<1x8x50xf32>
    %134 = vector.shape_cast %133 : vector<1x8x50xf32> to vector<8x50xf32>
    %cst_37 = arith.constant dense<0.000000e+00> : vector<8x512xf32>
    %135 = tpu.matmul %134, %0, %cst_37 {dimension_numbers = #tpu.dot_dimension_numbers<[1], [0], [0], [1], [0, 0, 1, 1], [], []>} : vector<8x50xf32>, vector<50x512xf32>, vector<8x512xf32> -> vector<8x512xf32>
    %cst_38 = arith.constant dense<0.000000e+00> : vector<8x512xf32>
    %136 = tpu.matmul %132, %1, %cst_38 {dimension_numbers = #tpu.dot_dimension_numbers<[1], [0], [0], [1], [0, 0, 1, 1], [], []>} : vector<8x128xf32>, vector<128x512xf32>, vector<8x512xf32> -> vector<8x512xf32>
    %137 = arith.addf %135, %136 : vector<8x512xf32>
    %138 = vector.broadcast %2 : vector<1x512xf32> to vector<8x512xf32>
    %139 = arith.addf %137, %138 : vector<8x512xf32>
    %140 = vector.extract_strided_slice %139 {offsets = [0, 0], sizes = [8, 128], strides = [1, 1]} : vector<8x512xf32> to vector<8x128xf32>
    %141 = arith.negf %140 : vector<8x128xf32>
    %142 = math.exp %141 : vector<8x128xf32>
    %cst_39 = arith.constant 1.000000e+00 : f32
    %143 = vector.broadcast %cst_39 : f32 to vector<8x128xf32>
    %144 = arith.addf %143, %142 : vector<8x128xf32>
    %145 = arith.divf %143, %144 : vector<8x128xf32>
    %146 = vector.extract_strided_slice %139 {offsets = [0, 128], sizes = [8, 128], strides = [1, 1]} : vector<8x512xf32> to vector<8x128xf32>
    %147 = arith.negf %146 : vector<8x128xf32>
    %148 = math.exp %147 : vector<8x128xf32>
    %cst_40 = arith.constant 1.000000e+00 : f32
    %149 = vector.broadcast %cst_40 : f32 to vector<8x128xf32>
    %150 = arith.addf %149, %148 : vector<8x128xf32>
    %151 = arith.divf %149, %150 : vector<8x128xf32>
    %152 = vector.extract_strided_slice %139 {offsets = [0, 256], sizes = [8, 128], strides = [1, 1]} : vector<8x512xf32> to vector<8x128xf32>
    %153 = math.tanh %152 : vector<8x128xf32>
    %154 = vector.extract_strided_slice %139 {offsets = [0, 384], sizes = [8, 128], strides = [1, 1]} : vector<8x512xf32> to vector<8x128xf32>
    %155 = arith.negf %154 : vector<8x128xf32>
    %156 = math.exp %155 : vector<8x128xf32>
    %cst_41 = arith.constant 1.000000e+00 : f32
    %157 = vector.broadcast %cst_41 : f32 to vector<8x128xf32>
    %158 = arith.addf %157, %156 : vector<8x128xf32>
    %159 = arith.divf %157, %158 : vector<8x128xf32>
    %160 = arith.mulf %151, %130 : vector<8x128xf32>
    %161 = arith.mulf %145, %153 : vector<8x128xf32>
    %162 = arith.addf %160, %161 : vector<8x128xf32>
    %163 = math.tanh %162 : vector<8x128xf32>
    %164 = arith.mulf %159, %163 : vector<8x128xf32>
    %c5 = arith.constant 5 : index
    %c0_42 = arith.constant 0 : index
    %c0_43 = arith.constant 0 : index
    %165 = vector.load %arg1[%c5, %c0_42, %c0_43] : memref<8x8x50xf32, #tpu.memory_space<vmem>>, vector<1x8x50xf32>
    %166 = vector.shape_cast %165 : vector<1x8x50xf32> to vector<8x50xf32>
    %cst_44 = arith.constant dense<0.000000e+00> : vector<8x512xf32>
    %167 = tpu.matmul %166, %0, %cst_44 {dimension_numbers = #tpu.dot_dimension_numbers<[1], [0], [0], [1], [0, 0, 1, 1], [], []>} : vector<8x50xf32>, vector<50x512xf32>, vector<8x512xf32> -> vector<8x512xf32>
    %cst_45 = arith.constant dense<0.000000e+00> : vector<8x512xf32>
    %168 = tpu.matmul %164, %1, %cst_45 {dimension_numbers = #tpu.dot_dimension_numbers<[1], [0], [0], [1], [0, 0, 1, 1], [], []>} : vector<8x128xf32>, vector<128x512xf32>, vector<8x512xf32> -> vector<8x512xf32>
    %169 = arith.addf %167, %168 : vector<8x512xf32>
    %170 = vector.broadcast %2 : vector<1x512xf32> to vector<8x512xf32>
    %171 = arith.addf %169, %170 : vector<8x512xf32>
    %172 = vector.extract_strided_slice %171 {offsets = [0, 0], sizes = [8, 128], strides = [1, 1]} : vector<8x512xf32> to vector<8x128xf32>
    %173 = arith.negf %172 : vector<8x128xf32>
    %174 = math.exp %173 : vector<8x128xf32>
    %cst_46 = arith.constant 1.000000e+00 : f32
    %175 = vector.broadcast %cst_46 : f32 to vector<8x128xf32>
    %176 = arith.addf %175, %174 : vector<8x128xf32>
    %177 = arith.divf %175, %176 : vector<8x128xf32>
    %178 = vector.extract_strided_slice %171 {offsets = [0, 128], sizes = [8, 128], strides = [1, 1]} : vector<8x512xf32> to vector<8x128xf32>
    %179 = arith.negf %178 : vector<8x128xf32>
    %180 = math.exp %179 : vector<8x128xf32>
    %cst_47 = arith.constant 1.000000e+00 : f32
    %181 = vector.broadcast %cst_47 : f32 to vector<8x128xf32>
    %182 = arith.addf %181, %180 : vector<8x128xf32>
    %183 = arith.divf %181, %182 : vector<8x128xf32>
    %184 = vector.extract_strided_slice %171 {offsets = [0, 256], sizes = [8, 128], strides = [1, 1]} : vector<8x512xf32> to vector<8x128xf32>
    %185 = math.tanh %184 : vector<8x128xf32>
    %186 = vector.extract_strided_slice %171 {offsets = [0, 384], sizes = [8, 128], strides = [1, 1]} : vector<8x512xf32> to vector<8x128xf32>
    %187 = arith.negf %186 : vector<8x128xf32>
    %188 = math.exp %187 : vector<8x128xf32>
    %cst_48 = arith.constant 1.000000e+00 : f32
    %189 = vector.broadcast %cst_48 : f32 to vector<8x128xf32>
    %190 = arith.addf %189, %188 : vector<8x128xf32>
    %191 = arith.divf %189, %190 : vector<8x128xf32>
    %192 = arith.mulf %183, %162 : vector<8x128xf32>
    %193 = arith.mulf %177, %185 : vector<8x128xf32>
    %194 = arith.addf %192, %193 : vector<8x128xf32>
    %195 = math.tanh %194 : vector<8x128xf32>
    %196 = arith.mulf %191, %195 : vector<8x128xf32>
    %c6 = arith.constant 6 : index
    %c0_49 = arith.constant 0 : index
    %c0_50 = arith.constant 0 : index
    %197 = vector.load %arg1[%c6, %c0_49, %c0_50] : memref<8x8x50xf32, #tpu.memory_space<vmem>>, vector<1x8x50xf32>
    %198 = vector.shape_cast %197 : vector<1x8x50xf32> to vector<8x50xf32>
    %cst_51 = arith.constant dense<0.000000e+00> : vector<8x512xf32>
    %199 = tpu.matmul %198, %0, %cst_51 {dimension_numbers = #tpu.dot_dimension_numbers<[1], [0], [0], [1], [0, 0, 1, 1], [], []>} : vector<8x50xf32>, vector<50x512xf32>, vector<8x512xf32> -> vector<8x512xf32>
    %cst_52 = arith.constant dense<0.000000e+00> : vector<8x512xf32>
    %200 = tpu.matmul %196, %1, %cst_52 {dimension_numbers = #tpu.dot_dimension_numbers<[1], [0], [0], [1], [0, 0, 1, 1], [], []>} : vector<8x128xf32>, vector<128x512xf32>, vector<8x512xf32> -> vector<8x512xf32>
    %201 = arith.addf %199, %200 : vector<8x512xf32>
    %202 = vector.broadcast %2 : vector<1x512xf32> to vector<8x512xf32>
    %203 = arith.addf %201, %202 : vector<8x512xf32>
    %204 = vector.extract_strided_slice %203 {offsets = [0, 0], sizes = [8, 128], strides = [1, 1]} : vector<8x512xf32> to vector<8x128xf32>
    %205 = arith.negf %204 : vector<8x128xf32>
    %206 = math.exp %205 : vector<8x128xf32>
    %cst_53 = arith.constant 1.000000e+00 : f32
    %207 = vector.broadcast %cst_53 : f32 to vector<8x128xf32>
    %208 = arith.addf %207, %206 : vector<8x128xf32>
    %209 = arith.divf %207, %208 : vector<8x128xf32>
    %210 = vector.extract_strided_slice %203 {offsets = [0, 128], sizes = [8, 128], strides = [1, 1]} : vector<8x512xf32> to vector<8x128xf32>
    %211 = arith.negf %210 : vector<8x128xf32>
    %212 = math.exp %211 : vector<8x128xf32>
    %cst_54 = arith.constant 1.000000e+00 : f32
    %213 = vector.broadcast %cst_54 : f32 to vector<8x128xf32>
    %214 = arith.addf %213, %212 : vector<8x128xf32>
    %215 = arith.divf %213, %214 : vector<8x128xf32>
    %216 = vector.extract_strided_slice %203 {offsets = [0, 256], sizes = [8, 128], strides = [1, 1]} : vector<8x512xf32> to vector<8x128xf32>
    %217 = math.tanh %216 : vector<8x128xf32>
    %218 = vector.extract_strided_slice %203 {offsets = [0, 384], sizes = [8, 128], strides = [1, 1]} : vector<8x512xf32> to vector<8x128xf32>
    %219 = arith.negf %218 : vector<8x128xf32>
    %220 = math.exp %219 : vector<8x128xf32>
    %cst_55 = arith.constant 1.000000e+00 : f32
    %221 = vector.broadcast %cst_55 : f32 to vector<8x128xf32>
    %222 = arith.addf %221, %220 : vector<8x128xf32>
    %223 = arith.divf %221, %222 : vector<8x128xf32>
    %224 = arith.mulf %215, %194 : vector<8x128xf32>
    %225 = arith.mulf %209, %217 : vector<8x128xf32>
    %226 = arith.addf %224, %225 : vector<8x128xf32>
    %227 = math.tanh %226 : vector<8x128xf32>
    %228 = arith.mulf %223, %227 : vector<8x128xf32>
    %c7 = arith.constant 7 : index
    %c0_56 = arith.constant 0 : index
    %c0_57 = arith.constant 0 : index
    %229 = vector.load %arg1[%c7, %c0_56, %c0_57] : memref<8x8x50xf32, #tpu.memory_space<vmem>>, vector<1x8x50xf32>
    %230 = vector.shape_cast %229 : vector<1x8x50xf32> to vector<8x50xf32>
    %cst_58 = arith.constant dense<0.000000e+00> : vector<8x512xf32>
    %231 = tpu.matmul %230, %0, %cst_58 {dimension_numbers = #tpu.dot_dimension_numbers<[1], [0], [0], [1], [0, 0, 1, 1], [], []>} : vector<8x50xf32>, vector<50x512xf32>, vector<8x512xf32> -> vector<8x512xf32>
    %cst_59 = arith.constant dense<0.000000e+00> : vector<8x512xf32>
    %232 = tpu.matmul %228, %1, %cst_59 {dimension_numbers = #tpu.dot_dimension_numbers<[1], [0], [0], [1], [0, 0, 1, 1], [], []>} : vector<8x128xf32>, vector<128x512xf32>, vector<8x512xf32> -> vector<8x512xf32>
    %233 = arith.addf %231, %232 : vector<8x512xf32>
    %234 = vector.broadcast %2 : vector<1x512xf32> to vector<8x512xf32>
    %235 = arith.addf %233, %234 : vector<8x512xf32>
    %236 = vector.extract_strided_slice %235 {offsets = [0, 0], sizes = [8, 128], strides = [1, 1]} : vector<8x512xf32> to vector<8x128xf32>
    %237 = arith.negf %236 : vector<8x128xf32>
    %238 = math.exp %237 : vector<8x128xf32>
    %cst_60 = arith.constant 1.000000e+00 : f32
    %239 = vector.broadcast %cst_60 : f32 to vector<8x128xf32>
    %240 = arith.addf %239, %238 : vector<8x128xf32>
    %241 = arith.divf %239, %240 : vector<8x128xf32>
    %242 = vector.extract_strided_slice %235 {offsets = [0, 128], sizes = [8, 128], strides = [1, 1]} : vector<8x512xf32> to vector<8x128xf32>
    %243 = arith.negf %242 : vector<8x128xf32>
    %244 = math.exp %243 : vector<8x128xf32>
    %cst_61 = arith.constant 1.000000e+00 : f32
    %245 = vector.broadcast %cst_61 : f32 to vector<8x128xf32>
    %246 = arith.addf %245, %244 : vector<8x128xf32>
    %247 = arith.divf %245, %246 : vector<8x128xf32>
    %248 = vector.extract_strided_slice %235 {offsets = [0, 256], sizes = [8, 128], strides = [1, 1]} : vector<8x512xf32> to vector<8x128xf32>
    %249 = math.tanh %248 : vector<8x128xf32>
    %250 = vector.extract_strided_slice %235 {offsets = [0, 384], sizes = [8, 128], strides = [1, 1]} : vector<8x512xf32> to vector<8x128xf32>
    %251 = arith.negf %250 : vector<8x128xf32>
    %252 = math.exp %251 : vector<8x128xf32>
    %cst_62 = arith.constant 1.000000e+00 : f32
    %253 = vector.broadcast %cst_62 : f32 to vector<8x128xf32>
    %254 = arith.addf %253, %252 : vector<8x128xf32>
    %255 = arith.divf %253, %254 : vector<8x128xf32>
    %256 = arith.mulf %247, %226 : vector<8x128xf32>
    %257 = arith.mulf %241, %249 : vector<8x128xf32>
    %258 = arith.addf %256, %257 : vector<8x128xf32>
    %259 = math.tanh %258 : vector<8x128xf32>
    %260 = arith.mulf %255, %259 : vector<8x128xf32>
    %c0_63 = arith.constant 0 : index
    %c0_64 = arith.constant 0 : index
    %261 = vector.load %arg5[%c0_63, %c0_64] : memref<128x128xf32, #tpu.memory_space<vmem>>, vector<128x128xf32>
    %cst_65 = arith.constant dense<0.000000e+00> : vector<8x128xf32>
    %262 = tpu.matmul %260, %261, %cst_65 {dimension_numbers = #tpu.dot_dimension_numbers<[1], [0], [0], [1], [0, 0, 1, 1], [], []>} : vector<8x128xf32>, vector<128x128xf32>, vector<8x128xf32> -> vector<8x128xf32>
    %c0_66 = arith.constant 0 : index
    %c0_67 = arith.constant 0 : index
    %263 = vector.load %arg6[%c0_66, %c0_67] : memref<1x128xf32, #tpu.memory_space<vmem>>, vector<1x128xf32>
    %264 = vector.broadcast %263 : vector<1x128xf32> to vector<8x128xf32>
    %265 = arith.addf %262, %264 : vector<8x128xf32>
    %266 = math.tanh %265 : vector<8x128xf32>
    %267 = arith.mulf %260, %266 : vector<8x128xf32>
    %c0_68 = arith.constant 0 : index
    %c0_69 = arith.constant 0 : index
    %268 = vector.load %arg7[%c0_68, %c0_69] : memref<128x128xf32, #tpu.memory_space<vmem>>, vector<128x128xf32>
    %cst_70 = arith.constant dense<0.000000e+00> : vector<8x128xf32>
    %269 = tpu.matmul %267, %268, %cst_70 {dimension_numbers = #tpu.dot_dimension_numbers<[1], [0], [0], [1], [0, 0, 1, 1], [], []>} : vector<8x128xf32>, vector<128x128xf32>, vector<8x128xf32> -> vector<8x128xf32>
    %c0_71 = arith.constant 0 : index
    %c0_72 = arith.constant 0 : index
    %270 = vector.load %arg8[%c0_71, %c0_72] : memref<1x128xf32, #tpu.memory_space<vmem>>, vector<1x128xf32>
    %271 = vector.broadcast %270 : vector<1x128xf32> to vector<8x128xf32>
    %272 = arith.addf %269, %271 : vector<8x128xf32>
    %c0_73 = arith.constant 0 : index
    %c0_74 = arith.constant 0 : index
    %273 = vector.load %arg9[%c0_73, %c0_74] : memref<8x128xf32, #tpu.memory_space<vmem>>, vector<8x128xf32>
    tpu.vector_store %arg9[%c0_73, %c0_74], %272 {strides = array<i32>} : memref<8x128xf32, #tpu.memory_space<vmem>>, vector<8x128xf32>,
    return
  }
  func.func @transform_0(%arg0: i32) -> (i32, i32, i32) {
    %c0_i32 = arith.constant 0 : i32
    %c0_i32_0 = arith.constant 0 : i32
    %c0_i32_1 = arith.constant 0 : i32
    return %c0_i32, %arg0, %c0_i32_0 : i32, i32, i32
  }
  func.func @transform_1(%arg0: i32) -> (i32, i32) {
    %c0_i32 = arith.constant 0 : i32
    %c0_i32_0 = arith.constant 0 : i32
    %c0_i32_1 = arith.constant 0 : i32
    return %c0_i32, %c0_i32_0 : i32, i32
  }
  func.func @transform_2(%arg0: i32) -> (i32, i32) {
    %c0_i32 = arith.constant 0 : i32
    %c0_i32_0 = arith.constant 0 : i32
    %c0_i32_1 = arith.constant 0 : i32
    return %c0_i32, %c0_i32_0 : i32, i32
  }
  func.func @transform_3(%arg0: i32) -> (i32, i32) {
    %c0_i32 = arith.constant 0 : i32
    %c0_i32_0 = arith.constant 0 : i32
    %c0_i32_1 = arith.constant 0 : i32
    return %c0_i32, %c0_i32_0 : i32, i32
  }
  func.func @transform_4(%arg0: i32) -> (i32, i32) {
    %c0_i32 = arith.constant 0 : i32
    %c0_i32_0 = arith.constant 0 : i32
    %c0_i32_1 = arith.constant 0 : i32
    return %c0_i32, %c0_i32_0 : i32, i32
  }
  func.func @transform_5(%arg0: i32) -> (i32, i32) {
    %c0_i32 = arith.constant 0 : i32
    %c0_i32_0 = arith.constant 0 : i32
    %c0_i32_1 = arith.constant 0 : i32
    return %c0_i32, %c0_i32_0 : i32, i32
  }
  func.func @transform_6(%arg0: i32) -> (i32, i32) {
    %c0_i32 = arith.constant 0 : i32
    %c0_i32_0 = arith.constant 0 : i32
    %c0_i32_1 = arith.constant 0 : i32
    return %c0_i32, %c0_i32_0 : i32, i32
  }
  func.func @transform_7(%arg0: i32) -> (i32, i32) {
    %c0_i32 = arith.constant 0 : i32
    %c0_i32_0 = arith.constant 0 : i32
    %c0_i32_1 = arith.constant 0 : i32
    return %c0_i32, %c0_i32_0 : i32, i32
  }
  func.func @transform_8(%arg0: i32) -> (i32, i32) {
    %c0_i32 = arith.constant 0 : i32
    %c0_i32_0 = arith.constant 0 : i32
    return %arg0, %c0_i32 : i32, i32
  }
}

</mosaic_0001>

<llo_original>
// kernel: tpu_custom_call.1
$region0: #{tpu_custom_call.1}
  #allocation0 [shape = 'u32[]', space=smem, size = 0x4, offset = 0x4, fixed_abs, tag = 'smem constant byte address 0x4 - core index']
  #allocation1 [shape = 'u32[144,128]{1,0:T(1,128)}', space=vmem, size = 0x12000, scoped, tag = 'internal scratch']
  %s0 = inlined_call_operand.hbm [shape: f32[8,8,50], index: 0, kind: input, shape index: {}]
  %s1 = inlined_call_operand.hbm [shape: f32[50,512], index: 1, kind: input, shape index: {}]
  %s2 = inlined_call_operand.hbm [shape: f32[128,512], index: 2, kind: input, shape index: {}]
  %s3 = inlined_call_operand.vmem [shape: f32[1,512], index: 3, kind: input, shape index: {}]
  %s4 = inlined_call_operand.hbm [shape: f32[128,128], index: 4, kind: input, shape index: {}]
  %s5 = inlined_call_operand.vmem [shape: f32[1,128], index: 5, kind: input, shape index: {}]
  %s6 = inlined_call_operand.hbm [shape: f32[128,128], index: 6, kind: input, shape index: {}]
  %s7 = inlined_call_operand.vmem [shape: f32[1,128], index: 7, kind: input, shape index: {}]
  %s8 = inlined_call_operand.hbm [shape: f32[8,128], index: 8, kind: output, shape index: {}]
  %s9 = sld [smem:[#allocation0]]
  $region62: #{tpu_custom_call.1} parent=0
    _
  %s11 = ssub.s32 1, %s9
  %s12 = scalar_select 0, %s11, %s9
  $region1: #{tpu_custom_call.1} parent=0
    #allocation2 [shape = 'u8[32768]{0}', space=vmem, size = 0x8000, scoped, tag = 'input window, operand 0, single buffered']
    #allocation3 [shape = 's32[1]{0}', space=sflag, size = 0x4, scoped, tag = 'scoped memory for tpu_custom_call.1']
    #allocation4 [shape = 's32[1]{0}', space=sflag, size = 0x4, scoped, tag = 'scoped memory for tpu_custom_call.1']
    #allocation5 [shape = 'u8[114688]{0}', space=vmem, size = 0x1c000, scoped, tag = 'input window, operand 1, single buffered']
    #allocation6 [shape = 's32[1]{0}', space=sflag, size = 0x4, scoped, tag = 'scoped memory for tpu_custom_call.1']
    #allocation7 [shape = 'u8[262144]{0}', space=vmem, size = 0x40000, scoped, tag = 'input window, operand 2, single buffered']
    #allocation8 [shape = 'u8[65536]{0}', space=vmem, size = 0x10000, scoped, tag = 'input window, operand 4, single buffered']
    #allocation9 [shape = 's32[1]{0}', space=sflag, size = 0x4, scoped, tag = 'scoped memory for tpu_custom_call.1']
    #allocation10 [shape = 'u8[65536]{0}', space=vmem, size = 0x10000, scoped, tag = 'input window, operand 6, single buffered']
    #allocation11 [shape = 'u8[4096]{0}', space=vmem, size = 0x1000, scoped, tag = 'output window, operand 0, single buffered']
    %13 = vsyncpa [#allocation3], 0
    %14 = vsyncpa [#allocation6], 0
    %15 = vsyncpa [#allocation9], 0
    %16 = vsyncpa [#allocation4], 0
    // Predicated region
    $region2: #{tpu_custom_call.1} parent=1 // pred_check
      _
    $region3: #{tpu_custom_call.1} parent=1 // pred_check_branch
      %18 = sbr.rel (0) target = $region5
    $region4: #{tpu_custom_call.1} parent=1 // pred_region
      %s20 = ssub.s32 1024, 1024
      %21 = vsyncadd [#allocation3], %s20
      %s22 = sshll.u32 [#allocation2], 4
      %s23 = int_to_ptr.vmem [resolvable:$true] %s22
      %28 = dma.hbm_to_vmem [thread:$0]  %s0, 1024, %s23, [#allocation3], 128, 128, 8
    $region5: #{tpu_custom_call.1} parent=1 // pred_fallthru
      _
    // Predicated region
    $region6: #{tpu_custom_call.1} parent=1 // pred_check
      _
    $region7: #{tpu_custom_call.1} parent=1 // pred_check_branch
      %30 = sbr.rel (0) target = $region9
    $region8: #{tpu_custom_call.1} parent=1 // pred_region
      %s32 = ssub.s32 3584, 3584
      %33 = vsyncadd [#allocation6], %s32
      %s34 = sshll.u32 [#allocation5], 4
      %s35 = int_to_ptr.vmem [resolvable:$true] %s34
      %40 = dma.hbm_to_vmem [thread:$0]  %s1, 3584, %s35, [#allocation6], 512, 512, 32
    $region9: #{tpu_custom_call.1} parent=1 // pred_fallthru
      _
    // Predicated region
    $region10: #{tpu_custom_call.1} parent=1 // pred_check
      _
    $region11: #{tpu_custom_call.1} parent=1 // pred_check_branch
      %42 = sbr.rel (0) target = $region13
    $region12: #{tpu_custom_call.1} parent=1 // pred_region
      %s44 = ssub.s32 8192, 8192
      %45 = vsyncadd [#allocation6], %s44
      %s46 = sshll.u32 [#allocation7], 4
      %s47 = int_to_ptr.vmem [resolvable:$true] %s46
      %52 = dma.hbm_to_vmem [thread:$0]  %s2, 8192, %s47, [#allocation6], 512, 512, 32
    $region13: #{tpu_custom_call.1} parent=1 // pred_fallthru
      _
    // Predicated region
    $region14: #{tpu_custom_call.1} parent=1 // pred_check
      _
    $region15: #{tpu_custom_call.1} parent=1 // pred_check_branch
      %54 = sbr.rel (0) target = $region17
    $region16: #{tpu_custom_call.1} parent=1 // pred_region
      _
    $region17: #{tpu_custom_call.1} parent=1 // pred_fallthru
      _
    // Predicated region
    $region18: #{tpu_custom_call.1} parent=1 // pred_check
      _
    $region19: #{tpu_custom_call.1} parent=1 // pred_check_branch
      %56 = sbr.rel (0) target = $region21
    $region20: #{tpu_custom_call.1} parent=1 // pred_region
      %s58 = ssub.s32 2048, 2048
      %59 = vsyncadd [#allocation9], %s58
      %s60 = sshll.u32 [#allocation8], 4
      %s61 = int_to_ptr.vmem [resolvable:$true] %s60
      %66 = dma.hbm_to_vmem [thread:$0]  %s4, 2048, %s61, [#allocation9], 128, 128, 8
    $region21: #{tpu_custom_call.1} parent=1 // pred_fallthru
      _
    // Predicated region
    $region22: #{tpu_custom_call.1} parent=1 // pred_check
      _
    $region23: #{tpu_custom_call.1} parent=1 // pred_check_branch
      %68 = sbr.rel (0) target = $region25
    $region24: #{tpu_custom_call.1} parent=1 // pred_region
      _
    $region25: #{tpu_custom_call.1} parent=1 // pred_fallthru
      _
    // Predicated region
    $region26: #{tpu_custom_call.1} parent=1 // pred_check
      _
    $region27: #{tpu_custom_call.1} parent=1 // pred_check_branch
      %70 = sbr.rel (0) target = $region29
    $region28: #{tpu_custom_call.1} parent=1 // pred_region
      %s72 = ssub.s32 2048, 2048
      %73 = vsyncadd [#allocation9], %s72
      %s74 = sshll.u32 [#allocation10], 4
      %s75 = int_to_ptr.vmem [resolvable:$true] %s74
      %80 = dma.hbm_to_vmem [thread:$0]  %s6, 2048, %s75, [#allocation9], 128, 128, 8
    $region29: #{tpu_custom_call.1} parent=1 // pred_fallthru
      _
    // Predicated region
    $region30: #{tpu_custom_call.1} parent=1 // pred_check
      _
    $region31: #{tpu_custom_call.1} parent=1 // pred_check_branch
      %82 = sbr.rel (0) target = $region33
    $region32: #{tpu_custom_call.1} parent=1 // pred_region
      _
    $region33: #{tpu_custom_call.1} parent=1 // pred_fallthru
      _
    // Predicated region
    $region34: #{tpu_custom_call.1} parent=1 // pred_check
      _
    $region35: #{tpu_custom_call.1} parent=1 // pred_check_branch
      %84 = sbr.rel (0) target = $region37
    $region36: #{tpu_custom_call.1} parent=1 // pred_region
      %85 = dma.done [#allocation3], 1024
    $region37: #{tpu_custom_call.1} parent=1 // pred_fallthru
      _
    // Predicated region
    $region38: #{tpu_custom_call.1} parent=1 // pred_check
      _
    $region39: #{tpu_custom_call.1} parent=1 // pred_check_branch
      %87 = sbr.rel (0) target = $region41
    $region40: #{tpu_custom_call.1} parent=1 // pred_region
      %88 = dma.done [#allocation6], 3584
    $region41: #{tpu_custom_call.1} parent=1 // pred_fallthru
      _
    // Predicated region
    $region42: #{tpu_custom_call.1} parent=1 // pred_check
      _
    $region43: #{tpu_custom_call.1} parent=1 // pred_check_branch
      %90 = sbr.rel (0) target = $region45
    $region44: #{tpu_custom_call.1} parent=1 // pred_region
      %91 = dma.done [#allocation6], 8192
    $region45: #{tpu_custom_call.1} parent=1 // pred_fallthru
      _
    // Predicated region
    $region46: #{tpu_custom_call.1} parent=1 // pred_check
      _
    $region47: #{tpu_custom_call.1} parent=1 // pred_check_branch
      %93 = sbr.rel (0) target = $region49
    $region48: #{tpu_custom_call.1} parent=1 // pred_region
      %94 = dma.done [#allocation9], 2048
    $region49: #{tpu_custom_call.1} parent=1 // pred_fallthru
      _
    // Predicated region
    $region50: #{tpu_custom_call.1} parent=1 // pred_check
      _
    $region51: #{tpu_custom_call.1} parent=1 // pred_check_branch
      %96 = sbr.rel (0) target = $region53
    $region52: #{tpu_custom_call.1} parent=1 // pred_region
      %97 = dma.done [#allocation9], 2048
    $region53: #{tpu_custom_call.1} parent=1 // pred_fallthru
      _
    %v98 = vld [vmem:[#allocation5] sm:$0xff]
    %v99 = vld [vmem:[#allocation5 + $0x8] sm:$0xff]
    %v100 = vld [vmem:[#allocation5 + $0x10] sm:$0xff]
    %v101 = vld [vmem:[#allocation5 + $0x18] sm:$0xff]
    %v102 = vld [vmem:[#allocation5 + $0x20] sm:$0xff]
    %v103 = vld [vmem:[#allocation5 + $0x28] sm:$0xff]
    %v104 = vld [vmem:[#allocation5 + $0x30] sm:$0xff]
    %v105 = vld [vmem:[#allocation5 + $0x38] sm:$0xff]
    %v106 = vld [vmem:[#allocation5 + $0x40] sm:$0xff]
    %v107 = vld [vmem:[#allocation5 + $0x48] sm:$0xff]
    %v108 = vld [vmem:[#allocation5 + $0x50] sm:$0xff]
    %v109 = vld [vmem:[#allocation5 + $0x58] sm:$0xff]
    %v110 = vld [vmem:[#allocation5 + $0x60] sm:$0xff]
    %v111 = vld [vmem:[#allocation5 + $0x68] sm:$0xff]
    %v112 = vld [vmem:[#allocation5 + $0x70] sm:$0xff]
    %v113 = vld [vmem:[#allocation5 + $0x78] sm:$0xff]
    %v114 = vld [vmem:[#allocation5 + $0x80] sm:$0xff]
    %v115 = vld [vmem:[#allocation5 + $0x88] sm:$0xff]
    %v116 = vld [vmem:[#allocation5 + $0x90] sm:$0xff]
    %v117 = vld [vmem:[#allocation5 + $0x98] sm:$0xff]
    %v118 = vld [vmem:[#allocation5 + $0xa0] sm:$0xff]
    %v119 = vld [vmem:[#allocation5 + $0xa8] sm:$0xff]
    %v120 = vld [vmem:[#allocation5 + $0xb0] sm:$0xff]
    %v121 = vld [vmem:[#allocation5 + $0xb8] sm:$0xff]
    %v122 = vld [vmem:[#allocation5 + $0xc0] sm:$0x3]
    %v123 = vld [vmem:[#allocation5 + $0xc8] sm:$0x3]
    %v124 = vld [vmem:[#allocation5 + $0xd0] sm:$0x3]
    %v125 = vld [vmem:[#allocation5 + $0xd8] sm:$0x3]
    %v126 = vld [vmem:[#allocation7] sm:$0xff]
    %v127 = vld [vmem:[#allocation7 + $0x8] sm:$0xff]
    %v128 = vld [vmem:[#allocation7 + $0x10] sm:$0xff]
    %v129 = vld [vmem:[#allocation7 + $0x18] sm:$0xff]
    %v130 = vld [vmem:[#allocation7 + $0x20] sm:$0xff]
    %v131 = vld [vmem:[#allocation7 + $0x28] sm:$0xff]
    %v132 = vld [vmem:[#allocation7 + $0x30] sm:$0xff]
    %v133 = vld [vmem:[#allocation7 + $0x38] sm:$0xff]
    %v134 = vld [vmem:[#allocation7 + $0x40] sm:$0xff]
    %v135 = vld [vmem:[#allocation7 + $0x48] sm:$0xff]
    %v136 = vld [vmem:[#allocation7 + $0x50] sm:$0xff]
    %v137 = vld [vmem:[#allocation7 + $0x58] sm:$0xff]
    %v138 = vld [vmem:[#allocation7 + $0x60] sm:$0xff]
    %v139 = vld [vmem:[#allocation7 + $0x68] sm:$0xff]
    %v140 = vld [vmem:[#allocation7 + $0x70] sm:$0xff]
    %v141 = vld [vmem:[#allocation7 + $0x78] sm:$0xff]
    %v142 = vld [vmem:[#allocation7 + $0x80] sm:$0xff]
    %v143 = vld [vmem:[#allocation7 + $0x88] sm:$0xff]
    %v144 = vld [vmem:[#allocation7 + $0x90] sm:$0xff]
    %v145 = vld [vmem:[#allocation7 + $0x98] sm:$0xff]
    %v146 = vld [vmem:[#allocation7 + $0xa0] sm:$0xff]
    %v147 = vld [vmem:[#allocation7 + $0xa8] sm:$0xff]
    %v148 = vld [vmem:[#allocation7 + $0xb0] sm:$0xff]
    %v149 = vld [vmem:[#allocation7 + $0xb8] sm:$0xff]
    %v150 = vld [vmem:[#allocation7 + $0xc0] sm:$0xff]
    %v151 = vld [vmem:[#allocation7 + $0xc8] sm:$0xff]
    %v152 = vld [vmem:[#allocation7 + $0xd0] sm:$0xff]
    %v153 = vld [vmem:[#allocation7 + $0xd8] sm:$0xff]
    %v154 = vld [vmem:[#allocation7 + $0xe0] sm:$0xff]
    %v155 = vld [vmem:[#allocation7 + $0xe8] sm:$0xff]
    %v156 = vld [vmem:[#allocation7 + $0xf0] sm:$0xff]
    %v157 = vld [vmem:[#allocation7 + $0xf8] sm:$0xff]
    %v158 = vld [vmem:[#allocation7 + $0x100] sm:$0xff]
    %v159 = vld [vmem:[#allocation7 + $0x108] sm:$0xff]
    %v160 = vld [vmem:[#allocation7 + $0x110] sm:$0xff]
    %v161 = vld [vmem:[#allocation7 + $0x118] sm:$0xff]
    %v162 = vld [vmem:[#allocation7 + $0x120] sm:$0xff]
    %v163 = vld [vmem:[#allocation7 + $0x128] sm:$0xff]
    %v164 = vld [vmem:[#allocation7 + $0x130] sm:$0xff]
    %v165 = vld [vmem:[#allocation7 + $0x138] sm:$0xff]
    %v166 = vld [vmem:[#allocation7 + $0x140] sm:$0xff]
    %v167 = vld [vmem:[#allocation7 + $0x148] sm:$0xff]
    %v168 = vld [vmem:[#allocation7 + $0x150] sm:$0xff]
    %v169 = vld [vmem:[#allocation7 + $0x158] sm:$0xff]
    %v170 = vld [vmem:[#allocation7 + $0x160] sm:$0xff]
    %v171 = vld [vmem:[#allocation7 + $0x168] sm:$0xff]
    %v172 = vld [vmem:[#allocation7 + $0x170] sm:$0xff]
    %v173 = vld [vmem:[#allocation7 + $0x178] sm:$0xff]
    %v174 = vld [vmem:[#allocation7 + $0x180] sm:$0xff]
    %v175 = vld [vmem:[#allocation7 + $0x188] sm:$0xff]
    %v176 = vld [vmem:[#allocation7 + $0x190] sm:$0xff]
    %v177 = vld [vmem:[#allocation7 + $0x198] sm:$0xff]
    %v178 = vld [vmem:[#allocation7 + $0x1a0] sm:$0xff]
    %v179 = vld [vmem:[#allocation7 + $0x1a8] sm:$0xff]
    %v180 = vld [vmem:[#allocation7 + $0x1b0] sm:$0xff]
    %v181 = vld [vmem:[#allocation7 + $0x1b8] sm:$0xff]
    %v182 = vld [vmem:[#allocation7 + $0x1c0] sm:$0xff]
    %v183 = vld [vmem:[#allocation7 + $0x1c8] sm:$0xff]
    %v184 = vld [vmem:[#allocation7 + $0x1d0] sm:$0xff]
    %v185 = vld [vmem:[#allocation7 + $0x1d8] sm:$0xff]
    %v186 = vld [vmem:[#allocation7 + $0x1e0] sm:$0xff]
    %v187 = vld [vmem:[#allocation7 + $0x1e8] sm:$0xff]
    %v188 = vld [vmem:[#allocation7 + $0x1f0] sm:$0xff]
    %v189 = vld [vmem:[#allocation7 + $0x1f8] sm:$0xff]
    %v190 = vld [vmem:[%s3] sm:$0xf]
    %v191 = vld [vmem:[#allocation2] sm:$0xff]
    %192 = vmatprep.subr.mxu0 %v127
    %193 = vmatpush1.msra.mxu0 %v126
    %194 = vmatprep.subr.mxu0 %v131
    %195 = vmatpush1.msra.mxu0 %v130
    %196 = vmatprep.subr.mxu0 %v135
    %197 = vmatpush1.msra.mxu0 %v134
    %198 = vmatprep.subr.mxu0 %v139
    %199 = vmatpush1.msra.mxu0 %v138
    %200 = vmatprep.subr.mxu0 %v143
    %201 = vmatpush1.msra.mxu0 %v142
    %202 = vmatprep.subr.mxu0 %v147
    %203 = vmatpush1.msra.mxu0 %v146
    %204 = vmatprep.subr.mxu0 %v151
    %205 = vmatpush1.msra.mxu0 %v150
    %206 = vmatprep.subr.mxu0 %v155
    %207 = vmatpush1.msra.mxu0 %v154
    %208 = vmatprep.subr.mxu0 %v159
    %209 = vmatpush1.msra.mxu0 %v158
    %210 = vmatprep.subr.mxu0 %v163
    %211 = vmatpush1.msra.mxu0 %v162
    %212 = vmatprep.subr.mxu0 %v167
    %213 = vmatpush1.msra.mxu0 %v166
    %214 = vmatprep.subr.mxu0 %v171
    %215 = vmatpush1.msra.mxu0 %v170
    %216 = vmatprep.subr.mxu0 %v175
    %217 = vmatpush1.msra.mxu0 %v174
    %218 = vmatprep.subr.mxu0 %v179
    %219 = vmatpush1.msra.mxu0 %v178
    %220 = vmatprep.subr.mxu0 %v183
    %221 = vmatpush1.msra.mxu0 %v182
    %222 = vmatprep.subr.mxu0 %v187
    %223 = vmatpush1.msra.mxu0 %v186
    %224 = vmatprep.subr.mxu0 0.0
    %225 = vmatpush1.msra.mxu0 0.0
    %226 = vmatprep.subr.mxu0 0.0
    %227 = vmatpush1.msra.mxu0 0.0
    %228 = vmatprep.subr.mxu0 0.0
    %229 = vmatpush1.msra.mxu0 0.0
    %230 = vmatprep.subr.mxu0 0.0
    %231 = vmatpush1.msra.mxu0 0.0
    %232 = vmatprep.subr.mxu0 0.0
    %233 = vmatpush1.msra.mxu0 0.0
    %234 = vmatprep.subr.mxu0 0.0
    %235 = vmatpush1.msra.mxu0 0.0
    %236 = vmatprep.subr.mxu0 0.0
    %237 = vmatpush1.msra.mxu0 0.0
    %238 = vmatprep.subr.mxu0 0.0
    %239 = vmatpush1.msra.mxu0 0.0
    %240 = vmatprep.subr.mxu0 0.0
    %241 = vmatpush1.msra.mxu0 0.0
    %242 = vmatprep.subr.mxu0 0.0
    %243 = vmatpush1.msra.mxu0 0.0
    %244 = vmatprep.subr.mxu0 0.0
    %245 = vmatpush1.msra.mxu0 0.0
    %246 = vmatprep.subr.mxu0 0.0
    %247 = vmatpush1.msra.mxu0 0.0
    %248 = vmatprep.subr.mxu0 0.0
    %249 = vmatpush1.msra.mxu0 0.0
    %250 = vmatprep.subr.mxu0 0.0
    %251 = vmatpush1.msra.mxu0 0.0
    %252 = vmatprep.subr.mxu0 0.0
    %253 = vmatpush1.msra.mxu0 0.0
    %254 = vmatprep.subr.mxu0 0.0
    %255 = vmatpush1.msra.mxu0 0.0
    %256 = vmatprep.mubr.f32.mxu0 0.0
    %257 = vmatmul.mubr.f32.gmra.mrb[0].mxu0 0.0
    %v258 = vpop.f32.mrb[0].mxu0
    %v259 = vadd.f32 0.0, %v258
    %v260 = vpop.f32.mrb[0].mxu0
    %v261 = vadd.f32 0.0, %v260
    %262 = vdwg.mxu0
    %263 = vmatprep.subr.mxu0 %v129
    %264 = vmatpush1.msra.mxu0 %v128
    %265 = vmatprep.subr.mxu0 %v133
    %266 = vmatpush1.msra.mxu0 %v132
    %267 = vmatprep.subr.mxu0 %v137
    %268 = vmatpush1.msra.mxu0 %v136
    %269 = vmatprep.subr.mxu0 %v141
    %270 = vmatpush1.msra.mxu0 %v140
    %271 = vmatprep.subr.mxu0 %v145
    %272 = vmatpush1.msra.mxu0 %v144
    %273 = vmatprep.subr.mxu0 %v149
    %274 = vmatpush1.msra.mxu0 %v148
    %275 = vmatprep.subr.mxu0 %v153
    %276 = vmatpush1.msra.mxu0 %v152
    %277 = vmatprep.subr.mxu0 %v157
    %278 = vmatpush1.msra.mxu0 %v156
    %279 = vmatprep.subr.mxu0 %v161
    %280 = vmatpush1.msra.mxu0 %v160
    %281 = vmatprep.subr.mxu0 %v165
    %282 = vmatpush1.msra.mxu0 %v164
    %283 = vmatprep.subr.mxu0 %v169
    %284 = vmatpush1.msra.mxu0 %v168
    %285 = vmatprep.subr.mxu0 %v173
    %286 = vmatpush1.msra.mxu0 %v172
    %287 = vmatprep.subr.mxu0 %v177
    %288 = vmatpush1.msra.mxu0 %v176
    %289 = vmatprep.subr.mxu0 %v181
    %290 = vmatpush1.msra.mxu0 %v180
    %291 = vmatprep.subr.mxu0 %v185
    %292 = vmatpush1.msra.mxu0 %v184
    %293 = vmatprep.subr.mxu0 %v189
    %294 = vmatpush1.msra.mxu0 %v188
    %295 = vmatprep.subr.mxu0 0.0
    %296 = vmatpush1.msra.mxu0 0.0
    %297 = vmatprep.subr.mxu0 0.0
    %298 = vmatpush1.msra.mxu0 0.0
    %299 = vmatprep.subr.mxu0 0.0
    %300 = vmatpush1.msra.mxu0 0.0
    %301 = vmatprep.subr.mxu0 0.0
    %302 = vmatpush1.msra.mxu0 0.0
    %303 = vmatprep.subr.mxu0 0.0
    %304 = vmatpush1.msra.mxu0 0.0
    %305 = vmatprep.subr.mxu0 0.0
    %306 = vmatpush1.msra.mxu0 0.0
    %307 = vmatprep.subr.mxu0 0.0
    %308 = vmatpush1.msra.mxu0 0.0
    %309 = vmatprep.subr.mxu0 0.0
    %310 = vmatpush1.msra.mxu0 0.0
    %311 = vmatprep.subr.mxu0 0.0
    %312 = vmatpush1.msra.mxu0 0.0
    %313 = vmatprep.subr.mxu0 0.0
    %314 = vmatpush1.msra.mxu0 0.0
    %315 = vmatprep.subr.mxu0 0.0
    %316 = vmatpush1.msra.mxu0 0.0
    %317 = vmatprep.subr.mxu0 0.0
    %318 = vmatpush1.msra.mxu0 0.0
    %319 = vmatprep.subr.mxu0 0.0
    %320 = vmatpush1.msra.mxu0 0.0
    %321 = vmatprep.subr.mxu0 0.0
    %322 = vmatpush1.msra.mxu0 0.0
    %323 = vmatprep.subr.mxu0 0.0
    %324 = vmatpush1.msra.mxu0 0.0
    %325 = vmatprep.subr.mxu0 0.0
    %326 = vmatpush1.msra.mxu0 0.0
    %327 = vmatprep.mubr.f32.mxu0 0.0
    %328 = vmatmul.mubr.f32.gmra.mrb[0].mxu0 0.0
    %v329 = vpop.f32.mrb[0].mxu0
    %v330 = vadd.f32 0.0, %v329
    %v331 = vpop.f32.mrb[0].mxu0
    %v332 = vadd.f32 0.0, %v331
    %333 = vdwg.mxu0
    %vm334 = vcmask 408576
    %v336 = vsel %vm334, %v191, 0
    %vm338 = vcmask 1041408
    %v340 = vsel %vm338, %v122, 0
    %v343 = vsel %vm338, %v123, 0
    %v346 = vsel %vm338, %v124, 0
    %v349 = vsel %vm338, %v125, 0
    %351 = vmatprep.subr.mxu0 %v99
    %352 = vmatpush1.msra.mxu0 %v98
    %353 = vmatprep.subr.mxu0 %v103
    %354 = vmatpush1.msra.mxu0 %v102
    %355 = vmatprep.subr.mxu0 %v107
    %356 = vmatpush1.msra.mxu0 %v106
    %357 = vmatprep.subr.mxu0 %v111
    %358 = vmatpush1.msra.mxu0 %v110
    %359 = vmatprep.subr.mxu0 %v115
    %360 = vmatpush1.msra.mxu0 %v114
    %361 = vmatprep.subr.mxu0 %v119
    %362 = vmatpush1.msra.mxu0 %v118
    %363 = vmatprep.subr.mxu0 %v343
    %364 = vmatpush1.msra.mxu0 %v340
    %365 = vmatprep.subr.mxu0 0.0
    %366 = vmatpush1.msra.mxu0 0.0
    %367 = vmatprep.subr.mxu0 0.0
    %368 = vmatpush1.msra.mxu0 0.0
    %369 = vmatprep.subr.mxu0 0.0
    %370 = vmatpush1.msra.mxu0 0.0
    %371 = vmatprep.subr.mxu0 0.0
    %372 = vmatpush1.msra.mxu0 0.0
    %373 = vmatprep.subr.mxu0 0.0
    %374 = vmatpush1.msra.mxu0 0.0
    %375 = vmatprep.subr.mxu0 0.0
    %376 = vmatpush1.msra.mxu0 0.0
    %377 = vmatprep.subr.mxu0 0.0
    %378 = vmatpush1.msra.mxu0 0.0
    %379 = vmatprep.subr.mxu0 0.0
    %380 = vmatpush1.msra.mxu0 0.0
    %381 = vmatprep.subr.mxu0 0.0
    %382 = vmatpush1.msra.mxu0 0.0
    %383 = vmatprep.subr.mxu0 0.0
    %384 = vmatpush1.msra.mxu0 0.0
    %385 = vmatprep.subr.mxu0 0.0
    %386 = vmatpush1.msra.mxu0 0.0
    %387 = vmatprep.subr.mxu0 0.0
    %388 = vmatpush1.msra.mxu0 0.0
    %389 = vmatprep.subr.mxu0 0.0
    %390 = vmatpush1.msra.mxu0 0.0
    %391 = vmatprep.subr.mxu0 0.0
    %392 = vmatpush1.msra.mxu0 0.0
    %393 = vmatprep.subr.mxu0 0.0
    %394 = vmatpush1.msra.mxu0 0.0
    %395 = vmatprep.subr.mxu0 0.0
    %396 = vmatpush1.msra.mxu0 0.0
    %397 = vmatprep.subr.mxu0 0.0
    %398 = vmatpush1.msra.mxu0 0.0
    %399 = vmatprep.subr.mxu0 0.0
    %400 = vmatpush1.msra.mxu0 0.0
    %401 = vmatprep.subr.mxu0 0.0
    %402 = vmatpush1.msra.mxu0 0.0
    %403 = vmatprep.subr.mxu0 0.0
    %404 = vmatpush1.msra.mxu0 0.0
    %405 = vmatprep.subr.mxu0 0.0
    %406 = vmatpush1.msra.mxu0 0.0
    %407 = vmatprep.subr.mxu0 0.0
    %408 = vmatpush1.msra.mxu0 0.0
    %409 = vmatprep.subr.mxu0 0.0
    %410 = vmatpush1.msra.mxu0 0.0
    %411 = vmatprep.subr.mxu0 0.0
    %412 = vmatpush1.msra.mxu0 0.0
    %413 = vmatprep.subr.mxu0 0.0
    %414 = vmatpush1.msra.mxu0 0.0
    %415 = vmatprep.mubr.f32.mxu0 0.0
    %416 = vmatmul.mubr.f32.gmra.mrb[0].mxu0 %v336
    %v417 = vpop.f32.mrb[0].mxu0
    %v418 = vadd.f32 %v259, %v417
    %v419 = vpop.f32.mrb[0].mxu0
    %v420 = vadd.f32 %v261, %v419
    %421 = vdwg.mxu0
    %422 = vmatprep.subr.mxu0 %v101
    %423 = vmatpush1.msra.mxu0 %v100
    %424 = vmatprep.subr.mxu0 %v105
    %425 = vmatpush1.msra.mxu0 %v104
    %426 = vmatprep.subr.mxu0 %v109
    %427 = vmatpush1.msra.mxu0 %v108
    %428 = vmatprep.subr.mxu0 %v113
    %429 = vmatpush1.msra.mxu0 %v112
    %430 = vmatprep.subr.mxu0 %v117
    %431 = vmatpush1.msra.mxu0 %v116
    %432 = vmatprep.subr.mxu0 %v121
    %433 = vmatpush1.msra.mxu0 %v120
    %434 = vmatprep.subr.mxu0 %v349
    %435 = vmatpush1.msra.mxu0 %v346
    %436 = vmatprep.subr.mxu0 0.0
    %437 = vmatpush1.msra.mxu0 0.0
    %438 = vmatprep.subr.mxu0 0.0
    %439 = vmatpush1.msra.mxu0 0.0
    %440 = vmatprep.subr.mxu0 0.0
    %441 = vmatpush1.msra.mxu0 0.0
    %442 = vmatprep.subr.mxu0 0.0
    %443 = vmatpush1.msra.mxu0 0.0
    %444 = vmatprep.subr.mxu0 0.0
    %445 = vmatpush1.msra.mxu0 0.0
    %446 = vmatprep.subr.mxu0 0.0
    %447 = vmatpush1.msra.mxu0 0.0
    %448 = vmatprep.subr.mxu0 0.0
    %449 = vmatpush1.msra.mxu0 0.0
    %450 = vmatprep.subr.mxu0 0.0
    %451 = vmatpush1.msra.mxu0 0.0
    %452 = vmatprep.subr.mxu0 0.0
    %453 = vmatpush1.msra.mxu0 0.0
    %454 = vmatprep.subr.mxu0 0.0
    %455 = vmatpush1.msra.mxu0 0.0
    %456 = vmatprep.subr.mxu0 0.0
    %457 = vmatpush1.msra.mxu0 0.0
    %458 = vmatprep.subr.mxu0 0.0
    %459 = vmatpush1.msra.mxu0 0.0
    %460 = vmatprep.subr.mxu0 0.0
    %461 = vmatpush1.msra.mxu0 0.0
    %462 = vmatprep.subr.mxu0 0.0
    %463 = vmatpush1.msra.mxu0 0.0
    %464 = vmatprep.subr.mxu0 0.0
    %465 = vmatpush1.msra.mxu0 0.0
    %466 = vmatprep.subr.mxu0 0.0
    %467 = vmatpush1.msra.mxu0 0.0
    %468 = vmatprep.subr.mxu0 0.0
    %469 = vmatpush1.msra.mxu0 0.0
    %470 = vmatprep.subr.mxu0 0.0
    %471 = vmatpush1.msra.mxu0 0.0
    %472 = vmatprep.subr.mxu0 0.0
    %473 = vmatpush1.msra.mxu0 0.0
    %474 = vmatprep.subr.mxu0 0.0
    %475 = vmatpush1.msra.mxu0 0.0
    %476 = vmatprep.subr.mxu0 0.0
    %477 = vmatpush1.msra.mxu0 0.0
    %478 = vmatprep.subr.mxu0 0.0
    %479 = vmatpush1.msra.mxu0 0.0
    %480 = vmatprep.subr.mxu0 0.0
    %481 = vmatpush1.msra.mxu0 0.0
    %482 = vmatprep.subr.mxu0 0.0
    %483 = vmatpush1.msra.mxu0 0.0
    %484 = vmatprep.subr.mxu0 0.0
    %485 = vmatpush1.msra.mxu0 0.0
    %486 = vmatprep.mubr.f32.mxu0 0.0
    %487 = vmatmul.mubr.f32.gmra.mrb[0].mxu0 %v336
    %v488 = vpop.f32.mrb[0].mxu0
    %v489 = vadd.f32 %v330, %v488
    %v490 = vpop.f32.mrb[0].mxu0
    %v491 = vadd.f32 %v332, %v490
    %492 = vdwg.mxu0
    %v494 = vlaneseq
    %v495 = vshrl.u32 %v494, 7
    %v496 = vsub.s32 0, %v495
    %v497 = vrot.slane %v190, %v496
    %v498 = vlaneseq
    %v499 = vshrl.u32 %v498, 7
    %v500 = vsub.s32 1, %v499
    %v501 = vrot.slane %v190, %v500
    %v502 = vlaneseq
    %v503 = vshrl.u32 %v502, 7
    %v504 = vsub.s32 2, %v503
    %v505 = vrot.slane %v190, %v504
    %v506 = vlaneseq
    %v507 = vshrl.u32 %v506, 7
    %v508 = vsub.s32 3, %v507
    %v509 = vrot.slane %v190, %v508
    %v514 = vadd.f32 %v418, %v497
    %v515 = vadd.f32 %v420, %v501
    %v516 = vadd.f32 %v489, %v505
    %v517 = vadd.f32 %v491, %v509
    %v518 = vxor.u32 %v514, 2147483648
    %v519 = vmul.f32 %v518, 1.442695
    %v520 = vpow.pop %v519
    %v521 = vadd.f32 %v520, 1.0
    %v522 = vrcp.pop %v521
    %v523 = vmul.f32 1.0, %v522
    %v524 = vxor.u32 %v515, 2147483648
    %v525 = vmul.f32 %v524, 1.442695
    %v526 = vpow.pop %v525
    %v527 = vadd.f32 %v526, 1.0
    %v528 = vrcp.pop %v527
    %v529 = vmul.f32 1.0, %v528
    %v530 = vtanh.pop %v516
    %v531 = vxor.u32 %v517, 2147483648
    %v532 = vmul.f32 %v531, 1.442695
    %v533 = vpow.pop %v532
    %v534 = vadd.f32 %v533, 1.0
    %v535 = vrcp.pop %v534
    %v536 = vmul.f32 1.0, %v535
    %v537 = vmul.f32 %v529, 0.0
    %v538 = vmul.f32 %v523, %v530
    %v539 = vadd.f32 %v537, %v538
    %v540 = vtanh.pop %v539
    %v541 = vmul.f32 %v536, %v540
    %s542 = scalar_lea.vmem [#allocation2], 8
    %v543 = vld [vmem:[%s542] sm:$0xff]
    %544 = vmatprep.subr.mxu0 %v127
    %545 = vmatpush1.msra.mxu0 %v126
    %546 = vmatprep.subr.mxu0 %v131
    %547 = vmatpush1.msra.mxu0 %v130
    %548 = vmatprep.subr.mxu0 %v135
    %549 = vmatpush1.msra.mxu0 %v134
    %550 = vmatprep.subr.mxu0 %v139
    %551 = vmatpush1.msra.mxu0 %v138
    %552 = vmatprep.subr.mxu0 %v143
    %553 = vmatpush1.msra.mxu0 %v142
    %554 = vmatprep.subr.mxu0 %v147
    %555 = vmatpush1.msra.mxu0 %v146
    %556 = vmatprep.subr.mxu0 %v151
    %557 = vmatpush1.msra.mxu0 %v150
    %558 = vmatprep.subr.mxu0 %v155
    %559 = vmatpush1.msra.mxu0 %v154
    %560 = vmatprep.subr.mxu0 %v159
    %561 = vmatpush1.msra.mxu0 %v158
    %562 = vmatprep.subr.mxu0 %v163
    %563 = vmatpush1.msra.mxu0 %v162
    %564 = vmatprep.subr.mxu0 %v167
    %565 = vmatpush1.msra.mxu0 %v166
    %566 = vmatprep.subr.mxu0 %v171
    %567 = vmatpush1.msra.mxu0 %v170
    %568 = vmatprep.subr.mxu0 %v175
    %569 = vmatpush1.msra.mxu0 %v174
    %570 = vmatprep.subr.mxu0 %v179
    %571 = vmatpush1.msra.mxu0 %v178
    %572 = vmatprep.subr.mxu0 %v183
    %573 = vmatpush1.msra.mxu0 %v182
    %574 = vmatprep.subr.mxu0 %v187
    %575 = vmatpush1.msra.mxu0 %v186
    %576 = vmatprep.subr.mxu0 0.0
    %577 = vmatpush1.msra.mxu0 0.0
    %578 = vmatprep.subr.mxu0 0.0
    %579 = vmatpush1.msra.mxu0 0.0
    %580 = vmatprep.subr.mxu0 0.0
    %581 = vmatpush1.msra.mxu0 0.0
    %582 = vmatprep.subr.mxu0 0.0
    %583 = vmatpush1.msra.mxu0 0.0
    %584 = vmatprep.subr.mxu0 0.0
    %585 = vmatpush1.msra.mxu0 0.0
    %586 = vmatprep.subr.mxu0 0.0
    %587 = vmatpush1.msra.mxu0 0.0
    %588 = vmatprep.subr.mxu0 0.0
    %589 = vmatpush1.msra.mxu0 0.0
    %590 = vmatprep.subr.mxu0 0.0
    %591 = vmatpush1.msra.mxu0 0.0
    %592 = vmatprep.subr.mxu0 0.0
    %593 = vmatpush1.msra.mxu0 0.0
    %594 = vmatprep.subr.mxu0 0.0
    %595 = vmatpush1.msra.mxu0 0.0
    %596 = vmatprep.subr.mxu0 0.0
    %597 = vmatpush1.msra.mxu0 0.0
    %598 = vmatprep.subr.mxu0 0.0
    %599 = vmatpush1.msra.mxu0 0.0
    %600 = vmatprep.subr.mxu0 0.0
    %601 = vmatpush1.msra.mxu0 0.0
    %602 = vmatprep.subr.mxu0 0.0
    %603 = vmatpush1.msra.mxu0 0.0
    %604 = vmatprep.subr.mxu0 0.0
    %605 = vmatpush1.msra.mxu0 0.0
    %606 = vmatprep.subr.mxu0 0.0
    %607 = vmatpush1.msra.mxu0 0.0
    %608 = vmatprep.mubr.f32.mxu0 0.0
    %609 = vmatmul.mubr.f32.gmra.mrb[0].mxu0 %v541
    %v610 = vpop.f32.mrb[0].mxu0
    %v611 = vadd.f32 0.0, %v610
    %v612 = vpop.f32.mrb[0].mxu0
    %v613 = vadd.f32 0.0, %v612
    %614 = vdwg.mxu0
    %615 = vmatprep.subr.mxu0 %v129
    %616 = vmatpush1.msra.mxu0 %v128
    %617 = vmatprep.subr.mxu0 %v133
    %618 = vmatpush1.msra.mxu0 %v132
    %619 = vmatprep.subr.mxu0 %v137
    %620 = vmatpush1.msra.mxu0 %v136
    %621 = vmatprep.subr.mxu0 %v141
    %622 = vmatpush1.msra.mxu0 %v140
    %623 = vmatprep.subr.mxu0 %v145
    %624 = vmatpush1.msra.mxu0 %v144
    %625 = vmatprep.subr.mxu0 %v149
    %626 = vmatpush1.msra.mxu0 %v148
    %627 = vmatprep.subr.mxu0 %v153
    %628 = vmatpush1.msra.mxu0 %v152
    %629 = vmatprep.subr.mxu0 %v157
    %630 = vmatpush1.msra.mxu0 %v156
    %631 = vmatprep.subr.mxu0 %v161
    %632 = vmatpush1.msra.mxu0 %v160
    %633 = vmatprep.subr.mxu0 %v165
    %634 = vmatpush1.msra.mxu0 %v164
    %635 = vmatprep.subr.mxu0 %v169
    %636 = vmatpush1.msra.mxu0 %v168
    %637 = vmatprep.subr.mxu0 %v173
    %638 = vmatpush1.msra.mxu0 %v172
    %639 = vmatprep.subr.mxu0 %v177
    %640 = vmatpush1.msra.mxu0 %v176
    %641 = vmatprep.subr.mxu0 %v181
    %642 = vmatpush1.msra.mxu0 %v180
    %643 = vmatprep.subr.mxu0 %v185
    %644 = vmatpush1.msra.mxu0 %v184
    %645 = vmatprep.subr.mxu0 %v189
    %646 = vmatpush1.msra.mxu0 %v188
    %647 = vmatprep.subr.mxu0 0.0
    %648 = vmatpush1.msra.mxu0 0.0
    %649 = vmatprep.subr.mxu0 0.0
    %650 = vmatpush1.msra.mxu0 0.0
    %651 = vmatprep.subr.mxu0 0.0
    %652 = vmatpush1.msra.mxu0 0.0
    %653 = vmatprep.subr.mxu0 0.0
    %654 = vmatpush1.msra.mxu0 0.0
    %655 = vmatprep.subr.mxu0 0.0
    %656 = vmatpush1.msra.mxu0 0.0
    %657 = vmatprep.subr.mxu0 0.0
    %658 = vmatpush1.msra.mxu0 0.0
    %659 = vmatprep.subr.mxu0 0.0
    %660 = vmatpush1.msra.mxu0 0.0
    %661 = vmatprep.subr.mxu0 0.0
    %662 = vmatpush1.msra.mxu0 0.0
    %663 = vmatprep.subr.mxu0 0.0
    %664 = vmatpush1.msra.mxu0 0.0
    %665 = vmatprep.subr.mxu0 0.0
    %666 = vmatpush1.msra.mxu0 0.0
    %667 = vmatprep.subr.mxu0 0.0
    %668 = vmatpush1.msra.mxu0 0.0
    %669 = vmatprep.subr.mxu0 0.0
    %670 = vmatpush1.msra.mxu0 0.0
    %671 = vmatprep.subr.mxu0 0.0
    %672 = vmatpush1.msra.mxu0 0.0
    %673 = vmatprep.subr.mxu0 0.0
    %674 = vmatpush1.msra.mxu0 0.0
    %675 = vmatprep.subr.mxu0 0.0
    %676 = vmatpush1.msra.mxu0 0.0
    %677 = vmatprep.subr.mxu0 0.0
    %678 = vmatpush1.msra.mxu0 0.0
    %679 = vmatprep.mubr.f32.mxu0 0.0
    %680 = vmatmul.mubr.f32.gmra.mrb[0].mxu0 %v541
    %v681 = vpop.f32.mrb[0].mxu0
    %v682 = vadd.f32 0.0, %v681
    %v683 = vpop.f32.mrb[0].mxu0
    %v684 = vadd.f32 0.0, %v683
    %685 = vdwg.mxu0
    %v687 = vsel %vm334, %v543, 0
    %689 = vmatprep.subr.mxu0 %v99
    %690 = vmatpush1.msra.mxu0 %v98
    %691 = vmatprep.subr.mxu0 %v103
    %692 = vmatpush1.msra.mxu0 %v102
    %693 = vmatprep.subr.mxu0 %v107
    %694 = vmatpush1.msra.mxu0 %v106
    %695 = vmatprep.subr.mxu0 %v111
    %696 = vmatpush1.msra.mxu0 %v110
    %697 = vmatprep.subr.mxu0 %v115
    %698 = vmatpush1.msra.mxu0 %v114
    %699 = vmatprep.subr.mxu0 %v119
    %700 = vmatpush1.msra.mxu0 %v118
    %701 = vmatprep.subr.mxu0 %v343
    %702 = vmatpush1.msra.mxu0 %v340
    %703 = vmatprep.subr.mxu0 0.0
    %704 = vmatpush1.msra.mxu0 0.0
    %705 = vmatprep.subr.mxu0 0.0
    %706 = vmatpush1.msra.mxu0 0.0
    %707 = vmatprep.subr.mxu0 0.0
    %708 = vmatpush1.msra.mxu0 0.0
    %709 = vmatprep.subr.mxu0 0.0
    %710 = vmatpush1.msra.mxu0 0.0
    %711 = vmatprep.subr.mxu0 0.0
    %712 = vmatpush1.msra.mxu0 0.0
    %713 = vmatprep.subr.mxu0 0.0
    %714 = vmatpush1.msra.mxu0 0.0
    %715 = vmatprep.subr.mxu0 0.0
    %716 = vmatpush1.msra.mxu0 0.0
    %717 = vmatprep.subr.mxu0 0.0
    %718 = vmatpush1.msra.mxu0 0.0
    %719 = vmatprep.subr.mxu0 0.0
    %720 = vmatpush1.msra.mxu0 0.0
    %721 = vmatprep.subr.mxu0 0.0
    %722 = vmatpush1.msra.mxu0 0.0
    %723 = vmatprep.subr.mxu0 0.0
    %724 = vmatpush1.msra.mxu0 0.0
    %725 = vmatprep.subr.mxu0 0.0
    %726 = vmatpush1.msra.mxu0 0.0
    %727 = vmatprep.subr.mxu0 0.0
    %728 = vmatpush1.msra.mxu0 0.0
    %729 = vmatprep.subr.mxu0 0.0
    %730 = vmatpush1.msra.mxu0 0.0
    %731 = vmatprep.subr.mxu0 0.0
    %732 = vmatpush1.msra.mxu0 0.0
    %733 = vmatprep.subr.mxu0 0.0
    %734 = vmatpush1.msra.mxu0 0.0
    %735 = vmatprep.subr.mxu0 0.0
    %736 = vmatpush1.msra.mxu0 0.0
    %737 = vmatprep.subr.mxu0 0.0
    %738 = vmatpush1.msra.mxu0 0.0
    %739 = vmatprep.subr.mxu0 0.0
    %740 = vmatpush1.msra.mxu0 0.0
    %741 = vmatprep.subr.mxu0 0.0
    %742 = vmatpush1.msra.mxu0 0.0
    %743 = vmatprep.subr.mxu0 0.0
    %744 = vmatpush1.msra.mxu0 0.0
    %745 = vmatprep.subr.mxu0 0.0
    %746 = vmatpush1.msra.mxu0 0.0
    %747 = vmatprep.subr.mxu0 0.0
    %748 = vmatpush1.msra.mxu0 0.0
    %749 = vmatprep.subr.mxu0 0.0
    %750 = vmatpush1.msra.mxu0 0.0
    %751 = vmatprep.subr.mxu0 0.0
    %752 = vmatpush1.msra.mxu0 0.0
    %753 = vmatprep.mubr.f32.mxu0 0.0
    %754 = vmatmul.mubr.f32.gmra.mrb[0].mxu0 %v687
    %v755 = vpop.f32.mrb[0].mxu0
    %v756 = vadd.f32 %v611, %v755
    %v757 = vpop.f32.mrb[0].mxu0
    %v758 = vadd.f32 %v613, %v757
    %759 = vdwg.mxu0
    %760 = vmatprep.subr.mxu0 %v101
    %761 = vmatpush1.msra.mxu0 %v100
    %762 = vmatprep.subr.mxu0 %v105
    %763 = vmatpush1.msra.mxu0 %v104
    %764 = vmatprep.subr.mxu0 %v109
    %765 = vmatpush1.msra.mxu0 %v108
    %766 = vmatprep.subr.mxu0 %v113
    %767 = vmatpush1.msra.mxu0 %v112
    %768 = vmatprep.subr.mxu0 %v117
    %769 = vmatpush1.msra.mxu0 %v116
    %770 = vmatprep.subr.mxu0 %v121
    %771 = vmatpush1.msra.mxu0 %v120
    %772 = vmatprep.subr.mxu0 %v349
    %773 = vmatpush1.msra.mxu0 %v346
    %774 = vmatprep.subr.mxu0 0.0
    %775 = vmatpush1.msra.mxu0 0.0
    %776 = vmatprep.subr.mxu0 0.0
    %777 = vmatpush1.msra.mxu0 0.0
    %778 = vmatprep.subr.mxu0 0.0
    %779 = vmatpush1.msra.mxu0 0.0
    %780 = vmatprep.subr.mxu0 0.0
    %781 = vmatpush1.msra.mxu0 0.0
    %782 = vmatprep.subr.mxu0 0.0
    %783 = vmatpush1.msra.mxu0 0.0
    %784 = vmatprep.subr.mxu0 0.0
    %785 = vmatpush1.msra.mxu0 0.0
    %786 = vmatprep.subr.mxu0 0.0
    %787 = vmatpush1.msra.mxu0 0.0
    %788 = vmatprep.subr.mxu0 0.0
    %789 = vmatpush1.msra.mxu0 0.0
    %790 = vmatprep.subr.mxu0 0.0
    %791 = vmatpush1.msra.mxu0 0.0
    %792 = vmatprep.subr.mxu0 0.0
    %793 = vmatpush1.msra.mxu0 0.0
    %794 = vmatprep.subr.mxu0 0.0
    %795 = vmatpush1.msra.mxu0 0.0
    %796 = vmatprep.subr.mxu0 0.0
    %797 = vmatpush1.msra.mxu0 0.0
    %798 = vmatprep.subr.mxu0 0.0
    %799 = vmatpush1.msra.mxu0 0.0
    %800 = vmatprep.subr.mxu0 0.0
    %801 = vmatpush1.msra.mxu0 0.0
    %802 = vmatprep.subr.mxu0 0.0
    %803 = vmatpush1.msra.mxu0 0.0
    %804 = vmatprep.subr.mxu0 0.0
    %805 = vmatpush1.msra.mxu0 0.0
    %806 = vmatprep.subr.mxu0 0.0
    %807 = vmatpush1.msra.mxu0 0.0
    %808 = vmatprep.subr.mxu0 0.0
    %809 = vmatpush1.msra.mxu0 0.0
    %810 = vmatprep.subr.mxu0 0.0
    %811 = vmatpush1.msra.mxu0 0.0
    %812 = vmatprep.subr.mxu0 0.0
    %813 = vmatpush1.msra.mxu0 0.0
    %814 = vmatprep.subr.mxu0 0.0
    %815 = vmatpush1.msra.mxu0 0.0
    %816 = vmatprep.subr.mxu0 0.0
    %817 = vmatpush1.msra.mxu0 0.0
    %818 = vmatprep.subr.mxu0 0.0
    %819 = vmatpush1.msra.mxu0 0.0
    %820 = vmatprep.subr.mxu0 0.0
    %821 = vmatpush1.msra.mxu0 0.0
    %822 = vmatprep.subr.mxu0 0.0
    %823 = vmatpush1.msra.mxu0 0.0
    %824 = vmatprep.mubr.f32.mxu0 0.0
    %825 = vmatmul.mubr.f32.gmra.mrb[0].mxu0 %v687
    %v826 = vpop.f32.mrb[0].mxu0
    %v827 = vadd.f32 %v682, %v826
    %v828 = vpop.f32.mrb[0].mxu0
    %v829 = vadd.f32 %v684, %v828
    %830 = vdwg.mxu0
    %v831 = vadd.f32 %v756, %v497
    %v832 = vadd.f32 %v758, %v501
    %v833 = vadd.f32 %v827, %v505
    %v834 = vadd.f32 %v829, %v509
    %v835 = vxor.u32 %v831, 2147483648
    %v836 = vmul.f32 %v835, 1.442695
    %v837 = vpow.pop %v836
    %v838 = vadd.f32 %v837, 1.0
    %v839 = vrcp.pop %v838
    %v840 = vmul.f32 1.0, %v839
    %v841 = vxor.u32 %v832, 2147483648
    %v842 = vmul.f32 %v841, 1.442695
    %v843 = vpow.pop %v842
    %v844 = vadd.f32 %v843, 1.0
    %v845 = vrcp.pop %v844
    %v846 = vmul.f32 1.0, %v845
    %v847 = vtanh.pop %v833
    %v848 = vxor.u32 %v834, 2147483648
    %v849 = vmul.f32 %v848, 1.442695
    %v850 = vpow.pop %v849
    %v851 = vadd.f32 %v850, 1.0
    %v852 = vrcp.pop %v851
    %v853 = vmul.f32 1.0, %v852
    %v854 = vmul.f32 %v846, %v539
    %v855 = vmul.f32 %v840, %v847
    %v856 = vadd.f32 %v854, %v855
    %v857 = vtanh.pop %v856
    %v858 = vmul.f32 %v853, %v857
    %s859 = scalar_lea.vmem [#allocation2], 16
    %v860 = vld [vmem:[%s859] sm:$0xff]
    %861 = vmatprep.subr.mxu0 %v127
    %862 = vmatpush1.msra.mxu0 %v126
    %863 = vmatprep.subr.mxu0 %v131
    %864 = vmatpush1.msra.mxu0 %v130
    %865 = vmatprep.subr.mxu0 %v135
    %866 = vmatpush1.msra.mxu0 %v134
    %867 = vmatprep.subr.mxu0 %v139
    %868 = vmatpush1.msra.mxu0 %v138
    %869 = vmatprep.subr.mxu0 %v143
    %870 = vmatpush1.msra.mxu0 %v142
    %871 = vmatprep.subr.mxu0 %v147
    %872 = vmatpush1.msra.mxu0 %v146
    %873 = vmatprep.subr.mxu0 %v151
    %874 = vmatpush1.msra.mxu0 %v150
    %875 = vmatprep.subr.mxu0 %v155
    %876 = vmatpush1.msra.mxu0 %v154
    %877 = vmatprep.subr.mxu0 %v159
    %878 = vmatpush1.msra.mxu0 %v158
    %879 = vmatprep.subr.mxu0 %v163
    %880 = vmatpush1.msra.mxu0 %v162
    %881 = vmatprep.subr.mxu0 %v167
    %882 = vmatpush1.msra.mxu0 %v166
    %883 = vmatprep.subr.mxu0 %v171
    %884 = vmatpush1.msra.mxu0 %v170
    %885 = vmatprep.subr.mxu0 %v175
    %886 = vmatpush1.msra.mxu0 %v174
    %887 = vmatprep.subr.mxu0 %v179
    %888 = vmatpush1.msra.mxu0 %v178
    %889 = vmatprep.subr.mxu0 %v183
    %890 = vmatpush1.msra.mxu0 %v182
    %891 = vmatprep.subr.mxu0 %v187
    %892 = vmatpush1.msra.mxu0 %v186
    %893 = vmatprep.subr.mxu0 0.0
    %894 = vmatpush1.msra.mxu0 0.0
    %895 = vmatprep.subr.mxu0 0.0
    %896 = vmatpush1.msra.mxu0 0.0
    %897 = vmatprep.subr.mxu0 0.0
    %898 = vmatpush1.msra.mxu0 0.0
    %899 = vmatprep.subr.mxu0 0.0
    %900 = vmatpush1.msra.mxu0 0.0
    %901 = vmatprep.subr.mxu0 0.0
    %902 = vmatpush1.msra.mxu0 0.0
    %903 = vmatprep.subr.mxu0 0.0
    %904 = vmatpush1.msra.mxu0 0.0
    %905 = vmatprep.subr.mxu0 0.0
    %906 = vmatpush1.msra.mxu0 0.0
    %907 = vmatprep.subr.mxu0 0.0
    %908 = vmatpush1.msra.mxu0 0.0
    %909 = vmatprep.subr.mxu0 0.0
    %910 = vmatpush1.msra.mxu0 0.0
    %911 = vmatprep.subr.mxu0 0.0
    %912 = vmatpush1.msra.mxu0 0.0
    %913 = vmatprep.subr.mxu0 0.0
    %914 = vmatpush1.msra.mxu0 0.0
    %915 = vmatprep.subr.mxu0 0.0
    %916 = vmatpush1.msra.mxu0 0.0
    %917 = vmatprep.subr.mxu0 0.0
    %918 = vmatpush1.msra.mxu0 0.0
    %919 = vmatprep.subr.mxu0 0.0
    %920 = vmatpush1.msra.mxu0 0.0
    %921 = vmatprep.subr.mxu0 0.0
    %922 = vmatpush1.msra.mxu0 0.0
    %923 = vmatprep.subr.mxu0 0.0
    %924 = vmatpush1.msra.mxu0 0.0
    %925 = vmatprep.mubr.f32.mxu0 0.0
    %926 = vmatmul.mubr.f32.gmra.mrb[0].mxu0 %v858
    %v927 = vpop.f32.mrb[0].mxu0
    %v928 = vadd.f32 0.0, %v927
    %v929 = vpop.f32.mrb[0].mxu0
    %v930 = vadd.f32 0.0, %v929
    %931 = vdwg.mxu0
    %932 = vmatprep.subr.mxu0 %v129
    %933 = vmatpush1.msra.mxu0 %v128
    %934 = vmatprep.subr.mxu0 %v133
    %935 = vmatpush1.msra.mxu0 %v132
    %936 = vmatprep.subr.mxu0 %v137
    %937 = vmatpush1.msra.mxu0 %v136
    %938 = vmatprep.subr.mxu0 %v141
    %939 = vmatpush1.msra.mxu0 %v140
    %940 = vmatprep.subr.mxu0 %v145
    %941 = vmatpush1.msra.mxu0 %v144
    %942 = vmatprep.subr.mxu0 %v149
    %943 = vmatpush1.msra.mxu0 %v148
    %944 = vmatprep.subr.mxu0 %v153
    %945 = vmatpush1.msra.mxu0 %v152
    %946 = vmatprep.subr.mxu0 %v157
    %947 = vmatpush1.msra.mxu0 %v156
    %948 = vmatprep.subr.mxu0 %v161
    %949 = vmatpush1.msra.mxu0 %v160
    %950 = vmatprep.subr.mxu0 %v165
    %951 = vmatpush1.msra.mxu0 %v164
    %952 = vmatprep.subr.mxu0 %v169
    %953 = vmatpush1.msra.mxu0 %v168
    %954 = vmatprep.subr.mxu0 %v173
    %955 = vmatpush1.msra.mxu0 %v172
    %956 = vmatprep.subr.mxu0 %v177
    %957 = vmatpush1.msra.mxu0 %v176
    %958 = vmatprep.subr.mxu0 %v181
    %959 = vmatpush1.msra.mxu0 %v180
    %960 = vmatprep.subr.mxu0 %v185
    %961 = vmatpush1.msra.mxu0 %v184
    %962 = vmatprep.subr.mxu0 %v189
    %963 = vmatpush1.msra.mxu0 %v188
    %964 = vmatprep.subr.mxu0 0.0
    %965 = vmatpush1.msra.mxu0 0.0
    %966 = vmatprep.subr.mxu0 0.0
    %967 = vmatpush1.msra.mxu0 0.0
    %968 = vmatprep.subr.mxu0 0.0
    %969 = vmatpush1.msra.mxu0 0.0
    %970 = vmatprep.subr.mxu0 0.0
    %971 = vmatpush1.msra.mxu0 0.0
    %972 = vmatprep.subr.mxu0 0.0
    %973 = vmatpush1.msra.mxu0 0.0
    %974 = vmatprep.subr.mxu0 0.0
    %975 = vmatpush1.msra.mxu0 0.0
    %976 = vmatprep.subr.mxu0 0.0
    %977 = vmatpush1.msra.mxu0 0.0
    %978 = vmatprep.subr.mxu0 0.0
    %979 = vmatpush1.msra.mxu0 0.0
    %980 = vmatprep.subr.mxu0 0.0
    %981 = vmatpush1.msra.mxu0 0.0
    %982 = vmatprep.subr.mxu0 0.0
    %983 = vmatpush1.msra.mxu0 0.0
    %984 = vmatprep.subr.mxu0 0.0
    %985 = vmatpush1.msra.mxu0 0.0
    %986 = vmatprep.subr.mxu0 0.0
    %987 = vmatpush1.msra.mxu0 0.0
    %988 = vmatprep.subr.mxu0 0.0
    %989 = vmatpush1.msra.mxu0 0.0
    %990 = vmatprep.subr.mxu0 0.0
    %991 = vmatpush1.msra.mxu0 0.0
    %992 = vmatprep.subr.mxu0 0.0
    %993 = vmatpush1.msra.mxu0 0.0
    %994 = vmatprep.subr.mxu0 0.0
    %995 = vmatpush1.msra.mxu0 0.0
    %996 = vmatprep.mubr.f32.mxu0 0.0
    %997 = vmatmul.mubr.f32.gmra.mrb[0].mxu0 %v858
    %v998 = vpop.f32.mrb[0].mxu0
    %v999 = vadd.f32 0.0, %v998
    %v1000 = vpop.f32.mrb[0].mxu0
    %v1001 = vadd.f32 0.0, %v1000
    %1002 = vdwg.mxu0
    %v1004 = vsel %vm334, %v860, 0
    %1006 = vmatprep.subr.mxu0 %v99
    %1007 = vmatpush1.msra.mxu0 %v98
    %1008 = vmatprep.subr.mxu0 %v103
    %1009 = vmatpush1.msra.mxu0 %v102
    %1010 = vmatprep.subr.mxu0 %v107
    %1011 = vmatpush1.msra.mxu0 %v106
    %1012 = vmatprep.subr.mxu0 %v111
    %1013 = vmatpush1.msra.mxu0 %v110
    %1014 = vmatprep.subr.mxu0 %v115
    %1015 = vmatpush1.msra.mxu0 %v114
    %1016 = vmatprep.subr.mxu0 %v119
    %1017 = vmatpush1.msra.mxu0 %v118
    %1018 = vmatprep.subr.mxu0 %v343
    %1019 = vmatpush1.msra.mxu0 %v340
    %1020 = vmatprep.subr.mxu0 0.0
    %1021 = vmatpush1.msra.mxu0 0.0
    %1022 = vmatprep.subr.mxu0 0.0
    %1023 = vmatpush1.msra.mxu0 0.0
    %1024 = vmatprep.subr.mxu0 0.0
    %1025 = vmatpush1.msra.mxu0 0.0
    %1026 = vmatprep.subr.mxu0 0.0
    %1027 = vmatpush1.msra.mxu0 0.0
    %1028 = vmatprep.subr.mxu0 0.0
    %1029 = vmatpush1.msra.mxu0 0.0
    %1030 = vmatprep.subr.mxu0 0.0
    %1031 = vmatpush1.msra.mxu0 0.0
    %1032 = vmatprep.subr.mxu0 0.0
    %1033 = vmatpush1.msra.mxu0 0.0
    %1034 = vmatprep.subr.mxu0 0.0
    %1035 = vmatpush1.msra.mxu0 0.0
    %1036 = vmatprep.subr.mxu0 0.0
    %1037 = vmatpush1.msra.mxu0 0.0
    %1038 = vmatprep.subr.mxu0 0.0
    %1039 = vmatpush1.msra.mxu0 0.0
    %1040 = vmatprep.subr.mxu0 0.0
    %1041 = vmatpush1.msra.mxu0 0.0
    %1042 = vmatprep.subr.mxu0 0.0
    %1043 = vmatpush1.msra.mxu0 0.0
    %1044 = vmatprep.subr.mxu0 0.0
    %1045 = vmatpush1.msra.mxu0 0.0
    %1046 = vmatprep.subr.mxu0 0.0
    %1047 = vmatpush1.msra.mxu0 0.0
    %1048 = vmatprep.subr.mxu0 0.0
    %1049 = vmatpush1.msra.mxu0 0.0
    %1050 = vmatprep.subr.mxu0 0.0
    %1051 = vmatpush1.msra.mxu0 0.0
    %1052 = vmatprep.subr.mxu0 0.0
    %1053 = vmatpush1.msra.mxu0 0.0
    %1054 = vmatprep.subr.mxu0 0.0
    %1055 = vmatpush1.msra.mxu0 0.0
    %1056 = vmatprep.subr.mxu0 0.0
    %1057 = vmatpush1.msra.mxu0 0.0
    %1058 = vmatprep.subr.mxu0 0.0
    %1059 = vmatpush1.msra.mxu0 0.0
    %1060 = vmatprep.subr.mxu0 0.0
    %1061 = vmatpush1.msra.mxu0 0.0
    %1062 = vmatprep.subr.mxu0 0.0
    %1063 = vmatpush1.msra.mxu0 0.0
    %1064 = vmatprep.subr.mxu0 0.0
    %1065 = vmatpush1.msra.mxu0 0.0
    %1066 = vmatprep.subr.mxu0 0.0
    %1067 = vmatpush1.msra.mxu0 0.0
    %1068 = vmatprep.subr.mxu0 0.0
    %1069 = vmatpush1.msra.mxu0 0.0
    %1070 = vmatprep.mubr.f32.mxu0 0.0
    %1071 = vmatmul.mubr.f32.gmra.mrb[0].mxu0 %v1004
    %v1072 = vpop.f32.mrb[0].mxu0
    %v1073 = vadd.f32 %v928, %v1072
    %v1074 = vpop.f32.mrb[0].mxu0
    %v1075 = vadd.f32 %v930, %v1074
    %1076 = vdwg.mxu0
    %1077 = vmatprep.subr.mxu0 %v101
    %1078 = vmatpush1.msra.mxu0 %v100
    %1079 = vmatprep.subr.mxu0 %v105
    %1080 = vmatpush1.msra.mxu0 %v104
    %1081 = vmatprep.subr.mxu0 %v109
    %1082 = vmatpush1.msra.mxu0 %v108
    %1083 = vmatprep.subr.mxu0 %v113
    %1084 = vmatpush1.msra.mxu0 %v112
    %1085 = vmatprep.subr.mxu0 %v117
    %1086 = vmatpush1.msra.mxu0 %v116
    %1087 = vmatprep.subr.mxu0 %v121
    %1088 = vmatpush1.msra.mxu0 %v120
    %1089 = vmatprep.subr.mxu0 %v349
    %1090 = vmatpush1.msra.mxu0 %v346
    %1091 = vmatprep.subr.mxu0 0.0
    %1092 = vmatpush1.msra.mxu0 0.0
    %1093 = vmatprep.subr.mxu0 0.0
    %1094 = vmatpush1.msra.mxu0 0.0
    %1095 = vmatprep.subr.mxu0 0.0
    %1096 = vmatpush1.msra.mxu0 0.0
    %1097 = vmatprep.subr.mxu0 0.0
    %1098 = vmatpush1.msra.mxu0 0.0
    %1099 = vmatprep.subr.mxu0 0.0
    %1100 = vmatpush1.msra.mxu0 0.0
    %1101 = vmatprep.subr.mxu0 0.0
    %1102 = vmatpush1.msra.mxu0 0.0
    %1103 = vmatprep.subr.mxu0 0.0
    %1104 = vmatpush1.msra.mxu0 0.0
    %1105 = vmatprep.subr.mxu0 0.0
    %1106 = vmatpush1.msra.mxu0 0.0
    %1107 = vmatprep.subr.mxu0 0.0
    %1108 = vmatpush1.msra.mxu0 0.0
    %1109 = vmatprep.subr.mxu0 0.0
    %1110 = vmatpush1.msra.mxu0 0.0
    %1111 = vmatprep.subr.mxu0 0.0
    %1112 = vmatpush1.msra.mxu0 0.0
    %1113 = vmatprep.subr.mxu0 0.0
    %1114 = vmatpush1.msra.mxu0 0.0
    %1115 = vmatprep.subr.mxu0 0.0
    %1116 = vmatpush1.msra.mxu0 0.0
    %1117 = vmatprep.subr.mxu0 0.0
    %1118 = vmatpush1.msra.mxu0 0.0
    %1119 = vmatprep.subr.mxu0 0.0
    %1120 = vmatpush1.msra.mxu0 0.0
    %1121 = vmatprep.subr.mxu0 0.0
    %1122 = vmatpush1.msra.mxu0 0.0
    %1123 = vmatprep.subr.mxu0 0.0
    %1124 = vmatpush1.msra.mxu0 0.0
    %1125 = vmatprep.subr.mxu0 0.0
    %1126 = vmatpush1.msra.mxu0 0.0
    %1127 = vmatprep.subr.mxu0 0.0
    %1128 = vmatpush1.msra.mxu0 0.0
    %1129 = vmatprep.subr.mxu0 0.0
    %1130 = vmatpush1.msra.mxu0 0.0
    %1131 = vmatprep.subr.mxu0 0.0
    %1132 = vmatpush1.msra.mxu0 0.0
    %1133 = vmatprep.subr.mxu0 0.0
    %1134 = vmatpush1.msra.mxu0 0.0
    %1135 = vmatprep.subr.mxu0 0.0
    %1136 = vmatpush1.msra.mxu0 0.0
    %1137 = vmatprep.subr.mxu0 0.0
    %1138 = vmatpush1.msra.mxu0 0.0
    %1139 = vmatprep.subr.mxu0 0.0
    %1140 = vmatpush1.msra.mxu0 0.0
    %1141 = vmatprep.mubr.f32.mxu0 0.0
    %1142 = vmatmul.mubr.f32.gmra.mrb[0].mxu0 %v1004
    %v1143 = vpop.f32.mrb[0].mxu0
    %v1144 = vadd.f32 %v999, %v1143
    %v1145 = vpop.f32.mrb[0].mxu0
    %v1146 = vadd.f32 %v1001, %v1145
    %1147 = vdwg.mxu0
    %v1148 = vadd.f32 %v1073, %v497
    %v1149 = vadd.f32 %v1075, %v501
    %v1150 = vadd.f32 %v1144, %v505
    %v1151 = vadd.f32 %v1146, %v509
    %v1152 = vxor.u32 %v1148, 2147483648
    %v1153 = vmul.f32 %v1152, 1.442695
    %v1154 = vpow.pop %v1153
    %v1155 = vadd.f32 %v1154, 1.0
    %v1156 = vrcp.pop %v1155
    %v1157 = vmul.f32 1.0, %v1156
    %v1158 = vxor.u32 %v1149, 2147483648
    %v1159 = vmul.f32 %v1158, 1.442695
    %v1160 = vpow.pop %v1159
    %v1161 = vadd.f32 %v1160, 1.0
    %v1162 = vrcp.pop %v1161
    %v1163 = vmul.f32 1.0, %v1162
    %v1164 = vtanh.pop %v1150
    %v1165 = vxor.u32 %v1151, 2147483648
    %v1166 = vmul.f32 %v1165, 1.442695
    %v1167 = vpow.pop %v1166
    %v1168 = vadd.f32 %v1167, 1.0
    %v1169 = vrcp.pop %v1168
    %v1170 = vmul.f32 1.0, %v1169
    %v1171 = vmul.f32 %v1163, %v856
    %v1172 = vmul.f32 %v1157, %v1164
    %v1173 = vadd.f32 %v1171, %v1172
    %v1174 = vtanh.pop %v1173
    %v1175 = vmul.f32 %v1170, %v1174
    %s1176 = scalar_lea.vmem [#allocation2], 24
    %v1177 = vld [vmem:[%s1176] sm:$0xff]
    %1178 = vmatprep.subr.mxu0 %v127
    %1179 = vmatpush1.msra.mxu0 %v126
    %1180 = vmatprep.subr.mxu0 %v131
    %1181 = vmatpush1.msra.mxu0 %v130
    %1182 = vmatprep.subr.mxu0 %v135
    %1183 = vmatpush1.msra.mxu0 %v134
    %1184 = vmatprep.subr.mxu0 %v139
    %1185 = vmatpush1.msra.mxu0 %v138
    %1186 = vmatprep.subr.mxu0 %v143
    %1187 = vmatpush1.msra.mxu0 %v142
    %1188 = vmatprep.subr.mxu0 %v147
    %1189 = vmatpush1.msra.mxu0 %v146
    %1190 = vmatprep.subr.mxu0 %v151
    %1191 = vmatpush1.msra.mxu0 %v150
    %1192 = vmatprep.subr.mxu0 %v155
    %1193 = vmatpush1.msra.mxu0 %v154
    %1194 = vmatprep.subr.mxu0 %v159
    %1195 = vmatpush1.msra.mxu0 %v158
    %1196 = vmatprep.subr.mxu0 %v163
    %1197 = vmatpush1.msra.mxu0 %v162
    %1198 = vmatprep.subr.mxu0 %v167
    %1199 = vmatpush1.msra.mxu0 %v166
    %1200 = vmatprep.subr.mxu0 %v171
    %1201 = vmatpush1.msra.mxu0 %v170
    %1202 = vmatprep.subr.mxu0 %v175
    %1203 = vmatpush1.msra.mxu0 %v174
    %1204 = vmatprep.subr.mxu0 %v179
    %1205 = vmatpush1.msra.mxu0 %v178
    %1206 = vmatprep.subr.mxu0 %v183
    %1207 = vmatpush1.msra.mxu0 %v182
    %1208 = vmatprep.subr.mxu0 %v187
    %1209 = vmatpush1.msra.mxu0 %v186
    %1210 = vmatprep.subr.mxu0 0.0
    %1211 = vmatpush1.msra.mxu0 0.0
    %1212 = vmatprep.subr.mxu0 0.0
    %1213 = vmatpush1.msra.mxu0 0.0
    %1214 = vmatprep.subr.mxu0 0.0
    %1215 = vmatpush1.msra.mxu0 0.0
    %1216 = vmatprep.subr.mxu0 0.0
    %1217 = vmatpush1.msra.mxu0 0.0
    %1218 = vmatprep.subr.mxu0 0.0
    %1219 = vmatpush1.msra.mxu0 0.0
    %1220 = vmatprep.subr.mxu0 0.0
    %1221 = vmatpush1.msra.mxu0 0.0
    %1222 = vmatprep.subr.mxu0 0.0
    %1223 = vmatpush1.msra.mxu0 0.0
    %1224 = vmatprep.subr.mxu0 0.0
    %1225 = vmatpush1.msra.mxu0 0.0
    %1226 = vmatprep.subr.mxu0 0.0
    %1227 = vmatpush1.msra.mxu0 0.0
    %1228 = vmatprep.subr.mxu0 0.0
    %1229 = vmatpush1.msra.mxu0 0.0
    %1230 = vmatprep.subr.mxu0 0.0
    %1231 = vmatpush1.msra.mxu0 0.0
    %1232 = vmatprep.subr.mxu0 0.0
    %1233 = vmatpush1.msra.mxu0 0.0
    %1234 = vmatprep.subr.mxu0 0.0
    %1235 = vmatpush1.msra.mxu0 0.0
    %1236 = vmatprep.subr.mxu0 0.0
    %1237 = vmatpush1.msra.mxu0 0.0
    %1238 = vmatprep.subr.mxu0 0.0
    %1239 = vmatpush1.msra.mxu0 0.0
    %1240 = vmatprep.subr.mxu0 0.0
    %1241 = vmatpush1.msra.mxu0 0.0
    %1242 = vmatprep.mubr.f32.mxu0 0.0
    %1243 = vmatmul.mubr.f32.gmra.mrb[0].mxu0 %v1175
    %v1244 = vpop.f32.mrb[0].mxu0
    %v1245 = vadd.f32 0.0, %v1244
    %v1246 = vpop.f32.mrb[0].mxu0
    %v1247 = vadd.f32 0.0, %v1246
    %1248 = vdwg.mxu0
    %1249 = vmatprep.subr.mxu0 %v129
    %1250 = vmatpush1.msra.mxu0 %v128
    %1251 = vmatprep.subr.mxu0 %v133
    %1252 = vmatpush1.msra.mxu0 %v132
    %1253 = vmatprep.subr.mxu0 %v137
    %1254 = vmatpush1.msra.mxu0 %v136
    %1255 = vmatprep.subr.mxu0 %v141
    %1256 = vmatpush1.msra.mxu0 %v140
    %1257 = vmatprep.subr.mxu0 %v145
    %1258 = vmatpush1.msra.mxu0 %v144
    %1259 = vmatprep.subr.mxu0 %v149
    %1260 = vmatpush1.msra.mxu0 %v148
    %1261 = vmatprep.subr.mxu0 %v153
    %1262 = vmatpush1.msra.mxu0 %v152
    %1263 = vmatprep.subr.mxu0 %v157
    %1264 = vmatpush1.msra.mxu0 %v156
    %1265 = vmatprep.subr.mxu0 %v161
    %1266 = vmatpush1.msra.mxu0 %v160
    %1267 = vmatprep.subr.mxu0 %v165
    %1268 = vmatpush1.msra.mxu0 %v164
    %1269 = vmatprep.subr.mxu0 %v169
    %1270 = vmatpush1.msra.mxu0 %v168
    %1271 = vmatprep.subr.mxu0 %v173
    %1272 = vmatpush1.msra.mxu0 %v172
    %1273 = vmatprep.subr.mxu0 %v177
    %1274 = vmatpush1.msra.mxu0 %v176
    %1275 = vmatprep.subr.mxu0 %v181
    %1276 = vmatpush1.msra.mxu0 %v180
    %1277 = vmatprep.subr.mxu0 %v185
    %1278 = vmatpush1.msra.mxu0 %v184
    %1279 = vmatprep.subr.mxu0 %v189
    %1280 = vmatpush1.msra.mxu0 %v188
    %1281 = vmatprep.subr.mxu0 0.0
    %1282 = vmatpush1.msra.mxu0 0.0
    %1283 = vmatprep.subr.mxu0 0.0
    %1284 = vmatpush1.msra.mxu0 0.0
    %1285 = vmatprep.subr.mxu0 0.0
    %1286 = vmatpush1.msra.mxu0 0.0
    %1287 = vmatprep.subr.mxu0 0.0
    %1288 = vmatpush1.msra.mxu0 0.0
    %1289 = vmatprep.subr.mxu0 0.0
    %1290 = vmatpush1.msra.mxu0 0.0
    %1291 = vmatprep.subr.mxu0 0.0
    %1292 = vmatpush1.msra.mxu0 0.0
    %1293 = vmatprep.subr.mxu0 0.0
    %1294 = vmatpush1.msra.mxu0 0.0
    %1295 = vmatprep.subr.mxu0 0.0
    %1296 = vmatpush1.msra.mxu0 0.0
    %1297 = vmatprep.subr.mxu0 0.0
    %1298 = vmatpush1.msra.mxu0 0.0
    %1299 = vmatprep.subr.mxu0 0.0
    %1300 = vmatpush1.msra.mxu0 0.0
    %1301 = vmatprep.subr.mxu0 0.0
    %1302 = vmatpush1.msra.mxu0 0.0
    %1303 = vmatprep.subr.mxu0 0.0
    %1304 = vmatpush1.msra.mxu0 0.0
    %1305 = vmatprep.subr.mxu0 0.0
    %1306 = vmatpush1.msra.mxu0 0.0
    %1307 = vmatprep.subr.mxu0 0.0
    %1308 = vmatpush1.msra.mxu0 0.0
    %1309 = vmatprep.subr.mxu0 0.0
    %1310 = vmatpush1.msra.mxu0 0.0
    %1311 = vmatprep.subr.mxu0 0.0
    %1312 = vmatpush1.msra.mxu0 0.0
    %1313 = vmatprep.mubr.f32.mxu0 0.0
    %1314 = vmatmul.mubr.f32.gmra.mrb[0].mxu0 %v1175
    %v1315 = vpop.f32.mrb[0].mxu0
    %v1316 = vadd.f32 0.0, %v1315
    %v1317 = vpop.f32.mrb[0].mxu0
    %v1318 = vadd.f32 0.0, %v1317
    %1319 = vdwg.mxu0
    %v1321 = vsel %vm334, %v1177, 0
    %1323 = vmatprep.subr.mxu0 %v99
    %1324 = vmatpush1.msra.mxu0 %v98
    %1325 = vmatprep.subr.mxu0 %v103
    %1326 = vmatpush1.msra.mxu0 %v102
    %1327 = vmatprep.subr.mxu0 %v107
    %1328 = vmatpush1.msra.mxu0 %v106
    %1329 = vmatprep.subr.mxu0 %v111
    %1330 = vmatpush1.msra.mxu0 %v110
    %1331 = vmatprep.subr.mxu0 %v115
    %1332 = vmatpush1.msra.mxu0 %v114
    %1333 = vmatprep.subr.mxu0 %v119
    %1334 = vmatpush1.msra.mxu0 %v118
    %1335 = vmatprep.subr.mxu0 %v343
    %1336 = vmatpush1.msra.mxu0 %v340
    %1337 = vmatprep.subr.mxu0 0.0
    %1338 = vmatpush1.msra.mxu0 0.0
    %1339 = vmatprep.subr.mxu0 0.0
    %1340 = vmatpush1.msra.mxu0 0.0
    %1341 = vmatprep.subr.mxu0 0.0
    %1342 = vmatpush1.msra.mxu0 0.0
    %1343 = vmatprep.subr.mxu0 0.0
    %1344 = vmatpush1.msra.mxu0 0.0
    %1345 = vmatprep.subr.mxu0 0.0
    %1346 = vmatpush1.msra.mxu0 0.0
    %1347 = vmatprep.subr.mxu0 0.0
    %1348 = vmatpush1.msra.mxu0 0.0
    %1349 = vmatprep.subr.mxu0 0.0
    %1350 = vmatpush1.msra.mxu0 0.0
    %1351 = vmatprep.subr.mxu0 0.0
    %1352 = vmatpush1.msra.mxu0 0.0
    %1353 = vmatprep.subr.mxu0 0.0
    %1354 = vmatpush1.msra.mxu0 0.0
    %1355 = vmatprep.subr.mxu0 0.0
    %1356 = vmatpush1.msra.mxu0 0.0
    %1357 = vmatprep.subr.mxu0 0.0
    %1358 = vmatpush1.msra.mxu0 0.0
    %1359 = vmatprep.subr.mxu0 0.0
    %1360 = vmatpush1.msra.mxu0 0.0
    %1361 = vmatprep.subr.mxu0 0.0
    %1362 = vmatpush1.msra.mxu0 0.0
    %1363 = vmatprep.subr.mxu0 0.0
    %1364 = vmatpush1.msra.mxu0 0.0
    %1365 = vmatprep.subr.mxu0 0.0
    %1366 = vmatpush1.msra.mxu0 0.0
    %1367 = vmatprep.subr.mxu0 0.0
    %1368 = vmatpush1.msra.mxu0 0.0
    %1369 = vmatprep.subr.mxu0 0.0
    %1370 = vmatpush1.msra.mxu0 0.0
    %1371 = vmatprep.subr.mxu0 0.0
    %1372 = vmatpush1.msra.mxu0 0.0
    %1373 = vmatprep.subr.mxu0 0.0
    %1374 = vmatpush1.msra.mxu0 0.0
    %1375 = vmatprep.subr.mxu0 0.0
    %1376 = vmatpush1.msra.mxu0 0.0
    %1377 = vmatprep.subr.mxu0 0.0
    %1378 = vmatpush1.msra.mxu0 0.0
    %1379 = vmatprep.subr.mxu0 0.0
    %1380 = vmatpush1.msra.mxu0 0.0
    %1381 = vmatprep.subr.mxu0 0.0
    %1382 = vmatpush1.msra.mxu0 0.0
    %1383 = vmatprep.subr.mxu0 0.0
    %1384 = vmatpush1.msra.mxu0 0.0
    %1385 = vmatprep.subr.mxu0 0.0
    %1386 = vmatpush1.msra.mxu0 0.0
    %1387 = vmatprep.mubr.f32.mxu0 0.0
    %1388 = vmatmul.mubr.f32.gmra.mrb[0].mxu0 %v1321
    %v1389 = vpop.f32.mrb[0].mxu0
    %v1390 = vadd.f32 %v1245, %v1389
    %v1391 = vpop.f32.mrb[0].mxu0
    %v1392 = vadd.f32 %v1247, %v1391
    %1393 = vdwg.mxu0
    %1394 = vmatprep.subr.mxu0 %v101
    %1395 = vmatpush1.msra.mxu0 %v100
    %1396 = vmatprep.subr.mxu0 %v105
    %1397 = vmatpush1.msra.mxu0 %v104
    %1398 = vmatprep.subr.mxu0 %v109
    %1399 = vmatpush1.msra.mxu0 %v108
    %1400 = vmatprep.subr.mxu0 %v113
    %1401 = vmatpush1.msra.mxu0 %v112
    %1402 = vmatprep.subr.mxu0 %v117
    %1403 = vmatpush1.msra.mxu0 %v116
    %1404 = vmatprep.subr.mxu0 %v121
    %1405 = vmatpush1.msra.mxu0 %v120
    %1406 = vmatprep.subr.mxu0 %v349
    %1407 = vmatpush1.msra.mxu0 %v346
    %1408 = vmatprep.subr.mxu0 0.0
    %1409 = vmatpush1.msra.mxu0 0.0
    %1410 = vmatprep.subr.mxu0 0.0
    %1411 = vmatpush1.msra.mxu0 0.0
    %1412 = vmatprep.subr.mxu0 0.0
    %1413 = vmatpush1.msra.mxu0 0.0
    %1414 = vmatprep.subr.mxu0 0.0
    %1415 = vmatpush1.msra.mxu0 0.0
    %1416 = vmatprep.subr.mxu0 0.0
    %1417 = vmatpush1.msra.mxu0 0.0
    %1418 = vmatprep.subr.mxu0 0.0
    %1419 = vmatpush1.msra.mxu0 0.0
    %1420 = vmatprep.subr.mxu0 0.0
    %1421 = vmatpush1.msra.mxu0 0.0
    %1422 = vmatprep.subr.mxu0 0.0
    %1423 = vmatpush1.msra.mxu0 0.0
    %1424 = vmatprep.subr.mxu0 0.0
    %1425 = vmatpush1.msra.mxu0 0.0
    %1426 = vmatprep.subr.mxu0 0.0
    %1427 = vmatpush1.msra.mxu0 0.0
    %1428 = vmatprep.subr.mxu0 0.0
    %1429 = vmatpush1.msra.mxu0 0.0
    %1430 = vmatprep.subr.mxu0 0.0
    %1431 = vmatpush1.msra.mxu0 0.0
    %1432 = vmatprep.subr.mxu0 0.0
    %1433 = vmatpush1.msra.mxu0 0.0
    %1434 = vmatprep.subr.mxu0 0.0
    %1435 = vmatpush1.msra.mxu0 0.0
    %1436 = vmatprep.subr.mxu0 0.0
    %1437 = vmatpush1.msra.mxu0 0.0
    %1438 = vmatprep.subr.mxu0 0.0
    %1439 = vmatpush1.msra.mxu0 0.0
    %1440 = vmatprep.subr.mxu0 0.0
    %1441 = vmatpush1.msra.mxu0 0.0
    %1442 = vmatprep.subr.mxu0 0.0
    %1443 = vmatpush1.msra.mxu0 0.0
    %1444 = vmatprep.subr.mxu0 0.0
    %1445 = vmatpush1.msra.mxu0 0.0
    %1446 = vmatprep.subr.mxu0 0.0
    %1447 = vmatpush1.msra.mxu0 0.0
    %1448 = vmatprep.subr.mxu0 0.0
    %1449 = vmatpush1.msra.mxu0 0.0
    %1450 = vmatprep.subr.mxu0 0.0
    %1451 = vmatpush1.msra.mxu0 0.0
    %1452 = vmatprep.subr.mxu0 0.0
    %1453 = vmatpush1.msra.mxu0 0.0
    %1454 = vmatprep.subr.mxu0 0.0
    %1455 = vmatpush1.msra.mxu0 0.0
    %1456 = vmatprep.subr.mxu0 0.0
    %1457 = vmatpush1.msra.mxu0 0.0
    %1458 = vmatprep.mubr.f32.mxu0 0.0
    %1459 = vmatmul.mubr.f32.gmra.mrb[0].mxu0 %v1321
    %v1460 = vpop.f32.mrb[0].mxu0
    %v1461 = vadd.f32 %v1316, %v1460
    %v1462 = vpop.f32.mrb[0].mxu0
    %v1463 = vadd.f32 %v1318, %v1462
    %1464 = vdwg.mxu0
    %v1465 = vadd.f32 %v1390, %v497
    %v1466 = vadd.f32 %v1392, %v501
    %v1467 = vadd.f32 %v1461, %v505
    %v1468 = vadd.f32 %v1463, %v509
    %v1469 = vxor.u32 %v1465, 2147483648
    %v1470 = vmul.f32 %v1469, 1.442695
    %v1471 = vpow.pop %v1470
    %v1472 = vadd.f32 %v1471, 1.0
    %v1473 = vrcp.pop %v1472
    %v1474 = vmul.f32 1.0, %v1473
    %v1475 = vxor.u32 %v1466, 2147483648
    %v1476 = vmul.f32 %v1475, 1.442695
    %v1477 = vpow.pop %v1476
    %v1478 = vadd.f32 %v1477, 1.0
    %v1479 = vrcp.pop %v1478
    %v1480 = vmul.f32 1.0, %v1479
    %v1481 = vtanh.pop %v1467
    %v1482 = vxor.u32 %v1468, 2147483648
    %v1483 = vmul.f32 %v1482, 1.442695
    %v1484 = vpow.pop %v1483
    %v1485 = vadd.f32 %v1484, 1.0
    %v1486 = vrcp.pop %v1485
    %v1487 = vmul.f32 1.0, %v1486
    %v1488 = vmul.f32 %v1480, %v1173
    %v1489 = vmul.f32 %v1474, %v1481
    %v1490 = vadd.f32 %v1488, %v1489
    %v1491 = vtanh.pop %v1490
    %v1492 = vmul.f32 %v1487, %v1491
    %s1493 = scalar_lea.vmem [#allocation2], 32
    %v1494 = vld [vmem:[%s1493] sm:$0xff]
    %1495 = vmatprep.subr.mxu0 %v127
    %1496 = vmatpush1.msra.mxu0 %v126
    %1497 = vmatprep.subr.mxu0 %v131
    %1498 = vmatpush1.msra.mxu0 %v130
    %1499 = vmatprep.subr.mxu0 %v135
    %1500 = vmatpush1.msra.mxu0 %v134
    %1501 = vmatprep.subr.mxu0 %v139
    %1502 = vmatpush1.msra.mxu0 %v138
    %1503 = vmatprep.subr.mxu0 %v143
    %1504 = vmatpush1.msra.mxu0 %v142
    %1505 = vmatprep.subr.mxu0 %v147
    %1506 = vmatpush1.msra.mxu0 %v146
    %1507 = vmatprep.subr.mxu0 %v151
    %1508 = vmatpush1.msra.mxu0 %v150
    %1509 = vmatprep.subr.mxu0 %v155
    %1510 = vmatpush1.msra.mxu0 %v154
    %1511 = vmatprep.subr.mxu0 %v159
    %1512 = vmatpush1.msra.mxu0 %v158
    %1513 = vmatprep.subr.mxu0 %v163
    %1514 = vmatpush1.msra.mxu0 %v162
    %1515 = vmatprep.subr.mxu0 %v167
    %1516 = vmatpush1.msra.mxu0 %v166
    %1517 = vmatprep.subr.mxu0 %v171
    %1518 = vmatpush1.msra.mxu0 %v170
    %1519 = vmatprep.subr.mxu0 %v175
    %1520 = vmatpush1.msra.mxu0 %v174
    %1521 = vmatprep.subr.mxu0 %v179
    %1522 = vmatpush1.msra.mxu0 %v178
    %1523 = vmatprep.subr.mxu0 %v183
    %1524 = vmatpush1.msra.mxu0 %v182
    %1525 = vmatprep.subr.mxu0 %v187
    %1526 = vmatpush1.msra.mxu0 %v186
    %1527 = vmatprep.subr.mxu0 0.0
    %1528 = vmatpush1.msra.mxu0 0.0
    %1529 = vmatprep.subr.mxu0 0.0
    %1530 = vmatpush1.msra.mxu0 0.0
    %1531 = vmatprep.subr.mxu0 0.0
    %1532 = vmatpush1.msra.mxu0 0.0
    %1533 = vmatprep.subr.mxu0 0.0
    %1534 = vmatpush1.msra.mxu0 0.0
    %1535 = vmatprep.subr.mxu0 0.0
    %1536 = vmatpush1.msra.mxu0 0.0
    %1537 = vmatprep.subr.mxu0 0.0
    %1538 = vmatpush1.msra.mxu0 0.0
    %1539 = vmatprep.subr.mxu0 0.0
    %1540 = vmatpush1.msra.mxu0 0.0
    %1541 = vmatprep.subr.mxu0 0.0
    %1542 = vmatpush1.msra.mxu0 0.0
    %1543 = vmatprep.subr.mxu0 0.0
    %1544 = vmatpush1.msra.mxu0 0.0
    %1545 = vmatprep.subr.mxu0 0.0
    %1546 = vmatpush1.msra.mxu0 0.0
    %1547 = vmatprep.subr.mxu0 0.0
    %1548 = vmatpush1.msra.mxu0 0.0
    %1549 = vmatprep.subr.mxu0 0.0
    %1550 = vmatpush1.msra.mxu0 0.0
    %1551 = vmatprep.subr.mxu0 0.0
    %1552 = vmatpush1.msra.mxu0 0.0
    %1553 = vmatprep.subr.mxu0 0.0
    %1554 = vmatpush1.msra.mxu0 0.0
    %1555 = vmatprep.subr.mxu0 0.0
    %1556 = vmatpush1.msra.mxu0 0.0
    %1557 = vmatprep.subr.mxu0 0.0
    %1558 = vmatpush1.msra.mxu0 0.0
    %1559 = vmatprep.mubr.f32.mxu0 0.0
    %1560 = vmatmul.mubr.f32.gmra.mrb[0].mxu0 %v1492
    %v1561 = vpop.f32.mrb[0].mxu0
    %v1562 = vadd.f32 0.0, %v1561
    %v1563 = vpop.f32.mrb[0].mxu0
    %v1564 = vadd.f32 0.0, %v1563
    %1565 = vdwg.mxu0
    %1566 = vmatprep.subr.mxu0 %v129
    %1567 = vmatpush1.msra.mxu0 %v128
    %1568 = vmatprep.subr.mxu0 %v133
    %1569 = vmatpush1.msra.mxu0 %v132
    %1570 = vmatprep.subr.mxu0 %v137
    %1571 = vmatpush1.msra.mxu0 %v136
    %1572 = vmatprep.subr.mxu0 %v141
    %1573 = vmatpush1.msra.mxu0 %v140
    %1574 = vmatprep.subr.mxu0 %v145
    %1575 = vmatpush1.msra.mxu0 %v144
    %1576 = vmatprep.subr.mxu0 %v149
    %1577 = vmatpush1.msra.mxu0 %v148
    %1578 = vmatprep.subr.mxu0 %v153
    %1579 = vmatpush1.msra.mxu0 %v152
    %1580 = vmatprep.subr.mxu0 %v157
    %1581 = vmatpush1.msra.mxu0 %v156
    %1582 = vmatprep.subr.mxu0 %v161
    %1583 = vmatpush1.msra.mxu0 %v160
    %1584 = vmatprep.subr.mxu0 %v165
    %1585 = vmatpush1.msra.mxu0 %v164
    %1586 = vmatprep.subr.mxu0 %v169
    %1587 = vmatpush1.msra.mxu0 %v168
    %1588 = vmatprep.subr.mxu0 %v173
    %1589 = vmatpush1.msra.mxu0 %v172
    %1590 = vmatprep.subr.mxu0 %v177
    %1591 = vmatpush1.msra.mxu0 %v176
    %1592 = vmatprep.subr.mxu0 %v181
    %1593 = vmatpush1.msra.mxu0 %v180
    %1594 = vmatprep.subr.mxu0 %v185
    %1595 = vmatpush1.msra.mxu0 %v184
    %1596 = vmatprep.subr.mxu0 %v189
    %1597 = vmatpush1.msra.mxu0 %v188
    %1598 = vmatprep.subr.mxu0 0.0
    %1599 = vmatpush1.msra.mxu0 0.0
    %1600 = vmatprep.subr.mxu0 0.0
    %1601 = vmatpush1.msra.mxu0 0.0
    %1602 = vmatprep.subr.mxu0 0.0
    %1603 = vmatpush1.msra.mxu0 0.0
    %1604 = vmatprep.subr.mxu0 0.0
    %1605 = vmatpush1.msra.mxu0 0.0
    %1606 = vmatprep.subr.mxu0 0.0
    %1607 = vmatpush1.msra.mxu0 0.0
    %1608 = vmatprep.subr.mxu0 0.0
    %1609 = vmatpush1.msra.mxu0 0.0
    %1610 = vmatprep.subr.mxu0 0.0
    %1611 = vmatpush1.msra.mxu0 0.0
    %1612 = vmatprep.subr.mxu0 0.0
    %1613 = vmatpush1.msra.mxu0 0.0
    %1614 = vmatprep.subr.mxu0 0.0
    %1615 = vmatpush1.msra.mxu0 0.0
    %1616 = vmatprep.subr.mxu0 0.0
    %1617 = vmatpush1.msra.mxu0 0.0
    %1618 = vmatprep.subr.mxu0 0.0
    %1619 = vmatpush1.msra.mxu0 0.0
    %1620 = vmatprep.subr.mxu0 0.0
    %1621 = vmatpush1.msra.mxu0 0.0
    %1622 = vmatprep.subr.mxu0 0.0
    %1623 = vmatpush1.msra.mxu0 0.0
    %1624 = vmatprep.subr.mxu0 0.0
    %1625 = vmatpush1.msra.mxu0 0.0
    %1626 = vmatprep.subr.mxu0 0.0
    %1627 = vmatpush1.msra.mxu0 0.0
    %1628 = vmatprep.subr.mxu0 0.0
    %1629 = vmatpush1.msra.mxu0 0.0
    %1630 = vmatprep.mubr.f32.mxu0 0.0
    %1631 = vmatmul.mubr.f32.gmra.mrb[0].mxu0 %v1492
    %v1632 = vpop.f32.mrb[0].mxu0
    %v1633 = vadd.f32 0.0, %v1632
    %v1634 = vpop.f32.mrb[0].mxu0
    %v1635 = vadd.f32 0.0, %v1634
    %1636 = vdwg.mxu0
    %v1638 = vsel %vm334, %v1494, 0
    %1640 = vmatprep.subr.mxu0 %v99
    %1641 = vmatpush1.msra.mxu0 %v98
    %1642 = vmatprep.subr.mxu0 %v103
    %1643 = vmatpush1.msra.mxu0 %v102
    %1644 = vmatprep.subr.mxu0 %v107
    %1645 = vmatpush1.msra.mxu0 %v106
    %1646 = vmatprep.subr.mxu0 %v111
    %1647 = vmatpush1.msra.mxu0 %v110
    %1648 = vmatprep.subr.mxu0 %v115
    %1649 = vmatpush1.msra.mxu0 %v114
    %1650 = vmatprep.subr.mxu0 %v119
    %1651 = vmatpush1.msra.mxu0 %v118
    %1652 = vmatprep.subr.mxu0 %v343
    %1653 = vmatpush1.msra.mxu0 %v340
    %1654 = vmatprep.subr.mxu0 0.0
    %1655 = vmatpush1.msra.mxu0 0.0
    %1656 = vmatprep.subr.mxu0 0.0
    %1657 = vmatpush1.msra.mxu0 0.0
    %1658 = vmatprep.subr.mxu0 0.0
    %1659 = vmatpush1.msra.mxu0 0.0
    %1660 = vmatprep.subr.mxu0 0.0
    %1661 = vmatpush1.msra.mxu0 0.0
    %1662 = vmatprep.subr.mxu0 0.0
    %1663 = vmatpush1.msra.mxu0 0.0
    %1664 = vmatprep.subr.mxu0 0.0
    %1665 = vmatpush1.msra.mxu0 0.0
    %1666 = vmatprep.subr.mxu0 0.0
    %1667 = vmatpush1.msra.mxu0 0.0
    %1668 = vmatprep.subr.mxu0 0.0
    %1669 = vmatpush1.msra.mxu0 0.0
    %1670 = vmatprep.subr.mxu0 0.0
    %1671 = vmatpush1.msra.mxu0 0.0
    %1672 = vmatprep.subr.mxu0 0.0
    %1673 = vmatpush1.msra.mxu0 0.0
    %1674 = vmatprep.subr.mxu0 0.0
    %1675 = vmatpush1.msra.mxu0 0.0
    %1676 = vmatprep.subr.mxu0 0.0
    %1677 = vmatpush1.msra.mxu0 0.0
    %1678 = vmatprep.subr.mxu0 0.0
    %1679 = vmatpush1.msra.mxu0 0.0
    %1680 = vmatprep.subr.mxu0 0.0
    %1681 = vmatpush1.msra.mxu0 0.0
    %1682 = vmatprep.subr.mxu0 0.0
    %1683 = vmatpush1.msra.mxu0 0.0
    %1684 = vmatprep.subr.mxu0 0.0
    %1685 = vmatpush1.msra.mxu0 0.0
    %1686 = vmatprep.subr.mxu0 0.0
    %1687 = vmatpush1.msra.mxu0 0.0
    %1688 = vmatprep.subr.mxu0 0.0
    %1689 = vmatpush1.msra.mxu0 0.0
    %1690 = vmatprep.subr.mxu0 0.0
    %1691 = vmatpush1.msra.mxu0 0.0
    %1692 = vmatprep.subr.mxu0 0.0
    %1693 = vmatpush1.msra.mxu0 0.0
    %1694 = vmatprep.subr.mxu0 0.0
    %1695 = vmatpush1.msra.mxu0 0.0
    %1696 = vmatprep.subr.mxu0 0.0
    %1697 = vmatpush1.msra.mxu0 0.0
    %1698 = vmatprep.subr.mxu0 0.0
    %1699 = vmatpush1.msra.mxu0 0.0
    %1700 = vmatprep.subr.mxu0 0.0
    %1701 = vmatpush1.msra.mxu0 0.0
    %1702 = vmatprep.subr.mxu0 0.0
    %1703 = vmatpush1.msra.mxu0 0.0
    %1704 = vmatprep.mubr.f32.mxu0 0.0
    %1705 = vmatmul.mubr.f32.gmra.mrb[0].mxu0 %v1638
    %v1706 = vpop.f32.mrb[0].mxu0
    %v1707 = vadd.f32 %v1562, %v1706
    %v1708 = vpop.f32.mrb[0].mxu0
    %v1709 = vadd.f32 %v1564, %v1708
    %1710 = vdwg.mxu0
    %1711 = vmatprep.subr.mxu0 %v101
    %1712 = vmatpush1.msra.mxu0 %v100
    %1713 = vmatprep.subr.mxu0 %v105
    %1714 = vmatpush1.msra.mxu0 %v104
    %1715 = vmatprep.subr.mxu0 %v109
    %1716 = vmatpush1.msra.mxu0 %v108
    %1717 = vmatprep.subr.mxu0 %v113
    %1718 = vmatpush1.msra.mxu0 %v112
    %1719 = vmatprep.subr.mxu0 %v117
    %1720 = vmatpush1.msra.mxu0 %v116
    %1721 = vmatprep.subr.mxu0 %v121
    %1722 = vmatpush1.msra.mxu0 %v120
    %1723 = vmatprep.subr.mxu0 %v349
    %1724 = vmatpush1.msra.mxu0 %v346
    %1725 = vmatprep.subr.mxu0 0.0
    %1726 = vmatpush1.msra.mxu0 0.0
    %1727 = vmatprep.subr.mxu0 0.0
    %1728 = vmatpush1.msra.mxu0 0.0
    %1729 = vmatprep.subr.mxu0 0.0
    %1730 = vmatpush1.msra.mxu0 0.0
    %1731 = vmatprep.subr.mxu0 0.0
    %1732 = vmatpush1.msra.mxu0 0.0
    %1733 = vmatprep.subr.mxu0 0.0
    %1734 = vmatpush1.msra.mxu0 0.0
    %1735 = vmatprep.subr.mxu0 0.0
    %1736 = vmatpush1.msra.mxu0 0.0
    %1737 = vmatprep.subr.mxu0 0.0
    %1738 = vmatpush1.msra.mxu0 0.0
    %1739 = vmatprep.subr.mxu0 0.0
    %1740 = vmatpush1.msra.mxu0 0.0
    %1741 = vmatprep.subr.mxu0 0.0
    %1742 = vmatpush1.msra.mxu0 0.0
    %1743 = vmatprep.subr.mxu0 0.0
    %1744 = vmatpush1.msra.mxu0 0.0
    %1745 = vmatprep.subr.mxu0 0.0
    %1746 = vmatpush1.msra.mxu0 0.0
    %1747 = vmatprep.subr.mxu0 0.0
    %1748 = vmatpush1.msra.mxu0 0.0
    %1749 = vmatprep.subr.mxu0 0.0
    %1750 = vmatpush1.msra.mxu0 0.0
    %1751 = vmatprep.subr.mxu0 0.0
    %1752 = vmatpush1.msra.mxu0 0.0
    %1753 = vmatprep.subr.mxu0 0.0
    %1754 = vmatpush1.msra.mxu0 0.0
    %1755 = vmatprep.subr.mxu0 0.0
    %1756 = vmatpush1.msra.mxu0 0.0
    %1757 = vmatprep.subr.mxu0 0.0
    %1758 = vmatpush1.msra.mxu0 0.0
    %1759 = vmatprep.subr.mxu0 0.0
    %1760 = vmatpush1.msra.mxu0 0.0
    %1761 = vmatprep.subr.mxu0 0.0
    %1762 = vmatpush1.msra.mxu0 0.0
    %1763 = vmatprep.subr.mxu0 0.0
    %1764 = vmatpush1.msra.mxu0 0.0
    %1765 = vmatprep.subr.mxu0 0.0
    %1766 = vmatpush1.msra.mxu0 0.0
    %1767 = vmatprep.subr.mxu0 0.0
    %1768 = vmatpush1.msra.mxu0 0.0
    %1769 = vmatprep.subr.mxu0 0.0
    %1770 = vmatpush1.msra.mxu0 0.0
    %1771 = vmatprep.subr.mxu0 0.0
    %1772 = vmatpush1.msra.mxu0 0.0
    %1773 = vmatprep.subr.mxu0 0.0
    %1774 = vmatpush1.msra.mxu0 0.0
    %1775 = vmatprep.mubr.f32.mxu0 0.0
    %1776 = vmatmul.mubr.f32.gmra.mrb[0].mxu0 %v1638
    %v1777 = vpop.f32.mrb[0].mxu0
    %v1778 = vadd.f32 %v1633, %v1777
    %v1779 = vpop.f32.mrb[0].mxu0
    %v1780 = vadd.f32 %v1635, %v1779
    %1781 = vdwg.mxu0
    %v1782 = vadd.f32 %v1707, %v497
    %v1783 = vadd.f32 %v1709, %v501
    %v1784 = vadd.f32 %v1778, %v505
    %v1785 = vadd.f32 %v1780, %v509
    %v1786 = vxor.u32 %v1782, 2147483648
    %v1787 = vmul.f32 %v1786, 1.442695
    %v1788 = vpow.pop %v1787
    %v1789 = vadd.f32 %v1788, 1.0
    %v1790 = vrcp.pop %v1789
    %v1791 = vmul.f32 1.0, %v1790
    %v1792 = vxor.u32 %v1783, 2147483648
    %v1793 = vmul.f32 %v1792, 1.442695
    %v1794 = vpow.pop %v1793
    %v1795 = vadd.f32 %v1794, 1.0
    %v1796 = vrcp.pop %v1795
    %v1797 = vmul.f32 1.0, %v1796
    %v1798 = vtanh.pop %v1784
    %v1799 = vxor.u32 %v1785, 2147483648
    %v1800 = vmul.f32 %v1799, 1.442695
    %v1801 = vpow.pop %v1800
    %v1802 = vadd.f32 %v1801, 1.0
    %v1803 = vrcp.pop %v1802
    %v1804 = vmul.f32 1.0, %v1803
    %v1805 = vmul.f32 %v1797, %v1490
    %v1806 = vmul.f32 %v1791, %v1798
    %v1807 = vadd.f32 %v1805, %v1806
    %v1808 = vtanh.pop %v1807
    %v1809 = vmul.f32 %v1804, %v1808
    %s1810 = scalar_lea.vmem [#allocation2], 40
    %v1811 = vld [vmem:[%s1810] sm:$0xff]
    %1812 = vmatprep.subr.mxu0 %v127
    %1813 = vmatpush1.msra.mxu0 %v126
    %1814 = vmatprep.subr.mxu0 %v131
    %1815 = vmatpush1.msra.mxu0 %v130
    %1816 = vmatprep.subr.mxu0 %v135
    %1817 = vmatpush1.msra.mxu0 %v134
    %1818 = vmatprep.subr.mxu0 %v139
    %1819 = vmatpush1.msra.mxu0 %v138
    %1820 = vmatprep.subr.mxu0 %v143
    %1821 = vmatpush1.msra.mxu0 %v142
    %1822 = vmatprep.subr.mxu0 %v147
    %1823 = vmatpush1.msra.mxu0 %v146
    %1824 = vmatprep.subr.mxu0 %v151
    %1825 = vmatpush1.msra.mxu0 %v150
    %1826 = vmatprep.subr.mxu0 %v155
    %1827 = vmatpush1.msra.mxu0 %v154
    %1828 = vmatprep.subr.mxu0 %v159
    %1829 = vmatpush1.msra.mxu0 %v158
    %1830 = vmatprep.subr.mxu0 %v163
    %1831 = vmatpush1.msra.mxu0 %v162
    %1832 = vmatprep.subr.mxu0 %v167
    %1833 = vmatpush1.msra.mxu0 %v166
    %1834 = vmatprep.subr.mxu0 %v171
    %1835 = vmatpush1.msra.mxu0 %v170
    %1836 = vmatprep.subr.mxu0 %v175
    %1837 = vmatpush1.msra.mxu0 %v174
    %1838 = vmatprep.subr.mxu0 %v179
    %1839 = vmatpush1.msra.mxu0 %v178
    %1840 = vmatprep.subr.mxu0 %v183
    %1841 = vmatpush1.msra.mxu0 %v182
    %1842 = vmatprep.subr.mxu0 %v187
    %1843 = vmatpush1.msra.mxu0 %v186
    %1844 = vmatprep.subr.mxu0 0.0
    %1845 = vmatpush1.msra.mxu0 0.0
    %1846 = vmatprep.subr.mxu0 0.0
    %1847 = vmatpush1.msra.mxu0 0.0
    %1848 = vmatprep.subr.mxu0 0.0
    %1849 = vmatpush1.msra.mxu0 0.0
    %1850 = vmatprep.subr.mxu0 0.0
    %1851 = vmatpush1.msra.mxu0 0.0
    %1852 = vmatprep.subr.mxu0 0.0
    %1853 = vmatpush1.msra.mxu0 0.0
    %1854 = vmatprep.subr.mxu0 0.0
    %1855 = vmatpush1.msra.mxu0 0.0
    %1856 = vmatprep.subr.mxu0 0.0
    %1857 = vmatpush1.msra.mxu0 0.0
    %1858 = vmatprep.subr.mxu0 0.0
    %1859 = vmatpush1.msra.mxu0 0.0
    %1860 = vmatprep.subr.mxu0 0.0
    %1861 = vmatpush1.msra.mxu0 0.0
    %1862 = vmatprep.subr.mxu0 0.0
    %1863 = vmatpush1.msra.mxu0 0.0
    %1864 = vmatprep.subr.mxu0 0.0
    %1865 = vmatpush1.msra.mxu0 0.0
    %1866 = vmatprep.subr.mxu0 0.0
    %1867 = vmatpush1.msra.mxu0 0.0
    %1868 = vmatprep.subr.mxu0 0.0
    %1869 = vmatpush1.msra.mxu0 0.0
    %1870 = vmatprep.subr.mxu0 0.0
    %1871 = vmatpush1.msra.mxu0 0.0
    %1872 = vmatprep.subr.mxu0 0.0
    %1873 = vmatpush1.msra.mxu0 0.0
    %1874 = vmatprep.subr.mxu0 0.0
    %1875 = vmatpush1.msra.mxu0 0.0
    %1876 = vmatprep.mubr.f32.mxu0 0.0
    %1877 = vmatmul.mubr.f32.gmra.mrb[0].mxu0 %v1809
    %v1878 = vpop.f32.mrb[0].mxu0
    %v1879 = vadd.f32 0.0, %v1878
    %v1880 = vpop.f32.mrb[0].mxu0
    %v1881 = vadd.f32 0.0, %v1880
    %1882 = vdwg.mxu0
    %1883 = vmatprep.subr.mxu0 %v129
    %1884 = vmatpush1.msra.mxu0 %v128
    %1885 = vmatprep.subr.mxu0 %v133
    %1886 = vmatpush1.msra.mxu0 %v132
    %1887 = vmatprep.subr.mxu0 %v137
    %1888 = vmatpush1.msra.mxu0 %v136
    %1889 = vmatprep.subr.mxu0 %v141
    %1890 = vmatpush1.msra.mxu0 %v140
    %1891 = vmatprep.subr.mxu0 %v145
    %1892 = vmatpush1.msra.mxu0 %v144
    %1893 = vmatprep.subr.mxu0 %v149
    %1894 = vmatpush1.msra.mxu0 %v148
    %1895 = vmatprep.subr.mxu0 %v153
    %1896 = vmatpush1.msra.mxu0 %v152
    %1897 = vmatprep.subr.mxu0 %v157
    %1898 = vmatpush1.msra.mxu0 %v156
    %1899 = vmatprep.subr.mxu0 %v161
    %1900 = vmatpush1.msra.mxu0 %v160
    %1901 = vmatprep.subr.mxu0 %v165
    %1902 = vmatpush1.msra.mxu0 %v164
    %1903 = vmatprep.subr.mxu0 %v169
    %1904 = vmatpush1.msra.mxu0 %v168
    %1905 = vmatprep.subr.mxu0 %v173
    %1906 = vmatpush1.msra.mxu0 %v172
    %1907 = vmatprep.subr.mxu0 %v177
    %1908 = vmatpush1.msra.mxu0 %v176
    %1909 = vmatprep.subr.mxu0 %v181
    %1910 = vmatpush1.msra.mxu0 %v180
    %1911 = vmatprep.subr.mxu0 %v185
    %1912 = vmatpush1.msra.mxu0 %v184
    %1913 = vmatprep.subr.mxu0 %v189
    %1914 = vmatpush1.msra.mxu0 %v188
    %1915 = vmatprep.subr.mxu0 0.0
    %1916 = vmatpush1.msra.mxu0 0.0
    %1917 = vmatprep.subr.mxu0 0.0
    %1918 = vmatpush1.msra.mxu0 0.0
    %1919 = vmatprep.subr.mxu0 0.0
    %1920 = vmatpush1.msra.mxu0 0.0
    %1921 = vmatprep.subr.mxu0 0.0
    %1922 = vmatpush1.msra.mxu0 0.0
    %1923 = vmatprep.subr.mxu0 0.0
    %1924 = vmatpush1.msra.mxu0 0.0
    %1925 = vmatprep.subr.mxu0 0.0
    %1926 = vmatpush1.msra.mxu0 0.0
    %1927 = vmatprep.subr.mxu0 0.0
    %1928 = vmatpush1.msra.mxu0 0.0
    %1929 = vmatprep.subr.mxu0 0.0
    %1930 = vmatpush1.msra.mxu0 0.0
    %1931 = vmatprep.subr.mxu0 0.0
    %1932 = vmatpush1.msra.mxu0 0.0
    %1933 = vmatprep.subr.mxu0 0.0
    %1934 = vmatpush1.msra.mxu0 0.0
    %1935 = vmatprep.subr.mxu0 0.0
    %1936 = vmatpush1.msra.mxu0 0.0
    %1937 = vmatprep.subr.mxu0 0.0
    %1938 = vmatpush1.msra.mxu0 0.0
    %1939 = vmatprep.subr.mxu0 0.0
    %1940 = vmatpush1.msra.mxu0 0.0
    %1941 = vmatprep.subr.mxu0 0.0
    %1942 = vmatpush1.msra.mxu0 0.0
    %1943 = vmatprep.subr.mxu0 0.0
    %1944 = vmatpush1.msra.mxu0 0.0
    %1945 = vmatprep.subr.mxu0 0.0
    %1946 = vmatpush1.msra.mxu0 0.0
    %1947 = vmatprep.mubr.f32.mxu0 0.0
    %1948 = vmatmul.mubr.f32.gmra.mrb[0].mxu0 %v1809
    %v1949 = vpop.f32.mrb[0].mxu0
    %v1950 = vadd.f32 0.0, %v1949
    %v1951 = vpop.f32.mrb[0].mxu0
    %v1952 = vadd.f32 0.0, %v1951
    %1953 = vdwg.mxu0
    %v1955 = vsel %vm334, %v1811, 0
    %1957 = vmatprep.subr.mxu0 %v99
    %1958 = vmatpush1.msra.mxu0 %v98
    %1959 = vmatprep.subr.mxu0 %v103
    %1960 = vmatpush1.msra.mxu0 %v102
    %1961 = vmatprep.subr.mxu0 %v107
    %1962 = vmatpush1.msra.mxu0 %v106
    %1963 = vmatprep.subr.mxu0 %v111
    %1964 = vmatpush1.msra.mxu0 %v110
    %1965 = vmatprep.subr.mxu0 %v115
    %1966 = vmatpush1.msra.mxu0 %v114
    %1967 = vmatprep.subr.mxu0 %v119
    %1968 = vmatpush1.msra.mxu0 %v118
    %1969 = vmatprep.subr.mxu0 %v343
    %1970 = vmatpush1.msra.mxu0 %v340
    %1971 = vmatprep.subr.mxu0 0.0
    %1972 = vmatpush1.msra.mxu0 0.0
    %1973 = vmatprep.subr.mxu0 0.0
    %1974 = vmatpush1.msra.mxu0 0.0
    %1975 = vmatprep.subr.mxu0 0.0
    %1976 = vmatpush1.msra.mxu0 0.0
    %1977 = vmatprep.subr.mxu0 0.0
    %1978 = vmatpush1.msra.mxu0 0.0
    %1979 = vmatprep.subr.mxu0 0.0
    %1980 = vmatpush1.msra.mxu0 0.0
    %1981 = vmatprep.subr.mxu0 0.0
    %1982 = vmatpush1.msra.mxu0 0.0
    %1983 = vmatprep.subr.mxu0 0.0
    %1984 = vmatpush1.msra.mxu0 0.0
    %1985 = vmatprep.subr.mxu0 0.0
    %1986 = vmatpush1.msra.mxu0 0.0
    %1987 = vmatprep.subr.mxu0 0.0
    %1988 = vmatpush1.msra.mxu0 0.0
    %1989 = vmatprep.subr.mxu0 0.0
    %1990 = vmatpush1.msra.mxu0 0.0
    %1991 = vmatprep.subr.mxu0 0.0
    %1992 = vmatpush1.msra.mxu0 0.0
    %1993 = vmatprep.subr.mxu0 0.0
    %1994 = vmatpush1.msra.mxu0 0.0
    %1995 = vmatprep.subr.mxu0 0.0
    %1996 = vmatpush1.msra.mxu0 0.0
    %1997 = vmatprep.subr.mxu0 0.0
    %1998 = vmatpush1.msra.mxu0 0.0
    %1999 = vmatprep.subr.mxu0 0.0
    %2000 = vmatpush1.msra.mxu0 0.0
    %2001 = vmatprep.subr.mxu0 0.0
    %2002 = vmatpush1.msra.mxu0 0.0
    %2003 = vmatprep.subr.mxu0 0.0
    %2004 = vmatpush1.msra.mxu0 0.0
    %2005 = vmatprep.subr.mxu0 0.0
    %2006 = vmatpush1.msra.mxu0 0.0
    %2007 = vmatprep.subr.mxu0 0.0
    %2008 = vmatpush1.msra.mxu0 0.0
    %2009 = vmatprep.subr.mxu0 0.0
    %2010 = vmatpush1.msra.mxu0 0.0
    %2011 = vmatprep.subr.mxu0 0.0
    %2012 = vmatpush1.msra.mxu0 0.0
    %2013 = vmatprep.subr.mxu0 0.0
    %2014 = vmatpush1.msra.mxu0 0.0
    %2015 = vmatprep.subr.mxu0 0.0
    %2016 = vmatpush1.msra.mxu0 0.0
    %2017 = vmatprep.subr.mxu0 0.0
    %2018 = vmatpush1.msra.mxu0 0.0
    %2019 = vmatprep.subr.mxu0 0.0
    %2020 = vmatpush1.msra.mxu0 0.0
    %2021 = vmatprep.mubr.f32.mxu0 0.0
    %2022 = vmatmul.mubr.f32.gmra.mrb[0].mxu0 %v1955
    %v2023 = vpop.f32.mrb[0].mxu0
    %v2024 = vadd.f32 %v1879, %v2023
    %v2025 = vpop.f32.mrb[0].mxu0
    %v2026 = vadd.f32 %v1881, %v2025
    %2027 = vdwg.mxu0
    %2028 = vmatprep.subr.mxu0 %v101
    %2029 = vmatpush1.msra.mxu0 %v100
    %2030 = vmatprep.subr.mxu0 %v105
    %2031 = vmatpush1.msra.mxu0 %v104
    %2032 = vmatprep.subr.mxu0 %v109
    %2033 = vmatpush1.msra.mxu0 %v108
    %2034 = vmatprep.subr.mxu0 %v113
    %2035 = vmatpush1.msra.mxu0 %v112
    %2036 = vmatprep.subr.mxu0 %v117
    %2037 = vmatpush1.msra.mxu0 %v116
    %2038 = vmatprep.subr.mxu0 %v121
    %2039 = vmatpush1.msra.mxu0 %v120
    %2040 = vmatprep.subr.mxu0 %v349
    %2041 = vmatpush1.msra.mxu0 %v346
    %2042 = vmatprep.subr.mxu0 0.0
    %2043 = vmatpush1.msra.mxu0 0.0
    %2044 = vmatprep.subr.mxu0 0.0
    %2045 = vmatpush1.msra.mxu0 0.0
    %2046 = vmatprep.subr.mxu0 0.0
    %2047 = vmatpush1.msra.mxu0 0.0
    %2048 = vmatprep.subr.mxu0 0.0
    %2049 = vmatpush1.msra.mxu0 0.0
    %2050 = vmatprep.subr.mxu0 0.0
    %2051 = vmatpush1.msra.mxu0 0.0
    %2052 = vmatprep.subr.mxu0 0.0
    %2053 = vmatpush1.msra.mxu0 0.0
    %2054 = vmatprep.subr.mxu0 0.0
    %2055 = vmatpush1.msra.mxu0 0.0
    %2056 = vmatprep.subr.mxu0 0.0
    %2057 = vmatpush1.msra.mxu0 0.0
    %2058 = vmatprep.subr.mxu0 0.0
    %2059 = vmatpush1.msra.mxu0 0.0
    %2060 = vmatprep.subr.mxu0 0.0
    %2061 = vmatpush1.msra.mxu0 0.0
    %2062 = vmatprep.subr.mxu0 0.0
    %2063 = vmatpush1.msra.mxu0 0.0
    %2064 = vmatprep.subr.mxu0 0.0
    %2065 = vmatpush1.msra.mxu0 0.0
    %2066 = vmatprep.subr.mxu0 0.0
    %2067 = vmatpush1.msra.mxu0 0.0
    %2068 = vmatprep.subr.mxu0 0.0
    %2069 = vmatpush1.msra.mxu0 0.0
    %2070 = vmatprep.subr.mxu0 0.0
    %2071 = vmatpush1.msra.mxu0 0.0
    %2072 = vmatprep.subr.mxu0 0.0
    %2073 = vmatpush1.msra.mxu0 0.0
    %2074 = vmatprep.subr.mxu0 0.0
    %2075 = vmatpush1.msra.mxu0 0.0
    %2076 = vmatprep.subr.mxu0 0.0
    %2077 = vmatpush1.msra.mxu0 0.0
    %2078 = vmatprep.subr.mxu0 0.0
    %2079 = vmatpush1.msra.mxu0 0.0
    %2080 = vmatprep.subr.mxu0 0.0
    %2081 = vmatpush1.msra.mxu0 0.0
    %2082 = vmatprep.subr.mxu0 0.0
    %2083 = vmatpush1.msra.mxu0 0.0
    %2084 = vmatprep.subr.mxu0 0.0
    %2085 = vmatpush1.msra.mxu0 0.0
    %2086 = vmatprep.subr.mxu0 0.0
    %2087 = vmatpush1.msra.mxu0 0.0
    %2088 = vmatprep.subr.mxu0 0.0
    %2089 = vmatpush1.msra.mxu0 0.0
    %2090 = vmatprep.subr.mxu0 0.0
    %2091 = vmatpush1.msra.mxu0 0.0
    %2092 = vmatprep.mubr.f32.mxu0 0.0
    %2093 = vmatmul.mubr.f32.gmra.mrb[0].mxu0 %v1955
    %v2094 = vpop.f32.mrb[0].mxu0
    %v2095 = vadd.f32 %v1950, %v2094
    %v2096 = vpop.f32.mrb[0].mxu0
    %v2097 = vadd.f32 %v1952, %v2096
    %2098 = vdwg.mxu0
    %v2099 = vadd.f32 %v2024, %v497
    %v2100 = vadd.f32 %v2026, %v501
    %v2101 = vadd.f32 %v2095, %v505
    %v2102 = vadd.f32 %v2097, %v509
    %v2103 = vxor.u32 %v2099, 2147483648
    %v2104 = vmul.f32 %v2103, 1.442695
    %v2105 = vpow.pop %v2104
    %v2106 = vadd.f32 %v2105, 1.0
    %v2107 = vrcp.pop %v2106
    %v2108 = vmul.f32 1.0, %v2107
    %v2109 = vxor.u32 %v2100, 2147483648
    %v2110 = vmul.f32 %v2109, 1.442695
    %v2111 = vpow.pop %v2110
    %v2112 = vadd.f32 %v2111, 1.0
    %v2113 = vrcp.pop %v2112
    %v2114 = vmul.f32 1.0, %v2113
    %v2115 = vtanh.pop %v2101
    %v2116 = vxor.u32 %v2102, 2147483648
    %v2117 = vmul.f32 %v2116, 1.442695
    %v2118 = vpow.pop %v2117
    %v2119 = vadd.f32 %v2118, 1.0
    %v2120 = vrcp.pop %v2119
    %v2121 = vmul.f32 1.0, %v2120
    %v2122 = vmul.f32 %v2114, %v1807
    %v2123 = vmul.f32 %v2108, %v2115
    %v2124 = vadd.f32 %v2122, %v2123
    %v2125 = vtanh.pop %v2124
    %v2126 = vmul.f32 %v2121, %v2125
    %s2127 = scalar_lea.vmem [#allocation2], 48
    %v2128 = vld [vmem:[%s2127] sm:$0xff]
    %2129 = vmatprep.subr.mxu0 %v127
    %2130 = vmatpush1.msra.mxu0 %v126
    %2131 = vmatprep.subr.mxu0 %v131
    %2132 = vmatpush1.msra.mxu0 %v130
    %2133 = vmatprep.subr.mxu0 %v135
    %2134 = vmatpush1.msra.mxu0 %v134
    %2135 = vmatprep.subr.mxu0 %v139
    %2136 = vmatpush1.msra.mxu0 %v138
    %2137 = vmatprep.subr.mxu0 %v143
    %2138 = vmatpush1.msra.mxu0 %v142
    %2139 = vmatprep.subr.mxu0 %v147
    %2140 = vmatpush1.msra.mxu0 %v146
    %2141 = vmatprep.subr.mxu0 %v151
    %2142 = vmatpush1.msra.mxu0 %v150
    %2143 = vmatprep.subr.mxu0 %v155
    %2144 = vmatpush1.msra.mxu0 %v154
    %2145 = vmatprep.subr.mxu0 %v159
    %2146 = vmatpush1.msra.mxu0 %v158
    %2147 = vmatprep.subr.mxu0 %v163
    %2148 = vmatpush1.msra.mxu0 %v162
    %2149 = vmatprep.subr.mxu0 %v167
    %2150 = vmatpush1.msra.mxu0 %v166
    %2151 = vmatprep.subr.mxu0 %v171
    %2152 = vmatpush1.msra.mxu0 %v170
    %2153 = vmatprep.subr.mxu0 %v175
    %2154 = vmatpush1.msra.mxu0 %v174
    %2155 = vmatprep.subr.mxu0 %v179
    %2156 = vmatpush1.msra.mxu0 %v178
    %2157 = vmatprep.subr.mxu0 %v183
    %2158 = vmatpush1.msra.mxu0 %v182
    %2159 = vmatprep.subr.mxu0 %v187
    %2160 = vmatpush1.msra.mxu0 %v186
    %2161 = vmatprep.subr.mxu0 0.0
    %2162 = vmatpush1.msra.mxu0 0.0
    %2163 = vmatprep.subr.mxu0 0.0
    %2164 = vmatpush1.msra.mxu0 0.0
    %2165 = vmatprep.subr.mxu0 0.0
    %2166 = vmatpush1.msra.mxu0 0.0
    %2167 = vmatprep.subr.mxu0 0.0
    %2168 = vmatpush1.msra.mxu0 0.0
    %2169 = vmatprep.subr.mxu0 0.0
    %2170 = vmatpush1.msra.mxu0 0.0
    %2171 = vmatprep.subr.mxu0 0.0
    %2172 = vmatpush1.msra.mxu0 0.0
    %2173 = vmatprep.subr.mxu0 0.0
    %2174 = vmatpush1.msra.mxu0 0.0
    %2175 = vmatprep.subr.mxu0 0.0
    %2176 = vmatpush1.msra.mxu0 0.0
    %2177 = vmatprep.subr.mxu0 0.0
    %2178 = vmatpush1.msra.mxu0 0.0
    %2179 = vmatprep.subr.mxu0 0.0
    %2180 = vmatpush1.msra.mxu0 0.0
    %2181 = vmatprep.subr.mxu0 0.0
    %2182 = vmatpush1.msra.mxu0 0.0
    %2183 = vmatprep.subr.mxu0 0.0
    %2184 = vmatpush1.msra.mxu0 0.0
    %2185 = vmatprep.subr.mxu0 0.0
    %2186 = vmatpush1.msra.mxu0 0.0
    %2187 = vmatprep.subr.mxu0 0.0
    %2188 = vmatpush1.msra.mxu0 0.0
    %2189 = vmatprep.subr.mxu0 0.0
    %2190 = vmatpush1.msra.mxu0 0.0
    %2191 = vmatprep.subr.mxu0 0.0
    %2192 = vmatpush1.msra.mxu0 0.0
    %2193 = vmatprep.mubr.f32.mxu0 0.0
    %2194 = vmatmul.mubr.f32.gmra.mrb[0].mxu0 %v2126
    %v2195 = vpop.f32.mrb[0].mxu0
    %v2196 = vadd.f32 0.0, %v2195
    %v2197 = vpop.f32.mrb[0].mxu0
    %v2198 = vadd.f32 0.0, %v2197
    %2199 = vdwg.mxu0
    %2200 = vmatprep.subr.mxu0 %v129
    %2201 = vmatpush1.msra.mxu0 %v128
    %2202 = vmatprep.subr.mxu0 %v133
    %2203 = vmatpush1.msra.mxu0 %v132
    %2204 = vmatprep.subr.mxu0 %v137
    %2205 = vmatpush1.msra.mxu0 %v136
    %2206 = vmatprep.subr.mxu0 %v141
    %2207 = vmatpush1.msra.mxu0 %v140
    %2208 = vmatprep.subr.mxu0 %v145
    %2209 = vmatpush1.msra.mxu0 %v144
    %2210 = vmatprep.subr.mxu0 %v149
    %2211 = vmatpush1.msra.mxu0 %v148
    %2212 = vmatprep.subr.mxu0 %v153
    %2213 = vmatpush1.msra.mxu0 %v152
    %2214 = vmatprep.subr.mxu0 %v157
    %2215 = vmatpush1.msra.mxu0 %v156
    %2216 = vmatprep.subr.mxu0 %v161
    %2217 = vmatpush1.msra.mxu0 %v160
    %2218 = vmatprep.subr.mxu0 %v165
    %2219 = vmatpush1.msra.mxu0 %v164
    %2220 = vmatprep.subr.mxu0 %v169
    %2221 = vmatpush1.msra.mxu0 %v168
    %2222 = vmatprep.subr.mxu0 %v173
    %2223 = vmatpush1.msra.mxu0 %v172
    %2224 = vmatprep.subr.mxu0 %v177
    %2225 = vmatpush1.msra.mxu0 %v176
    %2226 = vmatprep.subr.mxu0 %v181
    %2227 = vmatpush1.msra.mxu0 %v180
    %2228 = vmatprep.subr.mxu0 %v185
    %2229 = vmatpush1.msra.mxu0 %v184
    %2230 = vmatprep.subr.mxu0 %v189
    %2231 = vmatpush1.msra.mxu0 %v188
    %2232 = vmatprep.subr.mxu0 0.0
    %2233 = vmatpush1.msra.mxu0 0.0
    %2234 = vmatprep.subr.mxu0 0.0
    %2235 = vmatpush1.msra.mxu0 0.0
    %2236 = vmatprep.subr.mxu0 0.0
    %2237 = vmatpush1.msra.mxu0 0.0
    %2238 = vmatprep.subr.mxu0 0.0
    %2239 = vmatpush1.msra.mxu0 0.0
    %2240 = vmatprep.subr.mxu0 0.0
    %2241 = vmatpush1.msra.mxu0 0.0
    %2242 = vmatprep.subr.mxu0 0.0
    %2243 = vmatpush1.msra.mxu0 0.0
    %2244 = vmatprep.subr.mxu0 0.0
    %2245 = vmatpush1.msra.mxu0 0.0
    %2246 = vmatprep.subr.mxu0 0.0
    %2247 = vmatpush1.msra.mxu0 0.0
    %2248 = vmatprep.subr.mxu0 0.0
    %2249 = vmatpush1.msra.mxu0 0.0
    %2250 = vmatprep.subr.mxu0 0.0
    %2251 = vmatpush1.msra.mxu0 0.0
    %2252 = vmatprep.subr.mxu0 0.0
    %2253 = vmatpush1.msra.mxu0 0.0
    %2254 = vmatprep.subr.mxu0 0.0
    %2255 = vmatpush1.msra.mxu0 0.0
    %2256 = vmatprep.subr.mxu0 0.0
    %2257 = vmatpush1.msra.mxu0 0.0
    %2258 = vmatprep.subr.mxu0 0.0
    %2259 = vmatpush1.msra.mxu0 0.0
    %2260 = vmatprep.subr.mxu0 0.0
    %2261 = vmatpush1.msra.mxu0 0.0
    %2262 = vmatprep.subr.mxu0 0.0
    %2263 = vmatpush1.msra.mxu0 0.0
    %2264 = vmatprep.mubr.f32.mxu0 0.0
    %2265 = vmatmul.mubr.f32.gmra.mrb[0].mxu0 %v2126
    %v2266 = vpop.f32.mrb[0].mxu0
    %v2267 = vadd.f32 0.0, %v2266
    %v2268 = vpop.f32.mrb[0].mxu0
    %v2269 = vadd.f32 0.0, %v2268
    %2270 = vdwg.mxu0
    %v2272 = vsel %vm334, %v2128, 0
    %2274 = vmatprep.subr.mxu0 %v99
    %2275 = vmatpush1.msra.mxu0 %v98
    %2276 = vmatprep.subr.mxu0 %v103
    %2277 = vmatpush1.msra.mxu0 %v102
    %2278 = vmatprep.subr.mxu0 %v107
    %2279 = vmatpush1.msra.mxu0 %v106
    %2280 = vmatprep.subr.mxu0 %v111
    %2281 = vmatpush1.msra.mxu0 %v110
    %2282 = vmatprep.subr.mxu0 %v115
    %2283 = vmatpush1.msra.mxu0 %v114
    %2284 = vmatprep.subr.mxu0 %v119
    %2285 = vmatpush1.msra.mxu0 %v118
    %2286 = vmatprep.subr.mxu0 %v343
    %2287 = vmatpush1.msra.mxu0 %v340
    %2288 = vmatprep.subr.mxu0 0.0
    %2289 = vmatpush1.msra.mxu0 0.0
    %2290 = vmatprep.subr.mxu0 0.0
    %2291 = vmatpush1.msra.mxu0 0.0
    %2292 = vmatprep.subr.mxu0 0.0
    %2293 = vmatpush1.msra.mxu0 0.0
    %2294 = vmatprep.subr.mxu0 0.0
    %2295 = vmatpush1.msra.mxu0 0.0
    %2296 = vmatprep.subr.mxu0 0.0
    %2297 = vmatpush1.msra.mxu0 0.0
    %2298 = vmatprep.subr.mxu0 0.0
    %2299 = vmatpush1.msra.mxu0 0.0
    %2300 = vmatprep.subr.mxu0 0.0
    %2301 = vmatpush1.msra.mxu0 0.0
    %2302 = vmatprep.subr.mxu0 0.0
    %2303 = vmatpush1.msra.mxu0 0.0
    %2304 = vmatprep.subr.mxu0 0.0
    %2305 = vmatpush1.msra.mxu0 0.0
    %2306 = vmatprep.subr.mxu0 0.0
    %2307 = vmatpush1.msra.mxu0 0.0
    %2308 = vmatprep.subr.mxu0 0.0
    %2309 = vmatpush1.msra.mxu0 0.0
    %2310 = vmatprep.subr.mxu0 0.0
    %2311 = vmatpush1.msra.mxu0 0.0
    %2312 = vmatprep.subr.mxu0 0.0
    %2313 = vmatpush1.msra.mxu0 0.0
    %2314 = vmatprep.subr.mxu0 0.0
    %2315 = vmatpush1.msra.mxu0 0.0
    %2316 = vmatprep.subr.mxu0 0.0
    %2317 = vmatpush1.msra.mxu0 0.0
    %2318 = vmatprep.subr.mxu0 0.0
    %2319 = vmatpush1.msra.mxu0 0.0
    %2320 = vmatprep.subr.mxu0 0.0
    %2321 = vmatpush1.msra.mxu0 0.0
    %2322 = vmatprep.subr.mxu0 0.0
    %2323 = vmatpush1.msra.mxu0 0.0
    %2324 = vmatprep.subr.mxu0 0.0
    %2325 = vmatpush1.msra.mxu0 0.0
    %2326 = vmatprep.subr.mxu0 0.0
    %2327 = vmatpush1.msra.mxu0 0.0
    %2328 = vmatprep.subr.mxu0 0.0
    %2329 = vmatpush1.msra.mxu0 0.0
    %2330 = vmatprep.subr.mxu0 0.0
    %2331 = vmatpush1.msra.mxu0 0.0
    %2332 = vmatprep.subr.mxu0 0.0
    %2333 = vmatpush1.msra.mxu0 0.0
    %2334 = vmatprep.subr.mxu0 0.0
    %2335 = vmatpush1.msra.mxu0 0.0
    %2336 = vmatprep.subr.mxu0 0.0
    %2337 = vmatpush1.msra.mxu0 0.0
    %2338 = vmatprep.mubr.f32.mxu0 0.0
    %2339 = vmatmul.mubr.f32.gmra.mrb[0].mxu0 %v2272
    %v2340 = vpop.f32.mrb[0].mxu0
    %v2341 = vadd.f32 %v2196, %v2340
    %v2342 = vpop.f32.mrb[0].mxu0
    %v2343 = vadd.f32 %v2198, %v2342
    %2344 = vdwg.mxu0
    %2345 = vmatprep.subr.mxu0 %v101
    %2346 = vmatpush1.msra.mxu0 %v100
    %2347 = vmatprep.subr.mxu0 %v105
    %2348 = vmatpush1.msra.mxu0 %v104
    %2349 = vmatprep.subr.mxu0 %v109
    %2350 = vmatpush1.msra.mxu0 %v108
    %2351 = vmatprep.subr.mxu0 %v113
    %2352 = vmatpush1.msra.mxu0 %v112
    %2353 = vmatprep.subr.mxu0 %v117
    %2354 = vmatpush1.msra.mxu0 %v116
    %2355 = vmatprep.subr.mxu0 %v121
    %2356 = vmatpush1.msra.mxu0 %v120
    %2357 = vmatprep.subr.mxu0 %v349
    %2358 = vmatpush1.msra.mxu0 %v346
    %2359 = vmatprep.subr.mxu0 0.0
    %2360 = vmatpush1.msra.mxu0 0.0
    %2361 = vmatprep.subr.mxu0 0.0
    %2362 = vmatpush1.msra.mxu0 0.0
    %2363 = vmatprep.subr.mxu0 0.0
    %2364 = vmatpush1.msra.mxu0 0.0
    %2365 = vmatprep.subr.mxu0 0.0
    %2366 = vmatpush1.msra.mxu0 0.0
    %2367 = vmatprep.subr.mxu0 0.0
    %2368 = vmatpush1.msra.mxu0 0.0
    %2369 = vmatprep.subr.mxu0 0.0
    %2370 = vmatpush1.msra.mxu0 0.0
    %2371 = vmatprep.subr.mxu0 0.0
    %2372 = vmatpush1.msra.mxu0 0.0
    %2373 = vmatprep.subr.mxu0 0.0
    %2374 = vmatpush1.msra.mxu0 0.0
    %2375 = vmatprep.subr.mxu0 0.0
    %2376 = vmatpush1.msra.mxu0 0.0
    %2377 = vmatprep.subr.mxu0 0.0
    %2378 = vmatpush1.msra.mxu0 0.0
    %2379 = vmatprep.subr.mxu0 0.0
    %2380 = vmatpush1.msra.mxu0 0.0
    %2381 = vmatprep.subr.mxu0 0.0
    %2382 = vmatpush1.msra.mxu0 0.0
    %2383 = vmatprep.subr.mxu0 0.0
    %2384 = vmatpush1.msra.mxu0 0.0
    %2385 = vmatprep.subr.mxu0 0.0
    %2386 = vmatpush1.msra.mxu0 0.0
    %2387 = vmatprep.subr.mxu0 0.0
    %2388 = vmatpush1.msra.mxu0 0.0
    %2389 = vmatprep.subr.mxu0 0.0
    %2390 = vmatpush1.msra.mxu0 0.0
    %2391 = vmatprep.subr.mxu0 0.0
    %2392 = vmatpush1.msra.mxu0 0.0
    %2393 = vmatprep.subr.mxu0 0.0
    %2394 = vmatpush1.msra.mxu0 0.0
    %2395 = vmatprep.subr.mxu0 0.0
    %2396 = vmatpush1.msra.mxu0 0.0
    %2397 = vmatprep.subr.mxu0 0.0
    %2398 = vmatpush1.msra.mxu0 0.0
    %2399 = vmatprep.subr.mxu0 0.0
    %2400 = vmatpush1.msra.mxu0 0.0
    %2401 = vmatprep.subr.mxu0 0.0
    %2402 = vmatpush1.msra.mxu0 0.0
    %2403 = vmatprep.subr.mxu0 0.0
    %2404 = vmatpush1.msra.mxu0 0.0
    %2405 = vmatprep.subr.mxu0 0.0
    %2406 = vmatpush1.msra.mxu0 0.0
    %2407 = vmatprep.subr.mxu0 0.0
    %2408 = vmatpush1.msra.mxu0 0.0
    %2409 = vmatprep.mubr.f32.mxu0 0.0
    %2410 = vmatmul.mubr.f32.gmra.mrb[0].mxu0 %v2272
    %v2411 = vpop.f32.mrb[0].mxu0
    %v2412 = vadd.f32 %v2267, %v2411
    %v2413 = vpop.f32.mrb[0].mxu0
    %v2414 = vadd.f32 %v2269, %v2413
    %2415 = vdwg.mxu0
    %v2416 = vadd.f32 %v2341, %v497
    %v2417 = vadd.f32 %v2343, %v501
    %v2418 = vadd.f32 %v2412, %v505
    %v2419 = vadd.f32 %v2414, %v509
    %v2420 = vxor.u32 %v2416, 2147483648
    %v2421 = vmul.f32 %v2420, 1.442695
    %v2422 = vpow.pop %v2421
    %v2423 = vadd.f32 %v2422, 1.0
    %v2424 = vrcp.pop %v2423
    %v2425 = vmul.f32 1.0, %v2424
    %v2426 = vxor.u32 %v2417, 2147483648
    %v2427 = vmul.f32 %v2426, 1.442695
    %v2428 = vpow.pop %v2427
    %v2429 = vadd.f32 %v2428, 1.0
    %v2430 = vrcp.pop %v2429
    %v2431 = vmul.f32 1.0, %v2430
    %v2432 = vtanh.pop %v2418
    %v2433 = vxor.u32 %v2419, 2147483648
    %v2434 = vmul.f32 %v2433, 1.442695
    %v2435 = vpow.pop %v2434
    %v2436 = vadd.f32 %v2435, 1.0
    %v2437 = vrcp.pop %v2436
    %v2438 = vmul.f32 1.0, %v2437
    %v2439 = vmul.f32 %v2431, %v2124
    %v2440 = vmul.f32 %v2425, %v2432
    %v2441 = vadd.f32 %v2439, %v2440
    %v2442 = vtanh.pop %v2441
    %v2443 = vmul.f32 %v2438, %v2442
    %s2444 = scalar_lea.vmem [#allocation2], 56
    %v2445 = vld [vmem:[%s2444] sm:$0xff]
    %2446 = vmatprep.subr.mxu0 %v127
    %2447 = vmatpush1.msra.mxu0 %v126
    %2448 = vmatprep.subr.mxu0 %v131
    %2449 = vmatpush1.msra.mxu0 %v130
    %2450 = vmatprep.subr.mxu0 %v135
    %2451 = vmatpush1.msra.mxu0 %v134
    %2452 = vmatprep.subr.mxu0 %v139
    %2453 = vmatpush1.msra.mxu0 %v138
    %2454 = vmatprep.subr.mxu0 %v143
    %2455 = vmatpush1.msra.mxu0 %v142
    %2456 = vmatprep.subr.mxu0 %v147
    %2457 = vmatpush1.msra.mxu0 %v146
    %2458 = vmatprep.subr.mxu0 %v151
    %2459 = vmatpush1.msra.mxu0 %v150
    %2460 = vmatprep.subr.mxu0 %v155
    %2461 = vmatpush1.msra.mxu0 %v154
    %2462 = vmatprep.subr.mxu0 %v159
    %2463 = vmatpush1.msra.mxu0 %v158
    %2464 = vmatprep.subr.mxu0 %v163
    %2465 = vmatpush1.msra.mxu0 %v162
    %2466 = vmatprep.subr.mxu0 %v167
    %2467 = vmatpush1.msra.mxu0 %v166
    %2468 = vmatprep.subr.mxu0 %v171
    %2469 = vmatpush1.msra.mxu0 %v170
    %2470 = vmatprep.subr.mxu0 %v175
    %2471 = vmatpush1.msra.mxu0 %v174
    %2472 = vmatprep.subr.mxu0 %v179
    %2473 = vmatpush1.msra.mxu0 %v178
    %2474 = vmatprep.subr.mxu0 %v183
    %2475 = vmatpush1.msra.mxu0 %v182
    %2476 = vmatprep.subr.mxu0 %v187
    %2477 = vmatpush1.msra.mxu0 %v186
    %2478 = vmatprep.subr.mxu0 0.0
    %2479 = vmatpush1.msra.mxu0 0.0
    %2480 = vmatprep.subr.mxu0 0.0
    %2481 = vmatpush1.msra.mxu0 0.0
    %2482 = vmatprep.subr.mxu0 0.0
    %2483 = vmatpush1.msra.mxu0 0.0
    %2484 = vmatprep.subr.mxu0 0.0
    %2485 = vmatpush1.msra.mxu0 0.0
    %2486 = vmatprep.subr.mxu0 0.0
    %2487 = vmatpush1.msra.mxu0 0.0
    %2488 = vmatprep.subr.mxu0 0.0
    %2489 = vmatpush1.msra.mxu0 0.0
    %2490 = vmatprep.subr.mxu0 0.0
    %2491 = vmatpush1.msra.mxu0 0.0
    %2492 = vmatprep.subr.mxu0 0.0
    %2493 = vmatpush1.msra.mxu0 0.0
    %2494 = vmatprep.subr.mxu0 0.0
    %2495 = vmatpush1.msra.mxu0 0.0
    %2496 = vmatprep.subr.mxu0 0.0
    %2497 = vmatpush1.msra.mxu0 0.0
    %2498 = vmatprep.subr.mxu0 0.0
    %2499 = vmatpush1.msra.mxu0 0.0
    %2500 = vmatprep.subr.mxu0 0.0
    %2501 = vmatpush1.msra.mxu0 0.0
    %2502 = vmatprep.subr.mxu0 0.0
    %2503 = vmatpush1.msra.mxu0 0.0
    %2504 = vmatprep.subr.mxu0 0.0
    %2505 = vmatpush1.msra.mxu0 0.0
    %2506 = vmatprep.subr.mxu0 0.0
    %2507 = vmatpush1.msra.mxu0 0.0
    %2508 = vmatprep.subr.mxu0 0.0
    %2509 = vmatpush1.msra.mxu0 0.0
    %2510 = vmatprep.mubr.f32.mxu0 0.0
    %2511 = vmatmul.mubr.f32.gmra.mrb[0].mxu0 %v2443
    %v2512 = vpop.f32.mrb[0].mxu0
    %v2513 = vadd.f32 0.0, %v2512
    %v2514 = vpop.f32.mrb[0].mxu0
    %v2515 = vadd.f32 0.0, %v2514
    %2516 = vdwg.mxu0
    %2517 = vmatprep.subr.mxu0 %v129
    %2518 = vmatpush1.msra.mxu0 %v128
    %2519 = vmatprep.subr.mxu0 %v133
    %2520 = vmatpush1.msra.mxu0 %v132
    %2521 = vmatprep.subr.mxu0 %v137
    %2522 = vmatpush1.msra.mxu0 %v136
    %2523 = vmatprep.subr.mxu0 %v141
    %2524 = vmatpush1.msra.mxu0 %v140
    %2525 = vmatprep.subr.mxu0 %v145
    %2526 = vmatpush1.msra.mxu0 %v144
    %2527 = vmatprep.subr.mxu0 %v149
    %2528 = vmatpush1.msra.mxu0 %v148
    %2529 = vmatprep.subr.mxu0 %v153
    %2530 = vmatpush1.msra.mxu0 %v152
    %2531 = vmatprep.subr.mxu0 %v157
    %2532 = vmatpush1.msra.mxu0 %v156
    %2533 = vmatprep.subr.mxu0 %v161
    %2534 = vmatpush1.msra.mxu0 %v160
    %2535 = vmatprep.subr.mxu0 %v165
    %2536 = vmatpush1.msra.mxu0 %v164
    %2537 = vmatprep.subr.mxu0 %v169
    %2538 = vmatpush1.msra.mxu0 %v168
    %2539 = vmatprep.subr.mxu0 %v173
    %2540 = vmatpush1.msra.mxu0 %v172
    %2541 = vmatprep.subr.mxu0 %v177
    %2542 = vmatpush1.msra.mxu0 %v176
    %2543 = vmatprep.subr.mxu0 %v181
    %2544 = vmatpush1.msra.mxu0 %v180
    %2545 = vmatprep.subr.mxu0 %v185
    %2546 = vmatpush1.msra.mxu0 %v184
    %2547 = vmatprep.subr.mxu0 %v189
    %2548 = vmatpush1.msra.mxu0 %v188
    %2549 = vmatprep.subr.mxu0 0.0
    %2550 = vmatpush1.msra.mxu0 0.0
    %2551 = vmatprep.subr.mxu0 0.0
    %2552 = vmatpush1.msra.mxu0 0.0
    %2553 = vmatprep.subr.mxu0 0.0
    %2554 = vmatpush1.msra.mxu0 0.0
    %2555 = vmatprep.subr.mxu0 0.0
    %2556 = vmatpush1.msra.mxu0 0.0
    %2557 = vmatprep.subr.mxu0 0.0
    %2558 = vmatpush1.msra.mxu0 0.0
    %2559 = vmatprep.subr.mxu0 0.0
    %2560 = vmatpush1.msra.mxu0 0.0
    %2561 = vmatprep.subr.mxu0 0.0
    %2562 = vmatpush1.msra.mxu0 0.0
    %2563 = vmatprep.subr.mxu0 0.0
    %2564 = vmatpush1.msra.mxu0 0.0
    %2565 = vmatprep.subr.mxu0 0.0
    %2566 = vmatpush1.msra.mxu0 0.0
    %2567 = vmatprep.subr.mxu0 0.0
    %2568 = vmatpush1.msra.mxu0 0.0
    %2569 = vmatprep.subr.mxu0 0.0
    %2570 = vmatpush1.msra.mxu0 0.0
    %2571 = vmatprep.subr.mxu0 0.0
    %2572 = vmatpush1.msra.mxu0 0.0
    %2573 = vmatprep.subr.mxu0 0.0
    %2574 = vmatpush1.msra.mxu0 0.0
    %2575 = vmatprep.subr.mxu0 0.0
    %2576 = vmatpush1.msra.mxu0 0.0
    %2577 = vmatprep.subr.mxu0 0.0
    %2578 = vmatpush1.msra.mxu0 0.0
    %2579 = vmatprep.subr.mxu0 0.0
    %2580 = vmatpush1.msra.mxu0 0.0
    %2581 = vmatprep.mubr.f32.mxu0 0.0
    %2582 = vmatmul.mubr.f32.gmra.mrb[0].mxu0 %v2443
    %v2583 = vpop.f32.mrb[0].mxu0
    %v2584 = vadd.f32 0.0, %v2583
    %v2585 = vpop.f32.mrb[0].mxu0
    %v2586 = vadd.f32 0.0, %v2585
    %2587 = vdwg.mxu0
    %v2589 = vsel %vm334, %v2445, 0
    %2591 = vmatprep.subr.mxu0 %v99
    %2592 = vmatpush1.msra.mxu0 %v98
    %2593 = vmatprep.subr.mxu0 %v103
    %2594 = vmatpush1.msra.mxu0 %v102
    %2595 = vmatprep.subr.mxu0 %v107
    %2596 = vmatpush1.msra.mxu0 %v106
    %2597 = vmatprep.subr.mxu0 %v111
    %2598 = vmatpush1.msra.mxu0 %v110
    %2599 = vmatprep.subr.mxu0 %v115
    %2600 = vmatpush1.msra.mxu0 %v114
    %2601 = vmatprep.subr.mxu0 %v119
    %2602 = vmatpush1.msra.mxu0 %v118
    %2603 = vmatprep.subr.mxu0 %v343
    %2604 = vmatpush1.msra.mxu0 %v340
    %2605 = vmatprep.subr.mxu0 0.0
    %2606 = vmatpush1.msra.mxu0 0.0
    %2607 = vmatprep.subr.mxu0 0.0
    %2608 = vmatpush1.msra.mxu0 0.0
    %2609 = vmatprep.subr.mxu0 0.0
    %2610 = vmatpush1.msra.mxu0 0.0
    %2611 = vmatprep.subr.mxu0 0.0
    %2612 = vmatpush1.msra.mxu0 0.0
    %2613 = vmatprep.subr.mxu0 0.0
    %2614 = vmatpush1.msra.mxu0 0.0
    %2615 = vmatprep.subr.mxu0 0.0
    %2616 = vmatpush1.msra.mxu0 0.0
    %2617 = vmatprep.subr.mxu0 0.0
    %2618 = vmatpush1.msra.mxu0 0.0
    %2619 = vmatprep.subr.mxu0 0.0
    %2620 = vmatpush1.msra.mxu0 0.0
    %2621 = vmatprep.subr.mxu0 0.0
    %2622 = vmatpush1.msra.mxu0 0.0
    %2623 = vmatprep.subr.mxu0 0.0
    %2624 = vmatpush1.msra.mxu0 0.0
    %2625 = vmatprep.subr.mxu0 0.0
    %2626 = vmatpush1.msra.mxu0 0.0
    %2627 = vmatprep.subr.mxu0 0.0
    %2628 = vmatpush1.msra.mxu0 0.0
    %2629 = vmatprep.subr.mxu0 0.0
    %2630 = vmatpush1.msra.mxu0 0.0
    %2631 = vmatprep.subr.mxu0 0.0
    %2632 = vmatpush1.msra.mxu0 0.0
    %2633 = vmatprep.subr.mxu0 0.0
    %2634 = vmatpush1.msra.mxu0 0.0
    %2635 = vmatprep.subr.mxu0 0.0
    %2636 = vmatpush1.msra.mxu0 0.0
    %2637 = vmatprep.subr.mxu0 0.0
    %2638 = vmatpush1.msra.mxu0 0.0
    %2639 = vmatprep.subr.mxu0 0.0
    %2640 = vmatpush1.msra.mxu0 0.0
    %2641 = vmatprep.subr.mxu0 0.0
    %2642 = vmatpush1.msra.mxu0 0.0
    %2643 = vmatprep.subr.mxu0 0.0
    %2644 = vmatpush1.msra.mxu0 0.0
    %2645 = vmatprep.subr.mxu0 0.0
    %2646 = vmatpush1.msra.mxu0 0.0
    %2647 = vmatprep.subr.mxu0 0.0
    %2648 = vmatpush1.msra.mxu0 0.0
    %2649 = vmatprep.subr.mxu0 0.0
    %2650 = vmatpush1.msra.mxu0 0.0
    %2651 = vmatprep.subr.mxu0 0.0
    %2652 = vmatpush1.msra.mxu0 0.0
    %2653 = vmatprep.subr.mxu0 0.0
    %2654 = vmatpush1.msra.mxu0 0.0
    %2655 = vmatprep.mubr.f32.mxu0 0.0
    %2656 = vmatmul.mubr.f32.gmra.mrb[0].mxu0 %v2589
    %v2657 = vpop.f32.mrb[0].mxu0
    %v2658 = vadd.f32 %v2513, %v2657
    %v2659 = vpop.f32.mrb[0].mxu0
    %v2660 = vadd.f32 %v2515, %v2659
    %2661 = vdwg.mxu0
    %2662 = vmatprep.subr.mxu0 %v101
    %2663 = vmatpush1.msra.mxu0 %v100
    %2664 = vmatprep.subr.mxu0 %v105
    %2665 = vmatpush1.msra.mxu0 %v104
    %2666 = vmatprep.subr.mxu0 %v109
    %2667 = vmatpush1.msra.mxu0 %v108
    %2668 = vmatprep.subr.mxu0 %v113
    %2669 = vmatpush1.msra.mxu0 %v112
    %2670 = vmatprep.subr.mxu0 %v117
    %2671 = vmatpush1.msra.mxu0 %v116
    %2672 = vmatprep.subr.mxu0 %v121
    %2673 = vmatpush1.msra.mxu0 %v120
    %2674 = vmatprep.subr.mxu0 %v349
    %2675 = vmatpush1.msra.mxu0 %v346
    %2676 = vmatprep.subr.mxu0 0.0
    %2677 = vmatpush1.msra.mxu0 0.0
    %2678 = vmatprep.subr.mxu0 0.0
    %2679 = vmatpush1.msra.mxu0 0.0
    %2680 = vmatprep.subr.mxu0 0.0
    %2681 = vmatpush1.msra.mxu0 0.0
    %2682 = vmatprep.subr.mxu0 0.0
    %2683 = vmatpush1.msra.mxu0 0.0
    %2684 = vmatprep.subr.mxu0 0.0
    %2685 = vmatpush1.msra.mxu0 0.0
    %2686 = vmatprep.subr.mxu0 0.0
    %2687 = vmatpush1.msra.mxu0 0.0
    %2688 = vmatprep.subr.mxu0 0.0
    %2689 = vmatpush1.msra.mxu0 0.0
    %2690 = vmatprep.subr.mxu0 0.0
    %2691 = vmatpush1.msra.mxu0 0.0
    %2692 = vmatprep.subr.mxu0 0.0
    %2693 = vmatpush1.msra.mxu0 0.0
    %2694 = vmatprep.subr.mxu0 0.0
    %2695 = vmatpush1.msra.mxu0 0.0
    %2696 = vmatprep.subr.mxu0 0.0
    %2697 = vmatpush1.msra.mxu0 0.0
    %2698 = vmatprep.subr.mxu0 0.0
    %2699 = vmatpush1.msra.mxu0 0.0
    %2700 = vmatprep.subr.mxu0 0.0
    %2701 = vmatpush1.msra.mxu0 0.0
    %2702 = vmatprep.subr.mxu0 0.0
    %2703 = vmatpush1.msra.mxu0 0.0
    %2704 = vmatprep.subr.mxu0 0.0
    %2705 = vmatpush1.msra.mxu0 0.0
    %2706 = vmatprep.subr.mxu0 0.0
    %2707 = vmatpush1.msra.mxu0 0.0
    %2708 = vmatprep.subr.mxu0 0.0
    %2709 = vmatpush1.msra.mxu0 0.0
    %2710 = vmatprep.subr.mxu0 0.0
    %2711 = vmatpush1.msra.mxu0 0.0
    %2712 = vmatprep.subr.mxu0 0.0
    %2713 = vmatpush1.msra.mxu0 0.0
    %2714 = vmatprep.subr.mxu0 0.0
    %2715 = vmatpush1.msra.mxu0 0.0
    %2716 = vmatprep.subr.mxu0 0.0
    %2717 = vmatpush1.msra.mxu0 0.0
    %2718 = vmatprep.subr.mxu0 0.0
    %2719 = vmatpush1.msra.mxu0 0.0
    %2720 = vmatprep.subr.mxu0 0.0
    %2721 = vmatpush1.msra.mxu0 0.0
    %2722 = vmatprep.subr.mxu0 0.0
    %2723 = vmatpush1.msra.mxu0 0.0
    %2724 = vmatprep.subr.mxu0 0.0
    %2725 = vmatpush1.msra.mxu0 0.0
    %2726 = vmatprep.mubr.f32.mxu0 0.0
    %2727 = vmatmul.mubr.f32.gmra.mrb[0].mxu0 %v2589
    %v2728 = vpop.f32.mrb[0].mxu0
    %v2729 = vadd.f32 %v2584, %v2728
    %v2730 = vpop.f32.mrb[0].mxu0
    %v2731 = vadd.f32 %v2586, %v2730
    %2732 = vdwg.mxu0
    %v2733 = vadd.f32 %v2658, %v497
    %v2734 = vadd.f32 %v2660, %v501
    %v2735 = vadd.f32 %v2729, %v505
    %v2736 = vadd.f32 %v2731, %v509
    %v2737 = vxor.u32 %v2733, 2147483648
    %v2738 = vmul.f32 %v2737, 1.442695
    %v2739 = vpow.pop %v2738
    %v2740 = vadd.f32 %v2739, 1.0
    %v2741 = vrcp.pop %v2740
    %v2742 = vmul.f32 1.0, %v2741
    %v2743 = vxor.u32 %v2734, 2147483648
    %v2744 = vmul.f32 %v2743, 1.442695
    %v2745 = vpow.pop %v2744
    %v2746 = vadd.f32 %v2745, 1.0
    %v2747 = vrcp.pop %v2746
    %v2748 = vmul.f32 1.0, %v2747
    %v2749 = vtanh.pop %v2735
    %v2750 = vxor.u32 %v2736, 2147483648
    %v2751 = vmul.f32 %v2750, 1.442695
    %v2752 = vpow.pop %v2751
    %v2753 = vadd.f32 %v2752, 1.0
    %v2754 = vrcp.pop %v2753
    %v2755 = vmul.f32 1.0, %v2754
    %v2756 = vmul.f32 %v2748, %v2441
    %v2757 = vmul.f32 %v2742, %v2749
    %v2758 = vadd.f32 %v2756, %v2757
    %v2759 = vtanh.pop %v2758
    %v2760 = vmul.f32 %v2755, %v2759
    %v2761 = vld [vmem:[#allocation8] sm:$0xff]
    %v2762 = vld [vmem:[#allocation8 + $0x8] sm:$0xff]
    %v2763 = vld [vmem:[#allocation8 + $0x10] sm:$0xff]
    %v2764 = vld [vmem:[#allocation8 + $0x18] sm:$0xff]
    %v2765 = vld [vmem:[#allocation8 + $0x20] sm:$0xff]
    %v2766 = vld [vmem:[#allocation8 + $0x28] sm:$0xff]
    %v2767 = vld [vmem:[#allocation8 + $0x30] sm:$0xff]
    %v2768 = vld [vmem:[#allocation8 + $0x38] sm:$0xff]
    %v2769 = vld [vmem:[#allocation8 + $0x40] sm:$0xff]
    %v2770 = vld [vmem:[#allocation8 + $0x48] sm:$0xff]
    %v2771 = vld [vmem:[#allocation8 + $0x50] sm:$0xff]
    %v2772 = vld [vmem:[#allocation8 + $0x58] sm:$0xff]
    %v2773 = vld [vmem:[#allocation8 + $0x60] sm:$0xff]
    %v2774 = vld [vmem:[#allocation8 + $0x68] sm:$0xff]
    %v2775 = vld [vmem:[#allocation8 + $0x70] sm:$0xff]
    %v2776 = vld [vmem:[#allocation8 + $0x78] sm:$0xff]
    %v2777 = vld [vmem:[%s5] sm:$0x1]
    %v2779 = vlaneseq
    %v2780 = vshrl.u32 %v2779, 7
    %v2781 = vsub.s32 0, %v2780
    %v2782 = vrot.slane %v2777, %v2781
    %2784 = vmatprep.subr.mxu0 0.0
    %2785 = vmatpush1.msra.mxu0 %v2761
    %2786 = vmatprep.subr.mxu0 0.0
    %2787 = vmatpush1.msra.mxu0 %v2762
    %2788 = vmatprep.subr.mxu0 0.0
    %2789 = vmatpush1.msra.mxu0 %v2763
    %2790 = vmatprep.subr.mxu0 0.0
    %2791 = vmatpush1.msra.mxu0 %v2764
    %2792 = vmatprep.subr.mxu0 0.0
    %2793 = vmatpush1.msra.mxu0 %v2765
    %2794 = vmatprep.subr.mxu0 0.0
    %2795 = vmatpush1.msra.mxu0 %v2766
    %2796 = vmatprep.subr.mxu0 0.0
    %2797 = vmatpush1.msra.mxu0 %v2767
    %2798 = vmatprep.subr.mxu0 0.0
    %2799 = vmatpush1.msra.mxu0 %v2768
    %2800 = vmatprep.subr.mxu0 0.0
    %2801 = vmatpush1.msra.mxu0 %v2769
    %2802 = vmatprep.subr.mxu0 0.0
    %2803 = vmatpush1.msra.mxu0 %v2770
    %2804 = vmatprep.subr.mxu0 0.0
    %2805 = vmatpush1.msra.mxu0 %v2771
    %2806 = vmatprep.subr.mxu0 0.0
    %2807 = vmatpush1.msra.mxu0 %v2772
    %2808 = vmatprep.subr.mxu0 0.0
    %2809 = vmatpush1.msra.mxu0 %v2773
    %2810 = vmatprep.subr.mxu0 0.0
    %2811 = vmatpush1.msra.mxu0 %v2774
    %2812 = vmatprep.subr.mxu0 0.0
    %2813 = vmatpush1.msra.mxu0 %v2775
    %2814 = vmatprep.subr.mxu0 0.0
    %2815 = vmatpush1.msra.mxu0 %v2776
    %2816 = vmatprep.subr.mxu0 0.0
    %2817 = vmatpush1.msra.mxu0 0.0
    %2818 = vmatprep.subr.mxu0 0.0
    %2819 = vmatpush1.msra.mxu0 0.0
    %2820 = vmatprep.subr.mxu0 0.0
    %2821 = vmatpush1.msra.mxu0 0.0
    %2822 = vmatprep.subr.mxu0 0.0
    %2823 = vmatpush1.msra.mxu0 0.0
    %2824 = vmatprep.subr.mxu0 0.0
    %2825 = vmatpush1.msra.mxu0 0.0
    %2826 = vmatprep.subr.mxu0 0.0
    %2827 = vmatpush1.msra.mxu0 0.0
    %2828 = vmatprep.subr.mxu0 0.0
    %2829 = vmatpush1.msra.mxu0 0.0
    %2830 = vmatprep.subr.mxu0 0.0
    %2831 = vmatpush1.msra.mxu0 0.0
    %2832 = vmatprep.subr.mxu0 0.0
    %2833 = vmatpush1.msra.mxu0 0.0
    %2834 = vmatprep.subr.mxu0 0.0
    %2835 = vmatpush1.msra.mxu0 0.0
    %2836 = vmatprep.subr.mxu0 0.0
    %2837 = vmatpush1.msra.mxu0 0.0
    %2838 = vmatprep.subr.mxu0 0.0
    %2839 = vmatpush1.msra.mxu0 0.0
    %2840 = vmatprep.subr.mxu0 0.0
    %2841 = vmatpush1.msra.mxu0 0.0
    %2842 = vmatprep.subr.mxu0 0.0
    %2843 = vmatpush1.msra.mxu0 0.0
    %2844 = vmatprep.subr.mxu0 0.0
    %2845 = vmatpush1.msra.mxu0 0.0
    %2846 = vmatprep.subr.mxu0 0.0
    %2847 = vmatpush1.msra.mxu0 0.0
    %2848 = vmatprep.mubr.f32.mxu0 0.0
    %2849 = vmatmul.mubr.f32.gmra.mrb[0].mxu0 %v2760
    %v2850 = vpop.f32.mrb[0].mxu0
    %v2851 = vadd.f32 %v2782, %v2850
    %v2852 = vpop.f32.mrb[0].mxu0
    %2853 = vdwg.mxu0
    %v2854 = vtanh.pop %v2851
    %v2855 = vmul.f32 %v2760, %v2854
    %v2856 = vld [vmem:[#allocation10] sm:$0xff]
    %v2857 = vld [vmem:[#allocation10 + $0x8] sm:$0xff]
    %v2858 = vld [vmem:[#allocation10 + $0x10] sm:$0xff]
    %v2859 = vld [vmem:[#allocation10 + $0x18] sm:$0xff]
    %v2860 = vld [vmem:[#allocation10 + $0x20] sm:$0xff]
    %v2861 = vld [vmem:[#allocation10 + $0x28] sm:$0xff]
    %v2862 = vld [vmem:[#allocation10 + $0x30] sm:$0xff]
    %v2863 = vld [vmem:[#allocation10 + $0x38] sm:$0xff]
    %v2864 = vld [vmem:[#allocation10 + $0x40] sm:$0xff]
    %v2865 = vld [vmem:[#allocation10 + $0x48] sm:$0xff]
    %v2866 = vld [vmem:[#allocation10 + $0x50] sm:$0xff]
    %v2867 = vld [vmem:[#allocation10 + $0x58] sm:$0xff]
    %v2868 = vld [vmem:[#allocation10 + $0x60] sm:$0xff]
    %v2869 = vld [vmem:[#allocation10 + $0x68] sm:$0xff]
    %v2870 = vld [vmem:[#allocation10 + $0x70] sm:$0xff]
    %v2871 = vld [vmem:[#allocation10 + $0x78] sm:$0xff]
    %v2872 = vld [vmem:[%s7] sm:$0x1]
    %v2874 = vlaneseq
    %v2875 = vshrl.u32 %v2874, 7
    %v2876 = vsub.s32 0, %v2875
    %v2877 = vrot.slane %v2872, %v2876
    %2879 = vmatprep.subr.mxu0 0.0
    %2880 = vmatpush1.msra.mxu0 %v2856
    %2881 = vmatprep.subr.mxu0 0.0
    %2882 = vmatpush1.msra.mxu0 %v2857
    %2883 = vmatprep.subr.mxu0 0.0
    %2884 = vmatpush1.msra.mxu0 %v2858
    %2885 = vmatprep.subr.mxu0 0.0
    %2886 = vmatpush1.msra.mxu0 %v2859
    %2887 = vmatprep.subr.mxu0 0.0
    %2888 = vmatpush1.msra.mxu0 %v2860
    %2889 = vmatprep.subr.mxu0 0.0
    %2890 = vmatpush1.msra.mxu0 %v2861
    %2891 = vmatprep.subr.mxu0 0.0
    %2892 = vmatpush1.msra.mxu0 %v2862
    %2893 = vmatprep.subr.mxu0 0.0
    %2894 = vmatpush1.msra.mxu0 %v2863
    %2895 = vmatprep.subr.mxu0 0.0
    %2896 = vmatpush1.msra.mxu0 %v2864
    %2897 = vmatprep.subr.mxu0 0.0
    %2898 = vmatpush1.msra.mxu0 %v2865
    %2899 = vmatprep.subr.mxu0 0.0
    %2900 = vmatpush1.msra.mxu0 %v2866
    %2901 = vmatprep.subr.mxu0 0.0
    %2902 = vmatpush1.msra.mxu0 %v2867
    %2903 = vmatprep.subr.mxu0 0.0
    %2904 = vmatpush1.msra.mxu0 %v2868
    %2905 = vmatprep.subr.mxu0 0.0
    %2906 = vmatpush1.msra.mxu0 %v2869
    %2907 = vmatprep.subr.mxu0 0.0
    %2908 = vmatpush1.msra.mxu0 %v2870
    %2909 = vmatprep.subr.mxu0 0.0
    %2910 = vmatpush1.msra.mxu0 %v2871
    %2911 = vmatprep.subr.mxu0 0.0
    %2912 = vmatpush1.msra.mxu0 0.0
    %2913 = vmatprep.subr.mxu0 0.0
    %2914 = vmatpush1.msra.mxu0 0.0
    %2915 = vmatprep.subr.mxu0 0.0
    %2916 = vmatpush1.msra.mxu0 0.0
    %2917 = vmatprep.subr.mxu0 0.0
    %2918 = vmatpush1.msra.mxu0 0.0
    %2919 = vmatprep.subr.mxu0 0.0
    %2920 = vmatpush1.msra.mxu0 0.0
    %2921 = vmatprep.subr.mxu0 0.0
    %2922 = vmatpush1.msra.mxu0 0.0
    %2923 = vmatprep.subr.mxu0 0.0
    %2924 = vmatpush1.msra.mxu0 0.0
    %2925 = vmatprep.subr.mxu0 0.0
    %2926 = vmatpush1.msra.mxu0 0.0
    %2927 = vmatprep.subr.mxu0 0.0
    %2928 = vmatpush1.msra.mxu0 0.0
    %2929 = vmatprep.subr.mxu0 0.0
    %2930 = vmatpush1.msra.mxu0 0.0
    %2931 = vmatprep.subr.mxu0 0.0
    %2932 = vmatpush1.msra.mxu0 0.0
    %2933 = vmatprep.subr.mxu0 0.0
    %2934 = vmatpush1.msra.mxu0 0.0
    %2935 = vmatprep.subr.mxu0 0.0
    %2936 = vmatpush1.msra.mxu0 0.0
    %2937 = vmatprep.subr.mxu0 0.0
    %2938 = vmatpush1.msra.mxu0 0.0
    %2939 = vmatprep.subr.mxu0 0.0
    %2940 = vmatpush1.msra.mxu0 0.0
    %2941 = vmatprep.subr.mxu0 0.0
    %2942 = vmatpush1.msra.mxu0 0.0
    %2943 = vmatprep.mubr.f32.mxu0 0.0
    %2944 = vmatmul.mubr.f32.gmra.mrb[0].mxu0 %v2855
    %v2945 = vpop.f32.mrb[0].mxu0
    %v2946 = vadd.f32 %v2877, %v2945
    %v2947 = vpop.f32.mrb[0].mxu0
    %2948 = vdwg.mxu0
    %2949 = vst [vmem:[#allocation11] sm:$0xff] %v2946
    // Predicated region
    $region54: #{tpu_custom_call.1} parent=1 // pred_check
      _
    $region55: #{tpu_custom_call.1} parent=1 // pred_check_branch
      %2951 = sbr.rel (0) target = $region57
    $region56: #{tpu_custom_call.1} parent=1 // pred_region
      %s2953 = ssub.s32 128, 128
      %2954 = vsyncadd [#allocation4], %s2953
      %s2956 = sshll.u32 [#allocation11], 4
      %s2957 = int_to_ptr.vmem [resolvable:$true] %s2956
      %2959 = dma.vmem_to_hbm [thread:$0]  %s2957, 128, %s8, [#allocation4]
    $region57: #{tpu_custom_call.1} parent=1 // pred_fallthru
      _
    // Predicated region
    $region58: #{tpu_custom_call.1} parent=1 // pred_check
      _
    $region59: #{tpu_custom_call.1} parent=1 // pred_check_branch
      %2961 = sbr.rel (0) target = $region61
    $region60: #{tpu_custom_call.1} parent=1 // pred_region
      %2962 = dma.done [#allocation4], 128
    $region61: #{tpu_custom_call.1} parent=1 // pred_fallthru
      _
    %2963 = vsyncpa [#allocation3], 1
    %2964 = vsyncpa [#allocation6], 1
    %2965 = vsyncpa [#allocation9], 1
    %2966 = vsyncpa [#allocation4], 1

</llo_original>
